<compile_context>
chip_gen: v7x
topology: tpu7x:2x2x1
jax: 0.10.0
libtpu: 0.0.40
codegen_flags: <defaults>
</compile_context>

<pallas_src>
import functools

import jax
import jax.numpy as jnp
from jax.experimental import pallas as pl
from jax.experimental.pallas import tpu as pltpu

# Layer sizes for encoder / decoder.
ENC_DIMS = [28 * 28, 128, 64, 12, 3]
DEC_DIMS = [3, 12, 64, 128, 28 * 28]


def autoencoder_kernel(x_ref,
                       # encoder params (weights bf16, biases f32)
                       ew1, eb1, ew2, eb2, ew3, eb3, ew4, eb4,
                       # folded encoder-tail/decoder-head + remaining decoder params
                       wskip, bskip, dw2, db2, dw3, db3, dw4, db4,
                       # outputs
                       enc_ref, dec_ref):
    """All Linear layers + tanh/sigmoid fused; one batch tile per grid step."""
    f32 = jnp.float32
    bf16 = jnp.bfloat16

    x = x_ref[...].astype(bf16)  # MXU operand; accumulate in f32

    # ---- encoder: Linear+Tanh x3 ----
    h = jnp.tanh(jnp.dot(x, ew1[...], preferred_element_type=f32) + eb1[...])
    h = jnp.tanh(jnp.dot(h.astype(bf16), ew2[...], preferred_element_type=f32) + eb2[...])
    h3 = jnp.tanh(jnp.dot(h.astype(bf16), ew3[...], preferred_element_type=f32) + eb3[...])
    h3b = h3.astype(bf16)

    # encoded output (12 -> 3): only feeds enc_ref (off the decoder critical path).
    # TODO(synk): on v7x, if profiling shows the kernel flips to MXU/EUP-bound, compute
    #             this 12x3 as 3 VPU broadcast-mul-add reductions instead of an MXU push.
    enc = jnp.dot(h3b, ew4[...], preferred_element_type=f32) + eb4[...]
    enc_ref[...] = enc.astype(enc_ref.dtype)

    # ---- decoder: the 12->3->12 bottleneck is folded into wskip/bskip ----
    d = jnp.tanh(jnp.dot(h3b, wskip[...], preferred_element_type=f32) + bskip[...])
    d = jnp.tanh(jnp.dot(d.astype(bf16), dw2[...], preferred_element_type=f32) + db2[...])
    d = jnp.tanh(jnp.dot(d.astype(bf16), dw3[...], preferred_element_type=f32) + db3[...])
    logits = jnp.dot(d.astype(bf16), dw4[...], preferred_element_type=f32) + db4[...]
    dec_ref[...] = jax.nn.sigmoid(logits).astype(dec_ref.dtype)  # bf16 at HBM boundary


def init_params(key):
    """Deterministic init mimicking PyTorch nn.Linear default U[-1/sqrt(fan_in), +1/sqrt(fan_in)].

    Weights stored transposed relative to PyTorch ((in, out) instead of (out, in)) so the
    kernel does x @ W directly. Biases are (1, out) for clean 2-D broadcasting.
    """
    params = []
    for dims in (ENC_DIMS, DEC_DIMS):
        for fan_in, fan_out in zip(dims[:-1], dims[1:]):
            key, kw, kb = jax.random.split(key, 3)
            bound = 1.0 / jnp.sqrt(jnp.float32(fan_in))
            w = jax.random.uniform(kw, (fan_in, fan_out), jnp.float32, -bound, bound)
            b = jax.random.uniform(kb, (1, fan_out), jnp.float32, -bound, bound)
            params += [w, b]
    return tuple(params)  # 16 arrays: ew1,eb1,...,ew4,eb4, dw1,db1,...,dw4,db4


def _choose_batch_tile(B, tb):
    """Pick the effective batch tile and grid size.

    Guarantees: tile is a multiple of 16 (bf16 output sublane packing) unless one block
    covers the whole batch; at least 2 grid steps (so v7x's two TensorCores both get
    work via the "parallel" axis) and an even step count when possible (no half-idle
    tail step on megacore).  v5e/v6e (1 TC) are unaffected by the >=2 constraint.
    """
    if B <= 16:
        return B, 1  # single block == full array dims (always a legal block shape)
    steps = max(2, -(-B // tb))
    if steps % 2:
        steps += 1
    tb_eff = -(-B // steps)
    tb_eff = max(16, -(-tb_eff // 16) * 16)
    grid_b = -(-B // tb_eff)
    return tb_eff, grid_b


@functools.partial(jax.jit, static_argnames=("tb", "dec_dtype"))
def autoencoder_forward(x, params, tb=1024, dec_dtype=jnp.bfloat16):
    (ew1, eb1, ew2, eb2, ew3, eb3, ew4, eb4,
     dw1, db1, dw2, db2, dw3, db3, dw4, db4) = params

    B, F = x.shape
    assert F == ENC_DIMS[0]

    # ---- batch tiling ----
    tb_eff, grid_b = _choose_batch_tile(B, tb)
    Bp = grid_b * tb_eff
    if Bp != B:
        x = jnp.pad(x, ((0, Bp - B), (0, 0)))

    # ---- fold the 12->3->12 bottleneck (exact linear identity) ----
    w_skip = ew4 @ dw1                 # (12, 12)
    b_skip = eb4 @ dw1 + db1           # (1, 12)

    bf = lambda w: w.astype(jnp.bfloat16)
    weights = [bf(ew1), eb1, bf(ew2), eb2, bf(ew3), eb3, bf(ew4), eb4,
               bf(w_skip), b_skip, bf(dw2), db2, bf(dw3), db3, bf(dw4), db4]

    # x / outputs: tiled on the batch axis.  Weights/biases: constant index_map so they
    # are copied into VMEM once and reused across all grid steps.
    x_spec = pl.BlockSpec((tb_eff, F), lambda i: (i, 0))
    w_specs = [pl.BlockSpec(w.shape, lambda i: (0, 0)) for w in weights]
    enc_spec = pl.BlockSpec((tb_eff, ENC_DIMS[-1]), lambda i: (i, 0))
    dec_spec = pl.BlockSpec((tb_eff, DEC_DIMS[-1]), lambda i: (i, 0))

    # Advisory cost estimate for XLA's scheduler.
    matmul_dims = [(F, 128), (128, 64), (64, 12), (12, 3),
                   (12, 12), (12, 64), (64, 128), (128, F)]
    flops = 2 * Bp * sum(a * b for a, b in matmul_dims)
    transcendentals = Bp * (128 + 64 + 12 + 12 + 64 + 128 + F)
    dec_itemsize = jnp.dtype(dec_dtype).itemsize
    bytes_accessed = (Bp * F * x.dtype.itemsize            # x in
                      + Bp * F * dec_itemsize              # decoded out (bf16)
                      + Bp * ENC_DIMS[-1] * 4              # encoded out (f32)
                      + sum(int(w.size) * w.dtype.itemsize for w in weights))

    encoded, decoded = pl.pallas_call(
        autoencoder_kernel,
        out_shape=(
            jax.ShapeDtypeStruct((Bp, ENC_DIMS[-1]), jnp.float32),   # encoded: (Bp, 3)
            jax.ShapeDtypeStruct((Bp, DEC_DIMS[-1]), dec_dtype),     # decoded: (Bp, 784) bf16
        ),
        grid=(grid_b,),
        in_specs=[x_spec] + w_specs,
        out_specs=(enc_spec, dec_spec),
        compiler_params=pltpu.CompilerParams(
            dimension_semantics=("parallel",),        # megacore sharding on v7x
            vmem_limit_bytes=48 * 1024 * 1024),       # explicit limit: TB=1024 on v5e,
                                                      # ample on v6e, <=64 MiB/TC on v7x
        cost_estimate=pl.CostEstimate(
            flops=flops,
            transcendentals=transcendentals,
            bytes_accessed=bytes_accessed),
    )(x, *weights)

    if Bp != B:
        encoded = encoded[:B]
        decoded = decoded[:B]
    return encoded, decoded


def reference_forward(x, params):
    """Pure-JAX f32 reference matching the PyTorch module exactly."""
    (ew1, eb1, ew2, eb2, ew3, eb3, ew4, eb4,
     dw1, db1, dw2, db2, dw3, db3, dw4, db4) = params
    h = jnp.tanh(x @ ew1 + eb1)
    h = jnp.tanh(h @ ew2 + eb2)
    h = jnp.tanh(h @ ew3 + eb3)
    enc = h @ ew4 + eb4
    d = jnp.tanh(enc @ dw1 + db1)
    d = jnp.tanh(d @ dw2 + db2)
    d = jnp.tanh(d @ dw3 + db3)
    dec = jax.nn.sigmoid(d @ dw4 + db4)
    return enc, dec


if __name__ == "__main__":
    key = jax.random.PRNGKey(0)
    key, xkey = jax.random.split(key)

    B = 200  # deliberately not a multiple of the tile to exercise the padding path
    x = jax.random.uniform(xkey, (B, 28 * 28), jnp.float32)  # MNIST-like flattened input

    params = init_params(key)

    # Small tile (64) so the test exercises a multi-step, even-sized batch grid;
    # production default is tb=1024.
    encoded, decoded = autoencoder_forward(x, params, tb=64)
    jax.block_until_ready((encoded, decoded))

    enc_ref, dec_ref = reference_forward(x, params)
    assert encoded.shape == (B, 3) and decoded.shape == (B, 784)
    assert decoded.dtype == jnp.bfloat16
    # bf16 MXU operands + bf16 decoded output vs the f32 reference: loose-but-meaningful tol.
    assert jnp.allclose(encoded, enc_ref, atol=2e-2, rtol=2e-2)
    assert jnp.allclose(decoded.astype(jnp.float32), dec_ref, atol=2e-2, rtol=2e-2)

    print("KERNEL_OK")
</pallas_src>

<mosaic_0001>
module attributes {stable_mosaic.version = 11 : i64} {
  func.func @autoencoder_kernel(%arg0: i32, %arg1: memref<64x784xf32, #tpu.memory_space<vmem>>, %arg2: memref<784x128xbf16, #tpu.memory_space<vmem>>, %arg3: memref<1x128xf32, #tpu.memory_space<vmem>>, %arg4: memref<128x64xbf16, #tpu.memory_space<vmem>>, %arg5: memref<1x64xf32, #tpu.memory_space<vmem>>, %arg6: memref<64x12xbf16, #tpu.memory_space<vmem>>, %arg7: memref<1x12xf32, #tpu.memory_space<vmem>>, %arg8: memref<12x3xbf16, #tpu.memory_space<vmem>>, %arg9: memref<1x3xf32, #tpu.memory_space<vmem>>, %arg10: memref<12x12xbf16, #tpu.memory_space<vmem>>, %arg11: memref<1x12xf32, #tpu.memory_space<vmem>>, %arg12: memref<12x64xbf16, #tpu.memory_space<vmem>>, %arg13: memref<1x64xf32, #tpu.memory_space<vmem>>, %arg14: memref<64x128xbf16, #tpu.memory_space<vmem>>, %arg15: memref<1x128xf32, #tpu.memory_space<vmem>>, %arg16: memref<128x784xbf16, #tpu.memory_space<vmem>>, %arg17: memref<1x784xf32, #tpu.memory_space<vmem>>, %arg18: memref<64x3xf32, #tpu.memory_space<vmem>>, %arg19: memref<64x784xbf16, #tpu.memory_space<vmem>>) attributes {dimension_semantics = [#tpu.dimension_semantics<parallel>], iteration_bounds = array<i64: 4>, scalar_prefetch = 0 : i64, scratch_operands = 0 : i64, tpu.core_type = #tpu.core_type<tc>, window_params = [{transform_indices = @transform_0, window_bounds = array<i64: 64, 784>}, {pipeline_mode = #tpu.pipeline_mode<synchronous>, transform_indices = @transform_1, window_bounds = array<i64: 784, 128>}, {pipeline_mode = #tpu.pipeline_mode<synchronous>, transform_indices = @transform_2, window_bounds = array<i64: 1, 128>}, {pipeline_mode = #tpu.pipeline_mode<synchronous>, transform_indices = @transform_3, window_bounds = array<i64: 128, 64>}, {pipeline_mode = #tpu.pipeline_mode<synchronous>, transform_indices = @transform_4, window_bounds = array<i64: 1, 64>}, {pipeline_mode = #tpu.pipeline_mode<synchronous>, transform_indices = @transform_5, window_bounds = array<i64: 64, 12>}, {pipeline_mode = #tpu.pipeline_mode<synchronous>, transform_indices = @transform_6, window_bounds = array<i64: 1, 12>}, {pipeline_mode = #tpu.pipeline_mode<synchronous>, transform_indices = @transform_7, window_bounds = array<i64: 12, 3>}, {pipeline_mode = #tpu.pipeline_mode<synchronous>, transform_indices = @transform_8, window_bounds = array<i64: 1, 3>}, {pipeline_mode = #tpu.pipeline_mode<synchronous>, transform_indices = @transform_9, window_bounds = array<i64: 12, 12>}, {pipeline_mode = #tpu.pipeline_mode<synchronous>, transform_indices = @transform_10, window_bounds = array<i64: 1, 12>}, {pipeline_mode = #tpu.pipeline_mode<synchronous>, transform_indices = @transform_11, window_bounds = array<i64: 12, 64>}, {pipeline_mode = #tpu.pipeline_mode<synchronous>, transform_indices = @transform_12, window_bounds = array<i64: 1, 64>}, {pipeline_mode = #tpu.pipeline_mode<synchronous>, transform_indices = @transform_13, window_bounds = array<i64: 64, 128>}, {pipeline_mode = #tpu.pipeline_mode<synchronous>, transform_indices = @transform_14, window_bounds = array<i64: 1, 128>}, {pipeline_mode = #tpu.pipeline_mode<synchronous>, transform_indices = @transform_15, window_bounds = array<i64: 128, 784>}, {pipeline_mode = #tpu.pipeline_mode<synchronous>, transform_indices = @transform_16, window_bounds = array<i64: 1, 784>}, {transform_indices = @transform_17, window_bounds = array<i64: 64, 3>}, {transform_indices = @transform_18, window_bounds = array<i64: 64, 784>}]} {
    %c0 = arith.constant 0 : index
    %c0_0 = arith.constant 0 : index
    %0 = vector.load %arg1[%c0, %c0_0] : memref<64x784xf32, #tpu.memory_space<vmem>>, vector<64x784xf32>
    %1 = arith.truncf %0 : vector<64x784xf32> to vector<64x784xbf16>
    %c0_1 = arith.constant 0 : index
    %c0_2 = arith.constant 0 : index
    %2 = vector.load %arg2[%c0_1, %c0_2] : memref<784x128xbf16, #tpu.memory_space<vmem>>, vector<784x128xbf16>
    %cst = arith.constant dense<0.000000e+00> : vector<64x128xf32>
    %3 = tpu.matmul %1, %2, %cst {dimension_numbers = #tpu.dot_dimension_numbers<[1], [0], [0], [1], [0, 0, 1, 1], [], []>} : vector<64x784xbf16>, vector<784x128xbf16>, vector<64x128xf32> -> vector<64x128xf32>
    %c0_3 = arith.constant 0 : index
    %c0_4 = arith.constant 0 : index
    %4 = vector.load %arg3[%c0_3, %c0_4] : memref<1x128xf32, #tpu.memory_space<vmem>>, vector<1x128xf32>
    %5 = vector.broadcast %4 : vector<1x128xf32> to vector<64x128xf32>
    %6 = arith.addf %3, %5 : vector<64x128xf32>
    %7 = math.tanh %6 : vector<64x128xf32>
    %8 = arith.truncf %7 : vector<64x128xf32> to vector<64x128xbf16>
    %c0_5 = arith.constant 0 : index
    %c0_6 = arith.constant 0 : index
    %9 = vector.load %arg4[%c0_5, %c0_6] : memref<128x64xbf16, #tpu.memory_space<vmem>>, vector<128x64xbf16>
    %cst_7 = arith.constant dense<0.000000e+00> : vector<64x64xf32>
    %10 = tpu.matmul %8, %9, %cst_7 {dimension_numbers = #tpu.dot_dimension_numbers<[1], [0], [0], [1], [0, 0, 1, 1], [], []>} : vector<64x128xbf16>, vector<128x64xbf16>, vector<64x64xf32> -> vector<64x64xf32>
    %c0_8 = arith.constant 0 : index
    %c0_9 = arith.constant 0 : index
    %11 = vector.load %arg5[%c0_8, %c0_9] : memref<1x64xf32, #tpu.memory_space<vmem>>, vector<1x64xf32>
    %12 = vector.broadcast %11 : vector<1x64xf32> to vector<64x64xf32>
    %13 = arith.addf %10, %12 : vector<64x64xf32>
    %14 = math.tanh %13 : vector<64x64xf32>
    %15 = arith.truncf %14 : vector<64x64xf32> to vector<64x64xbf16>
    %c0_10 = arith.constant 0 : index
    %c0_11 = arith.constant 0 : index
    %16 = vector.load %arg6[%c0_10, %c0_11] : memref<64x12xbf16, #tpu.memory_space<vmem>>, vector<64x12xbf16>
    %cst_12 = arith.constant dense<0.000000e+00> : vector<64x12xf32>
    %17 = tpu.matmul %15, %16, %cst_12 {dimension_numbers = #tpu.dot_dimension_numbers<[1], [0], [0], [1], [0, 0, 1, 1], [], []>} : vector<64x64xbf16>, vector<64x12xbf16>, vector<64x12xf32> -> vector<64x12xf32>
    %c0_13 = arith.constant 0 : index
    %c0_14 = arith.constant 0 : index
    %18 = vector.load %arg7[%c0_13, %c0_14] : memref<1x12xf32, #tpu.memory_space<vmem>>, vector<1x12xf32>
    %19 = vector.broadcast %18 : vector<1x12xf32> to vector<64x12xf32>
    %20 = arith.addf %17, %19 : vector<64x12xf32>
    %21 = math.tanh %20 : vector<64x12xf32>
    %22 = arith.truncf %21 : vector<64x12xf32> to vector<64x12xbf16>
    %c0_15 = arith.constant 0 : index
    %c0_16 = arith.constant 0 : index
    %23 = vector.load %arg8[%c0_15, %c0_16] : memref<12x3xbf16, #tpu.memory_space<vmem>>, vector<12x3xbf16>
    %cst_17 = arith.constant dense<0.000000e+00> : vector<64x3xf32>
    %24 = tpu.matmul %22, %23, %cst_17 {dimension_numbers = #tpu.dot_dimension_numbers<[1], [0], [0], [1], [0, 0, 1, 1], [], []>} : vector<64x12xbf16>, vector<12x3xbf16>, vector<64x3xf32> -> vector<64x3xf32>
    %c0_18 = arith.constant 0 : index
    %c0_19 = arith.constant 0 : index
    %25 = vector.load %arg9[%c0_18, %c0_19] : memref<1x3xf32, #tpu.memory_space<vmem>>, vector<1x3xf32>
    %26 = vector.broadcast %25 : vector<1x3xf32> to vector<64x3xf32>
    %27 = arith.addf %24, %26 : vector<64x3xf32>
    %c0_20 = arith.constant 0 : index
    %c0_21 = arith.constant 0 : index
    %28 = vector.load %arg18[%c0_20, %c0_21] : memref<64x3xf32, #tpu.memory_space<vmem>>, vector<64x3xf32>
    tpu.vector_store %arg18[%c0_20, %c0_21], %27 {strides = array<i32>} : memref<64x3xf32, #tpu.memory_space<vmem>>, vector<64x3xf32>,
    %c0_22 = arith.constant 0 : index
    %c0_23 = arith.constant 0 : index
    %29 = vector.load %arg10[%c0_22, %c0_23] : memref<12x12xbf16, #tpu.memory_space<vmem>>, vector<12x12xbf16>
    %cst_24 = arith.constant dense<0.000000e+00> : vector<64x12xf32>
    %30 = tpu.matmul %22, %29, %cst_24 {dimension_numbers = #tpu.dot_dimension_numbers<[1], [0], [0], [1], [0, 0, 1, 1], [], []>} : vector<64x12xbf16>, vector<12x12xbf16>, vector<64x12xf32> -> vector<64x12xf32>
    %c0_25 = arith.constant 0 : index
    %c0_26 = arith.constant 0 : index
    %31 = vector.load %arg11[%c0_25, %c0_26] : memref<1x12xf32, #tpu.memory_space<vmem>>, vector<1x12xf32>
    %32 = vector.broadcast %31 : vector<1x12xf32> to vector<64x12xf32>
    %33 = arith.addf %30, %32 : vector<64x12xf32>
    %34 = math.tanh %33 : vector<64x12xf32>
    %35 = arith.truncf %34 : vector<64x12xf32> to vector<64x12xbf16>
    %c0_27 = arith.constant 0 : index
    %c0_28 = arith.constant 0 : index
    %36 = vector.load %arg12[%c0_27, %c0_28] : memref<12x64xbf16, #tpu.memory_space<vmem>>, vector<12x64xbf16>
    %cst_29 = arith.constant dense<0.000000e+00> : vector<64x64xf32>
    %37 = tpu.matmul %35, %36, %cst_29 {dimension_numbers = #tpu.dot_dimension_numbers<[1], [0], [0], [1], [0, 0, 1, 1], [], []>} : vector<64x12xbf16>, vector<12x64xbf16>, vector<64x64xf32> -> vector<64x64xf32>
    %c0_30 = arith.constant 0 : index
    %c0_31 = arith.constant 0 : index
    %38 = vector.load %arg13[%c0_30, %c0_31] : memref<1x64xf32, #tpu.memory_space<vmem>>, vector<1x64xf32>
    %39 = vector.broadcast %38 : vector<1x64xf32> to vector<64x64xf32>
    %40 = arith.addf %37, %39 : vector<64x64xf32>
    %41 = math.tanh %40 : vector<64x64xf32>
    %42 = arith.truncf %41 : vector<64x64xf32> to vector<64x64xbf16>
    %c0_32 = arith.constant 0 : index
    %c0_33 = arith.constant 0 : index
    %43 = vector.load %arg14[%c0_32, %c0_33] : memref<64x128xbf16, #tpu.memory_space<vmem>>, vector<64x128xbf16>
    %cst_34 = arith.constant dense<0.000000e+00> : vector<64x128xf32>
    %44 = tpu.matmul %42, %43, %cst_34 {dimension_numbers = #tpu.dot_dimension_numbers<[1], [0], [0], [1], [0, 0, 1, 1], [], []>} : vector<64x64xbf16>, vector<64x128xbf16>, vector<64x128xf32> -> vector<64x128xf32>
    %c0_35 = arith.constant 0 : index
    %c0_36 = arith.constant 0 : index
    %45 = vector.load %arg15[%c0_35, %c0_36] : memref<1x128xf32, #tpu.memory_space<vmem>>, vector<1x128xf32>
    %46 = vector.broadcast %45 : vector<1x128xf32> to vector<64x128xf32>
    %47 = arith.addf %44, %46 : vector<64x128xf32>
    %48 = math.tanh %47 : vector<64x128xf32>
    %49 = arith.truncf %48 : vector<64x128xf32> to vector<64x128xbf16>
    %c0_37 = arith.constant 0 : index
    %c0_38 = arith.constant 0 : index
    %50 = vector.load %arg16[%c0_37, %c0_38] : memref<128x784xbf16, #tpu.memory_space<vmem>>, vector<128x784xbf16>
    %cst_39 = arith.constant dense<0.000000e+00> : vector<64x784xf32>
    %51 = tpu.matmul %49, %50, %cst_39 {dimension_numbers = #tpu.dot_dimension_numbers<[1], [0], [0], [1], [0, 0, 1, 1], [], []>} : vector<64x128xbf16>, vector<128x784xbf16>, vector<64x784xf32> -> vector<64x784xf32>
    %c0_40 = arith.constant 0 : index
    %c0_41 = arith.constant 0 : index
    %52 = vector.load %arg17[%c0_40, %c0_41] : memref<1x784xf32, #tpu.memory_space<vmem>>, vector<1x784xf32>
    %53 = vector.broadcast %52 : vector<1x784xf32> to vector<64x784xf32>
    %54 = arith.addf %51, %53 : vector<64x784xf32>
    %55 = arith.negf %54 : vector<64x784xf32>
    %56 = math.exp %55 : vector<64x784xf32>
    %cst_42 = arith.constant 1.000000e+00 : f32
    %57 = vector.broadcast %cst_42 : f32 to vector<64x784xf32>
    %58 = arith.addf %57, %56 : vector<64x784xf32>
    %59 = arith.divf %57, %58 : vector<64x784xf32>
    %60 = arith.truncf %59 : vector<64x784xf32> to vector<64x784xbf16>
    %c0_43 = arith.constant 0 : index
    %c0_44 = arith.constant 0 : index
    %61 = vector.load %arg19[%c0_43, %c0_44] : memref<64x784xbf16, #tpu.memory_space<vmem>>, vector<64x784xbf16>
    tpu.vector_store %arg19[%c0_43, %c0_44], %60 {strides = array<i32>} : memref<64x784xbf16, #tpu.memory_space<vmem>>, vector<64x784xbf16>,
    return
  }
  func.func @transform_0(%arg0: i32) -> (i32, i32) {
    %c0_i32 = arith.constant 0 : i32
    %c0_i32_0 = arith.constant 0 : i32
    return %arg0, %c0_i32 : i32, i32
  }
  func.func @transform_1(%arg0: i32) -> (i32, i32) {
    %c0_i32 = arith.constant 0 : i32
    %c0_i32_0 = arith.constant 0 : i32
    %c0_i32_1 = arith.constant 0 : i32
    return %c0_i32, %c0_i32_0 : i32, i32
  }
  func.func @transform_2(%arg0: i32) -> (i32, i32) {
    %c0_i32 = arith.constant 0 : i32
    %c0_i32_0 = arith.constant 0 : i32
    %c0_i32_1 = arith.constant 0 : i32
    return %c0_i32, %c0_i32_0 : i32, i32
  }
  func.func @transform_3(%arg0: i32) -> (i32, i32) {
    %c0_i32 = arith.constant 0 : i32
    %c0_i32_0 = arith.constant 0 : i32
    %c0_i32_1 = arith.constant 0 : i32
    return %c0_i32, %c0_i32_0 : i32, i32
  }
  func.func @transform_4(%arg0: i32) -> (i32, i32) {
    %c0_i32 = arith.constant 0 : i32
    %c0_i32_0 = arith.constant 0 : i32
    %c0_i32_1 = arith.constant 0 : i32
    return %c0_i32, %c0_i32_0 : i32, i32
  }
  func.func @transform_5(%arg0: i32) -> (i32, i32) {
    %c0_i32 = arith.constant 0 : i32
    %c0_i32_0 = arith.constant 0 : i32
    %c0_i32_1 = arith.constant 0 : i32
    return %c0_i32, %c0_i32_0 : i32, i32
  }
  func.func @transform_6(%arg0: i32) -> (i32, i32) {
    %c0_i32 = arith.constant 0 : i32
    %c0_i32_0 = arith.constant 0 : i32
    %c0_i32_1 = arith.constant 0 : i32
    return %c0_i32, %c0_i32_0 : i32, i32
  }
  func.func @transform_7(%arg0: i32) -> (i32, i32) {
    %c0_i32 = arith.constant 0 : i32
    %c0_i32_0 = arith.constant 0 : i32
    %c0_i32_1 = arith.constant 0 : i32
    return %c0_i32, %c0_i32_0 : i32, i32
  }
  func.func @transform_8(%arg0: i32) -> (i32, i32) {
    %c0_i32 = arith.constant 0 : i32
    %c0_i32_0 = arith.constant 0 : i32
    %c0_i32_1 = arith.constant 0 : i32
    return %c0_i32, %c0_i32_0 : i32, i32
  }
  func.func @transform_9(%arg0: i32) -> (i32, i32) {
    %c0_i32 = arith.constant 0 : i32
    %c0_i32_0 = arith.constant 0 : i32
    %c0_i32_1 = arith.constant 0 : i32
    return %c0_i32, %c0_i32_0 : i32, i32
  }
  func.func @transform_10(%arg0: i32) -> (i32, i32) {
    %c0_i32 = arith.constant 0 : i32
    %c0_i32_0 = arith.constant 0 : i32
    %c0_i32_1 = arith.constant 0 : i32
    return %c0_i32, %c0_i32_0 : i32, i32
  }
  func.func @transform_11(%arg0: i32) -> (i32, i32) {
    %c0_i32 = arith.constant 0 : i32
    %c0_i32_0 = arith.constant 0 : i32
    %c0_i32_1 = arith.constant 0 : i32
    return %c0_i32, %c0_i32_0 : i32, i32
  }
  func.func @transform_12(%arg0: i32) -> (i32, i32) {
    %c0_i32 = arith.constant 0 : i32
    %c0_i32_0 = arith.constant 0 : i32
    %c0_i32_1 = arith.constant 0 : i32
    return %c0_i32, %c0_i32_0 : i32, i32
  }
  func.func @transform_13(%arg0: i32) -> (i32, i32) {
    %c0_i32 = arith.constant 0 : i32
    %c0_i32_0 = arith.constant 0 : i32
    %c0_i32_1 = arith.constant 0 : i32
    return %c0_i32, %c0_i32_0 : i32, i32
  }
  func.func @transform_14(%arg0: i32) -> (i32, i32) {
    %c0_i32 = arith.constant 0 : i32
    %c0_i32_0 = arith.constant 0 : i32
    %c0_i32_1 = arith.constant 0 : i32
    return %c0_i32, %c0_i32_0 : i32, i32
  }
  func.func @transform_15(%arg0: i32) -> (i32, i32) {
    %c0_i32 = arith.constant 0 : i32
    %c0_i32_0 = arith.constant 0 : i32
    %c0_i32_1 = arith.constant 0 : i32
    return %c0_i32, %c0_i32_0 : i32, i32
  }
  func.func @transform_16(%arg0: i32) -> (i32, i32) {
    %c0_i32 = arith.constant 0 : i32
    %c0_i32_0 = arith.constant 0 : i32
    %c0_i32_1 = arith.constant 0 : i32
    return %c0_i32, %c0_i32_0 : i32, i32
  }
  func.func @transform_17(%arg0: i32) -> (i32, i32) {
    %c0_i32 = arith.constant 0 : i32
    %c0_i32_0 = arith.constant 0 : i32
    return %arg0, %c0_i32 : i32, i32
  }
  func.func @transform_18(%arg0: i32) -> (i32, i32) {
    %c0_i32 = arith.constant 0 : i32
    %c0_i32_0 = arith.constant 0 : i32
    return %arg0, %c0_i32 : i32, i32
  }
}

</mosaic_0001>

<llo_original>
// kernel: autoencoder_forward.1
$region0: #{autoencoder_forward.1}
  #allocation0 [shape = 'u32[]', space=smem, size = 0x4, offset = 0x4, fixed_abs, tag = 'smem constant byte address 0x4 - core index']
  #allocation1 [shape = 'u32[144,128]{1,0:T(1,128)}', space=vmem, size = 0x12000, scoped, tag = 'internal scratch']
  %s0 = inlined_call_operand.vmem [shape: f32[256,784], index: 0, kind: input, shape index: {}]
  %s1 = inlined_call_operand.vmem [shape: bf16[784,128], index: 1, kind: input, shape index: {}]
  %s2 = inlined_call_operand.vmem [shape: f32[1,128], index: 2, kind: input, shape index: {}]
  %s3 = inlined_call_operand.vmem [shape: bf16[128,64], index: 3, kind: input, shape index: {}]
  %s4 = inlined_call_operand.vmem [shape: f32[1,64], index: 4, kind: input, shape index: {}]
  %s5 = inlined_call_operand.vmem [shape: bf16[64,12], index: 5, kind: input, shape index: {}]
  %s6 = inlined_call_operand.vmem [shape: f32[1,12], index: 6, kind: input, shape index: {}]
  %s7 = inlined_call_operand.vmem [shape: bf16[12,3], index: 7, kind: input, shape index: {}]
  %s8 = inlined_call_operand.vmem [shape: f32[1,3], index: 8, kind: input, shape index: {}]
  %s9 = inlined_call_operand.vmem [shape: bf16[12,12], index: 9, kind: input, shape index: {}]
  %s10 = inlined_call_operand.vmem [shape: f32[1,12], index: 10, kind: input, shape index: {}]
  %s11 = inlined_call_operand.vmem [shape: bf16[12,64], index: 11, kind: input, shape index: {}]
  %s12 = inlined_call_operand.vmem [shape: f32[1,64], index: 12, kind: input, shape index: {}]
  %s13 = inlined_call_operand.vmem [shape: bf16[64,128], index: 13, kind: input, shape index: {}]
  %s14 = inlined_call_operand.vmem [shape: f32[1,128], index: 14, kind: input, shape index: {}]
  %s15 = inlined_call_operand.vmem [shape: bf16[128,784], index: 15, kind: input, shape index: {}]
  %s16 = inlined_call_operand.vmem [shape: f32[1,784], index: 16, kind: input, shape index: {}]
  %s17 = inlined_call_operand.vmem [shape: f32[256,3], index: 17, kind: output, shape index: {0}]
  %s18 = inlined_call_operand.vmem [shape: bf16[256,784], index: 18, kind: output, shape index: {1}]
  %19 = xla_tuple %s17, %s18
  %s20 = sld [smem:[#allocation0]]
  $region109: #{autoencoder_forward.1} parent=0
    _
  %s22 = ssub.s32 1, %s20
  %s23 = scalar_select 0, %s22, %s20
  loop: start=0, step=1, limit=6
  $region2: #{autoencoder_forward.1} parent=0 // loop_pre_header
    _
  $region3: #{autoencoder_forward.1} parent=0 // loop_header
    %s25 = sphi 0, %s29
    %p26 = scmp.ge.s32.totalorder %s25, 6
    %s35 = sphi 0, %s37
    %s38 = sphi 0, %s35
    %s39 = sphi 0, %s38
    %s55 = sphi 0, %s39
    %s59 = sphi 0, %s59
    %s61 = sphi 0, %s59
    %s62 = sphi 0, %s61
    %s76 = sphi 0, %s62
    %s80 = sphi 0, %s80
    %s82 = sphi 0, %s80
    %s83 = sphi 0, %s82
    %s97 = sphi 0, %s83
    %s101 = sphi 0, %s101
    %s103 = sphi 0, %s101
    %s104 = sphi 0, %s103
    %s118 = sphi 0, %s104
    %s122 = sphi 0, %s122
    %s124 = sphi 0, %s122
    %s125 = sphi 0, %s124
    %s139 = sphi 0, %s125
    %s143 = sphi 0, %s143
    %s145 = sphi 0, %s143
    %s146 = sphi 0, %s145
    %s160 = sphi 0, %s146
    %s164 = sphi 0, %s164
    %s166 = sphi 0, %s164
    %s167 = sphi 0, %s166
    %s181 = sphi 0, %s167
    %s185 = sphi 0, %s185
    %s187 = sphi 0, %s185
    %s188 = sphi 0, %s187
    %s202 = sphi 0, %s188
    %s206 = sphi 0, %s206
    %s208 = sphi 0, %s206
    %s209 = sphi 0, %s208
    %s223 = sphi 0, %s209
    %s227 = sphi 0, %s227
    %s229 = sphi 0, %s227
    %s230 = sphi 0, %s229
    %s244 = sphi 0, %s230
    %s248 = sphi 0, %s248
    %s250 = sphi 0, %s248
    %s251 = sphi 0, %s250
    %s265 = sphi 0, %s251
    %s269 = sphi 0, %s269
    %s271 = sphi 0, %s269
    %s272 = sphi 0, %s271
    %s286 = sphi 0, %s272
    %s290 = sphi 0, %s290
    %s292 = sphi 0, %s290
    %s293 = sphi 0, %s292
    %s307 = sphi 0, %s293
    %s311 = sphi 0, %s311
    %s313 = sphi 0, %s311
    %s314 = sphi 0, %s313
    %s328 = sphi 0, %s314
    %s332 = sphi 0, %s332
    %s334 = sphi 0, %s332
    %s335 = sphi 0, %s334
    %s349 = sphi 0, %s335
    %s353 = sphi 0, %s353
    %s355 = sphi 0, %s353
    %s356 = sphi 0, %s355
    %s370 = sphi 0, %s356
    %s374 = sphi 0, %s374
    %s376 = sphi 0, %s374
    %s377 = sphi 0, %s376
    %s391 = sphi 0, %s377
    %s397 = sphi 0, %s399
    %s400 = sphi 0, %s397
    %s401 = sphi 0, %s400
    %s417 = sphi 0, %s401
    %s423 = sphi 0, %s425
    %s426 = sphi 0, %s423
    %s427 = sphi 0, %s426
    %s443 = sphi 0, %s427
  $region4: #{autoencoder_forward.1} parent=0 // loop_header_branch
    %28 = sbr.rel (%p26) target = $region8
  $region5: #{autoencoder_forward.1} parent=0 // loop_body
    %s30 = ssub.s32 %s25, 1
    %s31 = ssub.s32 %s25, 2
    %s32 = sadd.s32 %s25, 1
    %s33 = ssub.s32 %s25, %s32
    %p34 = scmp.eq.s32.totalorder %s33, 0
    %s36 = sadd.s32 %s35, 1
    %s37 = scalar_select %p34, %s35, %s36
    %p40 = pneg %p34
    %p41 = scmp.eq.s32.totalorder %s25, 3
    %p42 = por %p40, %p41
    %p43 = scmp.ne.s32.totalorder %s35, %s38
    %p44 = scmp.eq.s32.totalorder %s25, 0
    %p45 = por %p43, %p44
    %p46 = scmp.ne.s32.totalorder %s35, %s38
    %p47 = scmp.eq.s32.totalorder %s30, 3
    %p48 = por %p46, %p47
    %p49 = scmp.ne.s32.totalorder %s38, %s39
    %p50 = scmp.eq.s32.totalorder %s30, 0
    %p51 = por %p49, %p50
    %p52 = scmp.ne.s32.totalorder %s38, %s39
    %p53 = scmp.eq.s32.totalorder %s31, 3
    %p54 = por %p52, %p53
    %p56 = scmp.ne.s32.totalorder %s39, %s55
    %p57 = scmp.eq.s32.totalorder %s31, 0
    %p58 = por %p56, %p57
    %s60 = sadd.s32 %s59, 1
    %p63 = scmp.eq.s32.totalorder %s25, 3
    %p64 = scmp.ne.s32.totalorder %s59, %s61
    %p65 = scmp.eq.s32.totalorder %s25, 0
    %p66 = por %p64, %p65
    %p67 = scmp.ne.s32.totalorder %s59, %s61
    %p68 = scmp.eq.s32.totalorder %s30, 3
    %p69 = por %p67, %p68
    %p70 = scmp.ne.s32.totalorder %s61, %s62
    %p71 = scmp.eq.s32.totalorder %s30, 0
    %p72 = por %p70, %p71
    %p73 = scmp.ne.s32.totalorder %s61, %s62
    %p74 = scmp.eq.s32.totalorder %s31, 3
    %p75 = por %p73, %p74
    %p77 = scmp.ne.s32.totalorder %s62, %s76
    %p78 = scmp.eq.s32.totalorder %s31, 0
    %p79 = por %p77, %p78
    %s81 = sadd.s32 %s80, 1
    %p84 = scmp.eq.s32.totalorder %s25, 3
    %p85 = scmp.ne.s32.totalorder %s80, %s82
    %p86 = scmp.eq.s32.totalorder %s25, 0
    %p87 = por %p85, %p86
    %p88 = scmp.ne.s32.totalorder %s80, %s82
    %p89 = scmp.eq.s32.totalorder %s30, 3
    %p90 = por %p88, %p89
    %p91 = scmp.ne.s32.totalorder %s82, %s83
    %p92 = scmp.eq.s32.totalorder %s30, 0
    %p93 = por %p91, %p92
    %p94 = scmp.ne.s32.totalorder %s82, %s83
    %p95 = scmp.eq.s32.totalorder %s31, 3
    %p96 = por %p94, %p95
    %p98 = scmp.ne.s32.totalorder %s83, %s97
    %p99 = scmp.eq.s32.totalorder %s31, 0
    %p100 = por %p98, %p99
    %s102 = sadd.s32 %s101, 1
    %p105 = scmp.eq.s32.totalorder %s25, 3
    %p106 = scmp.ne.s32.totalorder %s101, %s103
    %p107 = scmp.eq.s32.totalorder %s25, 0
    %p108 = por %p106, %p107
    %p109 = scmp.ne.s32.totalorder %s101, %s103
    %p110 = scmp.eq.s32.totalorder %s30, 3
    %p111 = por %p109, %p110
    %p112 = scmp.ne.s32.totalorder %s103, %s104
    %p113 = scmp.eq.s32.totalorder %s30, 0
    %p114 = por %p112, %p113
    %p115 = scmp.ne.s32.totalorder %s103, %s104
    %p116 = scmp.eq.s32.totalorder %s31, 3
    %p117 = por %p115, %p116
    %p119 = scmp.ne.s32.totalorder %s104, %s118
    %p120 = scmp.eq.s32.totalorder %s31, 0
    %p121 = por %p119, %p120
    %s123 = sadd.s32 %s122, 1
    %p126 = scmp.eq.s32.totalorder %s25, 3
    %p127 = scmp.ne.s32.totalorder %s122, %s124
    %p128 = scmp.eq.s32.totalorder %s25, 0
    %p129 = por %p127, %p128
    %p130 = scmp.ne.s32.totalorder %s122, %s124
    %p131 = scmp.eq.s32.totalorder %s30, 3
    %p132 = por %p130, %p131
    %p133 = scmp.ne.s32.totalorder %s124, %s125
    %p134 = scmp.eq.s32.totalorder %s30, 0
    %p135 = por %p133, %p134
    %p136 = scmp.ne.s32.totalorder %s124, %s125
    %p137 = scmp.eq.s32.totalorder %s31, 3
    %p138 = por %p136, %p137
    %p140 = scmp.ne.s32.totalorder %s125, %s139
    %p141 = scmp.eq.s32.totalorder %s31, 0
    %p142 = por %p140, %p141
    %s144 = sadd.s32 %s143, 1
    %p147 = scmp.eq.s32.totalorder %s25, 3
    %p148 = scmp.ne.s32.totalorder %s143, %s145
    %p149 = scmp.eq.s32.totalorder %s25, 0
    %p150 = por %p148, %p149
    %p151 = scmp.ne.s32.totalorder %s143, %s145
    %p152 = scmp.eq.s32.totalorder %s30, 3
    %p153 = por %p151, %p152
    %p154 = scmp.ne.s32.totalorder %s145, %s146
    %p155 = scmp.eq.s32.totalorder %s30, 0
    %p156 = por %p154, %p155
    %p157 = scmp.ne.s32.totalorder %s145, %s146
    %p158 = scmp.eq.s32.totalorder %s31, 3
    %p159 = por %p157, %p158
    %p161 = scmp.ne.s32.totalorder %s146, %s160
    %p162 = scmp.eq.s32.totalorder %s31, 0
    %p163 = por %p161, %p162
    %s165 = sadd.s32 %s164, 1
    %p168 = scmp.eq.s32.totalorder %s25, 3
    %p169 = scmp.ne.s32.totalorder %s164, %s166
    %p170 = scmp.eq.s32.totalorder %s25, 0
    %p171 = por %p169, %p170
    %p172 = scmp.ne.s32.totalorder %s164, %s166
    %p173 = scmp.eq.s32.totalorder %s30, 3
    %p174 = por %p172, %p173
    %p175 = scmp.ne.s32.totalorder %s166, %s167
    %p176 = scmp.eq.s32.totalorder %s30, 0
    %p177 = por %p175, %p176
    %p178 = scmp.ne.s32.totalorder %s166, %s167
    %p179 = scmp.eq.s32.totalorder %s31, 3
    %p180 = por %p178, %p179
    %p182 = scmp.ne.s32.totalorder %s167, %s181
    %p183 = scmp.eq.s32.totalorder %s31, 0
    %p184 = por %p182, %p183
    %s186 = sadd.s32 %s185, 1
    %p189 = scmp.eq.s32.totalorder %s25, 3
    %p190 = scmp.ne.s32.totalorder %s185, %s187
    %p191 = scmp.eq.s32.totalorder %s25, 0
    %p192 = por %p190, %p191
    %p193 = scmp.ne.s32.totalorder %s185, %s187
    %p194 = scmp.eq.s32.totalorder %s30, 3
    %p195 = por %p193, %p194
    %p196 = scmp.ne.s32.totalorder %s187, %s188
    %p197 = scmp.eq.s32.totalorder %s30, 0
    %p198 = por %p196, %p197
    %p199 = scmp.ne.s32.totalorder %s187, %s188
    %p200 = scmp.eq.s32.totalorder %s31, 3
    %p201 = por %p199, %p200
    %p203 = scmp.ne.s32.totalorder %s188, %s202
    %p204 = scmp.eq.s32.totalorder %s31, 0
    %p205 = por %p203, %p204
    %s207 = sadd.s32 %s206, 1
    %p210 = scmp.eq.s32.totalorder %s25, 3
    %p211 = scmp.ne.s32.totalorder %s206, %s208
    %p212 = scmp.eq.s32.totalorder %s25, 0
    %p213 = por %p211, %p212
    %p214 = scmp.ne.s32.totalorder %s206, %s208
    %p215 = scmp.eq.s32.totalorder %s30, 3
    %p216 = por %p214, %p215
    %p217 = scmp.ne.s32.totalorder %s208, %s209
    %p218 = scmp.eq.s32.totalorder %s30, 0
    %p219 = por %p217, %p218
    %p220 = scmp.ne.s32.totalorder %s208, %s209
    %p221 = scmp.eq.s32.totalorder %s31, 3
    %p222 = por %p220, %p221
    %p224 = scmp.ne.s32.totalorder %s209, %s223
    %p225 = scmp.eq.s32.totalorder %s31, 0
    %p226 = por %p224, %p225
    %s228 = sadd.s32 %s227, 1
    %p231 = scmp.eq.s32.totalorder %s25, 3
    %p232 = scmp.ne.s32.totalorder %s227, %s229
    %p233 = scmp.eq.s32.totalorder %s25, 0
    %p234 = por %p232, %p233
    %p235 = scmp.ne.s32.totalorder %s227, %s229
    %p236 = scmp.eq.s32.totalorder %s30, 3
    %p237 = por %p235, %p236
    %p238 = scmp.ne.s32.totalorder %s229, %s230
    %p239 = scmp.eq.s32.totalorder %s30, 0
    %p240 = por %p238, %p239
    %p241 = scmp.ne.s32.totalorder %s229, %s230
    %p242 = scmp.eq.s32.totalorder %s31, 3
    %p243 = por %p241, %p242
    %p245 = scmp.ne.s32.totalorder %s230, %s244
    %p246 = scmp.eq.s32.totalorder %s31, 0
    %p247 = por %p245, %p246
    %s249 = sadd.s32 %s248, 1
    %p252 = scmp.eq.s32.totalorder %s25, 3
    %p253 = scmp.ne.s32.totalorder %s248, %s250
    %p254 = scmp.eq.s32.totalorder %s25, 0
    %p255 = por %p253, %p254
    %p256 = scmp.ne.s32.totalorder %s248, %s250
    %p257 = scmp.eq.s32.totalorder %s30, 3
    %p258 = por %p256, %p257
    %p259 = scmp.ne.s32.totalorder %s250, %s251
    %p260 = scmp.eq.s32.totalorder %s30, 0
    %p261 = por %p259, %p260
    %p262 = scmp.ne.s32.totalorder %s250, %s251
    %p263 = scmp.eq.s32.totalorder %s31, 3
    %p264 = por %p262, %p263
    %p266 = scmp.ne.s32.totalorder %s251, %s265
    %p267 = scmp.eq.s32.totalorder %s31, 0
    %p268 = por %p266, %p267
    %s270 = sadd.s32 %s269, 1
    %p273 = scmp.eq.s32.totalorder %s25, 3
    %p274 = scmp.ne.s32.totalorder %s269, %s271
    %p275 = scmp.eq.s32.totalorder %s25, 0
    %p276 = por %p274, %p275
    %p277 = scmp.ne.s32.totalorder %s269, %s271
    %p278 = scmp.eq.s32.totalorder %s30, 3
    %p279 = por %p277, %p278
    %p280 = scmp.ne.s32.totalorder %s271, %s272
    %p281 = scmp.eq.s32.totalorder %s30, 0
    %p282 = por %p280, %p281
    %p283 = scmp.ne.s32.totalorder %s271, %s272
    %p284 = scmp.eq.s32.totalorder %s31, 3
    %p285 = por %p283, %p284
    %p287 = scmp.ne.s32.totalorder %s272, %s286
    %p288 = scmp.eq.s32.totalorder %s31, 0
    %p289 = por %p287, %p288
    %s291 = sadd.s32 %s290, 1
    %p294 = scmp.eq.s32.totalorder %s25, 3
    %p295 = scmp.ne.s32.totalorder %s290, %s292
    %p296 = scmp.eq.s32.totalorder %s25, 0
    %p297 = por %p295, %p296
    %p298 = scmp.ne.s32.totalorder %s290, %s292
    %p299 = scmp.eq.s32.totalorder %s30, 3
    %p300 = por %p298, %p299
    %p301 = scmp.ne.s32.totalorder %s292, %s293
    %p302 = scmp.eq.s32.totalorder %s30, 0
    %p303 = por %p301, %p302
    %p304 = scmp.ne.s32.totalorder %s292, %s293
    %p305 = scmp.eq.s32.totalorder %s31, 3
    %p306 = por %p304, %p305
    %p308 = scmp.ne.s32.totalorder %s293, %s307
    %p309 = scmp.eq.s32.totalorder %s31, 0
    %p310 = por %p308, %p309
    %s312 = sadd.s32 %s311, 1
    %p315 = scmp.eq.s32.totalorder %s25, 3
    %p316 = scmp.ne.s32.totalorder %s311, %s313
    %p317 = scmp.eq.s32.totalorder %s25, 0
    %p318 = por %p316, %p317
    %p319 = scmp.ne.s32.totalorder %s311, %s313
    %p320 = scmp.eq.s32.totalorder %s30, 3
    %p321 = por %p319, %p320
    %p322 = scmp.ne.s32.totalorder %s313, %s314
    %p323 = scmp.eq.s32.totalorder %s30, 0
    %p324 = por %p322, %p323
    %p325 = scmp.ne.s32.totalorder %s313, %s314
    %p326 = scmp.eq.s32.totalorder %s31, 3
    %p327 = por %p325, %p326
    %p329 = scmp.ne.s32.totalorder %s314, %s328
    %p330 = scmp.eq.s32.totalorder %s31, 0
    %p331 = por %p329, %p330
    %s333 = sadd.s32 %s332, 1
    %p336 = scmp.eq.s32.totalorder %s25, 3
    %p337 = scmp.ne.s32.totalorder %s332, %s334
    %p338 = scmp.eq.s32.totalorder %s25, 0
    %p339 = por %p337, %p338
    %p340 = scmp.ne.s32.totalorder %s332, %s334
    %p341 = scmp.eq.s32.totalorder %s30, 3
    %p342 = por %p340, %p341
    %p343 = scmp.ne.s32.totalorder %s334, %s335
    %p344 = scmp.eq.s32.totalorder %s30, 0
    %p345 = por %p343, %p344
    %p346 = scmp.ne.s32.totalorder %s334, %s335
    %p347 = scmp.eq.s32.totalorder %s31, 3
    %p348 = por %p346, %p347
    %p350 = scmp.ne.s32.totalorder %s335, %s349
    %p351 = scmp.eq.s32.totalorder %s31, 0
    %p352 = por %p350, %p351
    %s354 = sadd.s32 %s353, 1
    %p357 = scmp.eq.s32.totalorder %s25, 3
    %p358 = scmp.ne.s32.totalorder %s353, %s355
    %p359 = scmp.eq.s32.totalorder %s25, 0
    %p360 = por %p358, %p359
    %p361 = scmp.ne.s32.totalorder %s353, %s355
    %p362 = scmp.eq.s32.totalorder %s30, 3
    %p363 = por %p361, %p362
    %p364 = scmp.ne.s32.totalorder %s355, %s356
    %p365 = scmp.eq.s32.totalorder %s30, 0
    %p366 = por %p364, %p365
    %p367 = scmp.ne.s32.totalorder %s355, %s356
    %p368 = scmp.eq.s32.totalorder %s31, 3
    %p369 = por %p367, %p368
    %p371 = scmp.ne.s32.totalorder %s356, %s370
    %p372 = scmp.eq.s32.totalorder %s31, 0
    %p373 = por %p371, %p372
    %s375 = sadd.s32 %s374, 1
    %p378 = scmp.eq.s32.totalorder %s25, 3
    %p379 = scmp.ne.s32.totalorder %s374, %s376
    %p380 = scmp.eq.s32.totalorder %s25, 0
    %p381 = por %p379, %p380
    %p382 = scmp.ne.s32.totalorder %s374, %s376
    %p383 = scmp.eq.s32.totalorder %s30, 3
    %p384 = por %p382, %p383
    %p385 = scmp.ne.s32.totalorder %s376, %s377
    %p386 = scmp.eq.s32.totalorder %s30, 0
    %p387 = por %p385, %p386
    %p388 = scmp.ne.s32.totalorder %s376, %s377
    %p389 = scmp.eq.s32.totalorder %s31, 3
    %p390 = por %p388, %p389
    %p392 = scmp.ne.s32.totalorder %s377, %s391
    %p393 = scmp.eq.s32.totalorder %s31, 0
    %p394 = por %p392, %p393
    %s395 = ssub.s32 %s25, %s32
    %p396 = scmp.eq.s32.totalorder %s395, 0
    %s398 = sadd.s32 %s397, 1
    %s399 = scalar_select %p396, %s397, %s398
    %p402 = pneg %p396
    %p403 = scmp.eq.s32.totalorder %s25, 3
    %p404 = por %p402, %p403
    %p405 = scmp.ne.s32.totalorder %s397, %s400
    %p406 = scmp.eq.s32.totalorder %s25, 0
    %p407 = por %p405, %p406
    %p408 = scmp.ne.s32.totalorder %s397, %s400
    %p409 = scmp.eq.s32.totalorder %s30, 3
    %p410 = por %p408, %p409
    %p411 = scmp.ne.s32.totalorder %s400, %s401
    %p412 = scmp.eq.s32.totalorder %s30, 0
    %p413 = por %p411, %p412
    %p414 = scmp.ne.s32.totalorder %s400, %s401
    %p415 = scmp.eq.s32.totalorder %s31, 3
    %p416 = por %p414, %p415
    %p418 = scmp.ne.s32.totalorder %s401, %s417
    %p419 = scmp.eq.s32.totalorder %s31, 0
    %p420 = por %p418, %p419
    %s421 = ssub.s32 %s25, %s32
    %p422 = scmp.eq.s32.totalorder %s421, 0
    %s424 = sadd.s32 %s423, 1
    %s425 = scalar_select %p422, %s423, %s424
    %p428 = pneg %p422
    %p429 = scmp.eq.s32.totalorder %s25, 3
    %p430 = por %p428, %p429
    %p431 = scmp.ne.s32.totalorder %s423, %s426
    %p432 = scmp.eq.s32.totalorder %s25, 0
    %p433 = por %p431, %p432
    %p434 = scmp.ne.s32.totalorder %s423, %s426
    %p435 = scmp.eq.s32.totalorder %s30, 3
    %p436 = por %p434, %p435
    %p437 = scmp.ne.s32.totalorder %s426, %s427
    %p438 = scmp.eq.s32.totalorder %s30, 0
    %p439 = por %p437, %p438
    %p440 = scmp.ne.s32.totalorder %s426, %s427
    %p441 = scmp.eq.s32.totalorder %s31, 3
    %p442 = por %p440, %p441
    %p444 = scmp.ne.s32.totalorder %s427, %s443
    %p445 = scmp.eq.s32.totalorder %s31, 0
    %p446 = por %p444, %p445
    %p447 = scmp.le.s32.totalorder 1, %s25
    %p448 = scmp.lt.s32.totalorder %s25, 5
    %p449 = pnand %p447, %p448
    %p450 = pneg %p449
    // Predicated region
    $region9: #{autoencoder_forward.1} parent=5 // pred_check
      _
    $region10: #{autoencoder_forward.1} parent=5 // pred_check_branch
      %452 = sbr.rel (%p449) target = $region12
    $region11: #{autoencoder_forward.1} parent=5 // pred_region
      %s453 = ssub.s32 %s25, 1
      // Predicated region
      $region13: #{autoencoder_forward.1} parent=11 // pred_check
        %p454 = pneg %p72
      $region14: #{autoencoder_forward.1} parent=11 // pred_check_branch
        %456 = sbr.rel (%p454) target = $region16
      $region15: #{autoencoder_forward.1} parent=11 // pred_region
        _
      $region16: #{autoencoder_forward.1} parent=11 // pred_fallthru
        _
      // Predicated region
      $region17: #{autoencoder_forward.1} parent=11 // pred_check
        %p457 = pneg %p93
      $region18: #{autoencoder_forward.1} parent=11 // pred_check_branch
        %459 = sbr.rel (%p457) target = $region20
      $region19: #{autoencoder_forward.1} parent=11 // pred_region
        _
      $region20: #{autoencoder_forward.1} parent=11 // pred_fallthru
        _
      // Predicated region
      $region21: #{autoencoder_forward.1} parent=11 // pred_check
        %p460 = pneg %p114
      $region22: #{autoencoder_forward.1} parent=11 // pred_check_branch
        %462 = sbr.rel (%p460) target = $region24
      $region23: #{autoencoder_forward.1} parent=11 // pred_region
        _
      $region24: #{autoencoder_forward.1} parent=11 // pred_fallthru
        _
      // Predicated region
      $region25: #{autoencoder_forward.1} parent=11 // pred_check
        %p463 = pneg %p135
      $region26: #{autoencoder_forward.1} parent=11 // pred_check_branch
        %465 = sbr.rel (%p463) target = $region28
      $region27: #{autoencoder_forward.1} parent=11 // pred_region
        _
      $region28: #{autoencoder_forward.1} parent=11 // pred_fallthru
        _
      // Predicated region
      $region29: #{autoencoder_forward.1} parent=11 // pred_check
        %p466 = pneg %p156
      $region30: #{autoencoder_forward.1} parent=11 // pred_check_branch
        %468 = sbr.rel (%p466) target = $region32
      $region31: #{autoencoder_forward.1} parent=11 // pred_region
        _
      $region32: #{autoencoder_forward.1} parent=11 // pred_fallthru
        _
      // Predicated region
      $region33: #{autoencoder_forward.1} parent=11 // pred_check
        %p469 = pneg %p177
      $region34: #{autoencoder_forward.1} parent=11 // pred_check_branch
        %471 = sbr.rel (%p469) target = $region36
      $region35: #{autoencoder_forward.1} parent=11 // pred_region
        _
      $region36: #{autoencoder_forward.1} parent=11 // pred_fallthru
        _
      // Predicated region
      $region37: #{autoencoder_forward.1} parent=11 // pred_check
        %p472 = pneg %p198
      $region38: #{autoencoder_forward.1} parent=11 // pred_check_branch
        %474 = sbr.rel (%p472) target = $region40
      $region39: #{autoencoder_forward.1} parent=11 // pred_region
        _
      $region40: #{autoencoder_forward.1} parent=11 // pred_fallthru
        _
      // Predicated region
      $region41: #{autoencoder_forward.1} parent=11 // pred_check
        %p475 = pneg %p219
      $region42: #{autoencoder_forward.1} parent=11 // pred_check_branch
        %477 = sbr.rel (%p475) target = $region44
      $region43: #{autoencoder_forward.1} parent=11 // pred_region
        _
      $region44: #{autoencoder_forward.1} parent=11 // pred_fallthru
        _
      // Predicated region
      $region45: #{autoencoder_forward.1} parent=11 // pred_check
        %p478 = pneg %p240
      $region46: #{autoencoder_forward.1} parent=11 // pred_check_branch
        %480 = sbr.rel (%p478) target = $region48
      $region47: #{autoencoder_forward.1} parent=11 // pred_region
        _
      $region48: #{autoencoder_forward.1} parent=11 // pred_fallthru
        _
      // Predicated region
      $region49: #{autoencoder_forward.1} parent=11 // pred_check
        %p481 = pneg %p261
      $region50: #{autoencoder_forward.1} parent=11 // pred_check_branch
        %483 = sbr.rel (%p481) target = $region52
      $region51: #{autoencoder_forward.1} parent=11 // pred_region
        _
      $region52: #{autoencoder_forward.1} parent=11 // pred_fallthru
        _
      // Predicated region
      $region53: #{autoencoder_forward.1} parent=11 // pred_check
        %p484 = pneg %p282
      $region54: #{autoencoder_forward.1} parent=11 // pred_check_branch
        %486 = sbr.rel (%p484) target = $region56
      $region55: #{autoencoder_forward.1} parent=11 // pred_region
        _
      $region56: #{autoencoder_forward.1} parent=11 // pred_fallthru
        _
      // Predicated region
      $region57: #{autoencoder_forward.1} parent=11 // pred_check
        %p487 = pneg %p303
      $region58: #{autoencoder_forward.1} parent=11 // pred_check_branch
        %489 = sbr.rel (%p487) target = $region60
      $region59: #{autoencoder_forward.1} parent=11 // pred_region
        _
      $region60: #{autoencoder_forward.1} parent=11 // pred_fallthru
        _
      // Predicated region
      $region61: #{autoencoder_forward.1} parent=11 // pred_check
        %p490 = pneg %p324
      $region62: #{autoencoder_forward.1} parent=11 // pred_check_branch
        %492 = sbr.rel (%p490) target = $region64
      $region63: #{autoencoder_forward.1} parent=11 // pred_region
        _
      $region64: #{autoencoder_forward.1} parent=11 // pred_fallthru
        _
      // Predicated region
      $region65: #{autoencoder_forward.1} parent=11 // pred_check
        %p493 = pneg %p345
      $region66: #{autoencoder_forward.1} parent=11 // pred_check_branch
        %495 = sbr.rel (%p493) target = $region68
      $region67: #{autoencoder_forward.1} parent=11 // pred_region
        _
      $region68: #{autoencoder_forward.1} parent=11 // pred_fallthru
        _
      // Predicated region
      $region69: #{autoencoder_forward.1} parent=11 // pred_check
        %p496 = pneg %p366
      $region70: #{autoencoder_forward.1} parent=11 // pred_check_branch
        %498 = sbr.rel (%p496) target = $region72
      $region71: #{autoencoder_forward.1} parent=11 // pred_region
        _
      $region72: #{autoencoder_forward.1} parent=11 // pred_fallthru
        _
      // Predicated region
      $region73: #{autoencoder_forward.1} parent=11 // pred_check
        %p499 = pneg %p387
      $region74: #{autoencoder_forward.1} parent=11 // pred_check_branch
        %501 = sbr.rel (%p499) target = $region76
      $region75: #{autoencoder_forward.1} parent=11 // pred_region
        _
      $region76: #{autoencoder_forward.1} parent=11 // pred_fallthru
        _
    $region12: #{autoencoder_forward.1} parent=5 // pred_fallthru
      _
    %p502 = scmp.lt.s32.totalorder %s25, 4
    // Predicated region
    $region77: #{autoencoder_forward.1} parent=5 // pred_check
      %p503 = pneg %p502
    $region78: #{autoencoder_forward.1} parent=5 // pred_check_branch
      %505 = sbr.rel (%p503) target = $region80
    $region79: #{autoencoder_forward.1} parent=5 // pred_region
      // Predicated region
      $region81: #{autoencoder_forward.1} parent=79 // pred_check
        %p506 = pneg %p45
      $region82: #{autoencoder_forward.1} parent=79 // pred_check_branch
        %508 = sbr.rel (%p506) target = $region84
      $region83: #{autoencoder_forward.1} parent=79 // pred_region
        %s509 = smul.u32 8, %s25
        %p510 = scmp.lt.s32.totalorder %s509, 31
        %s511 = scalar_select %p510, %s509, 31
        %s512 = smul.addr %s511, 7
        %s513 = smul.addr %s512, 8
        %s514 = scalar_lea.vmem %s0, %s513
        %s515 = smul.u32 8, %s25
      $region84: #{autoencoder_forward.1} parent=79 // pred_fallthru
        _
    $region80: #{autoencoder_forward.1} parent=5 // pred_fallthru
      _
    %p516 = scmp.le.s32.totalorder 1, %s25
    %p517 = scmp.lt.s32.totalorder %s25, 5
    %p518 = pnand %p516, %p517
    %p519 = pneg %p518
    // Predicated region
    $region85: #{autoencoder_forward.1} parent=5 // pred_check
      _
    $region86: #{autoencoder_forward.1} parent=5 // pred_check_branch
      %521 = sbr.rel (%p518) target = $region88
    $region87: #{autoencoder_forward.1} parent=5 // pred_region
      %s522 = ssub.s32 %s25, 1
      %s523 = smul.u32 8, %s30
      %p524 = scmp.lt.s32.totalorder %s523, 31
      %s525 = scalar_select %p524, %s523, 31
      %s526 = smul.addr %s525, 7
      %s527 = smul.addr %s526, 8
      %s528 = scalar_lea.vmem %s0, %s527
      %p529 = pneg %p51
      %p530 = pneg %p48
      %p531 = pneg %p72
      %p532 = pneg %p69
      %p533 = pneg %p93
      %p534 = pneg %p90
      %p535 = pneg %p114
      %p536 = pneg %p111
      %p537 = pneg %p135
      %p538 = pneg %p132
      %p539 = pneg %p156
      %p540 = pneg %p153
      %p541 = pneg %p177
      %p542 = pneg %p174
      %p543 = pneg %p198
      %p544 = pneg %p195
      %p545 = pneg %p219
      %p546 = pneg %p216
      %p547 = pneg %p240
      %p548 = pneg %p237
      %p549 = pneg %p261
      %p550 = pneg %p258
      %p551 = pneg %p282
      %p552 = pneg %p279
      %p553 = pneg %p303
      %p554 = pneg %p300
      %p555 = pneg %p324
      %p556 = pneg %p321
      %p557 = pneg %p345
      %p558 = pneg %p342
      %p559 = pneg %p366
      %p560 = pneg %p363
      %p561 = pneg %p387
      %p562 = pneg %p384
      %p563 = pneg %p413
      %p564 = pneg %p410
      %s565 = smul.u32 8, %s30
      %p566 = scmp.lt.s32.totalorder %s565, 31
      %s567 = scalar_select %p566, %s565, 31
      %s568 = smul.addr %s567, 8
      %s569 = scalar_lea.vmem %s17, %s568
      %p570 = pneg %p439
      %p571 = pneg %p436
      %s572 = smul.u32 8, %s30
      %p573 = scmp.lt.s32.totalorder %s572, 31
      %s574 = scalar_select %p573, %s572, 31
      %s575 = smul.addr %s574, 7
      %s576 = smul.addr %s575, 4
      %s577 = scalar_lea.vmem %s18, %s576
      %s578 = smul.u32 8, %s30
      %p579 = scmp.lt.s32.totalorder %s578, 31
      %s580 = scalar_select %p579, %s578, 31
      %s581 = smul.addr %s580, 7
      %s582 = smul.addr %s581, 8
      %s583 = scalar_lea.vmem %s0, %s582
      %s584 = smul.u32 8, %s30
      %s585 = smul.u32 8, %s30
      %p586 = scmp.lt.s32.totalorder %s585, 31
      %s587 = scalar_select %p586, %s585, 31
      %s588 = smul.addr %s587, 8
      %s589 = scalar_lea.vmem %s17, %s588
      %s590 = smul.u32 8, %s30
      %s591 = smul.u32 8, %s30
      %p592 = scmp.lt.s32.totalorder %s591, 31
      %s593 = scalar_select %p592, %s591, 31
      %s594 = smul.addr %s593, 7
      %s595 = smul.addr %s594, 4
      %s596 = scalar_lea.vmem %s18, %s595
      %s597 = smul.u32 8, %s30
      %v599 = vld [vmem:[%s583] sm:$0xff]
      %v600 = vld [vmem:[%s583 + $0x8] sm:$0xff]
      %v601 = vld [vmem:[%s583 + $0x10] sm:$0xff]
      %v602 = vld [vmem:[%s583 + $0x18] sm:$0xff]
      %v603 = vld [vmem:[%s583 + $0x20] sm:$0xff]
      %v604 = vld [vmem:[%s583 + $0x28] sm:$0xff]
      %v605 = vld [vmem:[%s583 + $0x30] sm:$0xff]
      %v606 = vld [vmem:[%s583 + $0x38] sm:$0xff]
      %v607 = vld [vmem:[%s583 + $0x40] sm:$0xff]
      %v608 = vld [vmem:[%s583 + $0x48] sm:$0xff]
      %v609 = vld [vmem:[%s583 + $0x50] sm:$0xff]
      %v610 = vld [vmem:[%s583 + $0x58] sm:$0xff]
      %v611 = vld [vmem:[%s583 + $0x60] sm:$0xff]
      %v612 = vld [vmem:[%s583 + $0x68] sm:$0xff]
      %v613 = vld [vmem:[%s583 + $0x70] sm:$0xff]
      %v614 = vld [vmem:[%s583 + $0x78] sm:$0xff]
      %v615 = vld [vmem:[%s583 + $0x80] sm:$0xff]
      %v616 = vld [vmem:[%s583 + $0x88] sm:$0xff]
      %v617 = vld [vmem:[%s583 + $0x90] sm:$0xff]
      %v618 = vld [vmem:[%s583 + $0x98] sm:$0xff]
      %v619 = vld [vmem:[%s583 + $0xa0] sm:$0xff]
      %v620 = vld [vmem:[%s583 + $0xa8] sm:$0xff]
      %v621 = vld [vmem:[%s583 + $0xb0] sm:$0xff]
      %v622 = vld [vmem:[%s583 + $0xb8] sm:$0xff]
      %v623 = vld [vmem:[%s583 + $0xc0] sm:$0xff]
      %v624 = vld [vmem:[%s583 + $0xc8] sm:$0xff]
      %v625 = vld [vmem:[%s583 + $0xd0] sm:$0xff]
      %v626 = vld [vmem:[%s583 + $0xd8] sm:$0xff]
      %v627 = vld [vmem:[%s583 + $0xe0] sm:$0xff]
      %v628 = vld [vmem:[%s583 + $0xe8] sm:$0xff]
      %v629 = vld [vmem:[%s583 + $0xf0] sm:$0xff]
      %v630 = vld [vmem:[%s583 + $0xf8] sm:$0xff]
      %v631 = vld [vmem:[%s583 + $0x100] sm:$0xff]
      %v632 = vld [vmem:[%s583 + $0x108] sm:$0xff]
      %v633 = vld [vmem:[%s583 + $0x110] sm:$0xff]
      %v634 = vld [vmem:[%s583 + $0x118] sm:$0xff]
      %v635 = vld [vmem:[%s583 + $0x120] sm:$0xff]
      %v636 = vld [vmem:[%s583 + $0x128] sm:$0xff]
      %v637 = vld [vmem:[%s583 + $0x130] sm:$0xff]
      %v638 = vld [vmem:[%s583 + $0x138] sm:$0xff]
      %v639 = vld [vmem:[%s583 + $0x140] sm:$0xff]
      %v640 = vld [vmem:[%s583 + $0x148] sm:$0xff]
      %v641 = vld [vmem:[%s583 + $0x150] sm:$0xff]
      %v642 = vld [vmem:[%s583 + $0x158] sm:$0xff]
      %v643 = vld [vmem:[%s583 + $0x160] sm:$0xff]
      %v644 = vld [vmem:[%s583 + $0x168] sm:$0xff]
      %v645 = vld [vmem:[%s583 + $0x170] sm:$0xff]
      %v646 = vld [vmem:[%s583 + $0x178] sm:$0xff]
      %v647 = vld [vmem:[%s583 + $0x180] sm:$0xff]
      %v648 = vld [vmem:[%s583 + $0x188] sm:$0xff]
      %v649 = vld [vmem:[%s583 + $0x190] sm:$0xff]
      %v650 = vld [vmem:[%s583 + $0x198] sm:$0xff]
      %v651 = vld [vmem:[%s583 + $0x1a0] sm:$0xff]
      %v652 = vld [vmem:[%s583 + $0x1a8] sm:$0xff]
      %v653 = vld [vmem:[%s583 + $0x1b0] sm:$0xff]
      %v654 = vld [vmem:[%s583 + $0x1b8] sm:$0xff]
      %v655 = vpack.c.bf16 %v606, %v599
      %v656 = vpack.c.bf16 %v607, %v600
      %v657 = vpack.c.bf16 %v608, %v601
      %v658 = vpack.c.bf16 %v609, %v602
      %v659 = vpack.c.bf16 %v610, %v603
      %v660 = vpack.c.bf16 %v611, %v604
      %v661 = vpack.c.bf16 %v612, %v605
      %v662 = vpack.c.bf16 %v620, %v613
      %v663 = vpack.c.bf16 %v621, %v614
      %v664 = vpack.c.bf16 %v622, %v615
      %v665 = vpack.c.bf16 %v623, %v616
      %v666 = vpack.c.bf16 %v624, %v617
      %v667 = vpack.c.bf16 %v625, %v618
      %v668 = vpack.c.bf16 %v626, %v619
      %v669 = vpack.c.bf16 %v634, %v627
      %v670 = vpack.c.bf16 %v635, %v628
      %v671 = vpack.c.bf16 %v636, %v629
      %v672 = vpack.c.bf16 %v637, %v630
      %v673 = vpack.c.bf16 %v638, %v631
      %v674 = vpack.c.bf16 %v639, %v632
      %v675 = vpack.c.bf16 %v640, %v633
      %v676 = vpack.c.bf16 %v648, %v641
      %v677 = vpack.c.bf16 %v649, %v642
      %v678 = vpack.c.bf16 %v650, %v643
      %v679 = vpack.c.bf16 %v651, %v644
      %v680 = vpack.c.bf16 %v652, %v645
      %v681 = vpack.c.bf16 %v653, %v646
      %v682 = vpack.c.bf16 %v654, %v647
      %v683 = vld [vmem:[%s1] sm:$0xf]
      %v684 = vld [vmem:[%s1 + $0x4] sm:$0xf]
      %v685 = vld [vmem:[%s1 + $0x8] sm:$0xf]
      %v686 = vld [vmem:[%s1 + $0xc] sm:$0xf]
      %v687 = vld [vmem:[%s1 + $0x10] sm:$0xf]
      %v688 = vld [vmem:[%s1 + $0x14] sm:$0xf]
      %v689 = vld [vmem:[%s1 + $0x18] sm:$0xf]
      %v690 = vld [vmem:[%s1 + $0x1c] sm:$0xf]
      %v691 = vld [vmem:[%s1 + $0x20] sm:$0xf]
      %v692 = vld [vmem:[%s1 + $0x24] sm:$0xf]
      %v693 = vld [vmem:[%s1 + $0x28] sm:$0xf]
      %v694 = vld [vmem:[%s1 + $0x2c] sm:$0xf]
      %v695 = vld [vmem:[%s1 + $0x30] sm:$0xf]
      %v696 = vld [vmem:[%s1 + $0x34] sm:$0xf]
      %v697 = vld [vmem:[%s1 + $0x38] sm:$0xf]
      %v698 = vld [vmem:[%s1 + $0x3c] sm:$0xf]
      %v699 = vld [vmem:[%s1 + $0x40] sm:$0xf]
      %v700 = vld [vmem:[%s1 + $0x44] sm:$0xf]
      %v701 = vld [vmem:[%s1 + $0x48] sm:$0xf]
      %v702 = vld [vmem:[%s1 + $0x4c] sm:$0xf]
      %v703 = vld [vmem:[%s1 + $0x50] sm:$0xf]
      %v704 = vld [vmem:[%s1 + $0x54] sm:$0xf]
      %v705 = vld [vmem:[%s1 + $0x58] sm:$0xf]
      %v706 = vld [vmem:[%s1 + $0x5c] sm:$0xf]
      %v707 = vld [vmem:[%s1 + $0x60] sm:$0xf]
      %v708 = vld [vmem:[%s1 + $0x64] sm:$0xf]
      %v709 = vld [vmem:[%s1 + $0x68] sm:$0xf]
      %v710 = vld [vmem:[%s1 + $0x6c] sm:$0xf]
      %v711 = vld [vmem:[%s1 + $0x70] sm:$0xf]
      %v712 = vld [vmem:[%s1 + $0x74] sm:$0xf]
      %v713 = vld [vmem:[%s1 + $0x78] sm:$0xf]
      %v714 = vld [vmem:[%s1 + $0x7c] sm:$0xf]
      %v715 = vld [vmem:[%s1 + $0x80] sm:$0xf]
      %v716 = vld [vmem:[%s1 + $0x84] sm:$0xf]
      %v717 = vld [vmem:[%s1 + $0x88] sm:$0xf]
      %v718 = vld [vmem:[%s1 + $0x8c] sm:$0xf]
      %v719 = vld [vmem:[%s1 + $0x90] sm:$0xf]
      %v720 = vld [vmem:[%s1 + $0x94] sm:$0xf]
      %v721 = vld [vmem:[%s1 + $0x98] sm:$0xf]
      %v722 = vld [vmem:[%s1 + $0x9c] sm:$0xf]
      %v723 = vld [vmem:[%s1 + $0xa0] sm:$0xf]
      %v724 = vld [vmem:[%s1 + $0xa4] sm:$0xf]
      %v725 = vld [vmem:[%s1 + $0xa8] sm:$0xf]
      %v726 = vld [vmem:[%s1 + $0xac] sm:$0xf]
      %v727 = vld [vmem:[%s1 + $0xb0] sm:$0xf]
      %v728 = vld [vmem:[%s1 + $0xb4] sm:$0xf]
      %v729 = vld [vmem:[%s1 + $0xb8] sm:$0xf]
      %v730 = vld [vmem:[%s1 + $0xbc] sm:$0xf]
      %v731 = vld [vmem:[%s1 + $0xc0] sm:$0xf]
      %v732 = vld [vmem:[%s1 + $0xc4] sm:$0xf]
      %v733 = vld [vmem:[%s1 + $0xc8] sm:$0xf]
      %v734 = vld [vmem:[%s1 + $0xcc] sm:$0xf]
      %v735 = vld [vmem:[%s1 + $0xd0] sm:$0xf]
      %v736 = vld [vmem:[%s1 + $0xd4] sm:$0xf]
      %v737 = vld [vmem:[%s1 + $0xd8] sm:$0xf]
      %v738 = vld [vmem:[%s1 + $0xdc] sm:$0xf]
      %v739 = vld [vmem:[%s1 + $0xe0] sm:$0xf]
      %v740 = vld [vmem:[%s1 + $0xe4] sm:$0xf]
      %v741 = vld [vmem:[%s1 + $0xe8] sm:$0xf]
      %v742 = vld [vmem:[%s1 + $0xec] sm:$0xf]
      %v743 = vld [vmem:[%s1 + $0xf0] sm:$0xf]
      %v744 = vld [vmem:[%s1 + $0xf4] sm:$0xf]
      %v745 = vld [vmem:[%s1 + $0xf8] sm:$0xf]
      %v746 = vld [vmem:[%s1 + $0xfc] sm:$0xf]
      %v747 = vld [vmem:[%s1 + $0x100] sm:$0xf]
      %v748 = vld [vmem:[%s1 + $0x104] sm:$0xf]
      %v749 = vld [vmem:[%s1 + $0x108] sm:$0xf]
      %v750 = vld [vmem:[%s1 + $0x10c] sm:$0xf]
      %v751 = vld [vmem:[%s1 + $0x110] sm:$0xf]
      %v752 = vld [vmem:[%s1 + $0x114] sm:$0xf]
      %v753 = vld [vmem:[%s1 + $0x118] sm:$0xf]
      %v754 = vld [vmem:[%s1 + $0x11c] sm:$0xf]
      %v755 = vld [vmem:[%s1 + $0x120] sm:$0xf]
      %v756 = vld [vmem:[%s1 + $0x124] sm:$0xf]
      %v757 = vld [vmem:[%s1 + $0x128] sm:$0xf]
      %v758 = vld [vmem:[%s1 + $0x12c] sm:$0xf]
      %v759 = vld [vmem:[%s1 + $0x130] sm:$0xf]
      %v760 = vld [vmem:[%s1 + $0x134] sm:$0xf]
      %v761 = vld [vmem:[%s1 + $0x138] sm:$0xf]
      %v762 = vld [vmem:[%s1 + $0x13c] sm:$0xf]
      %v763 = vld [vmem:[%s1 + $0x140] sm:$0xf]
      %v764 = vld [vmem:[%s1 + $0x144] sm:$0xf]
      %v765 = vld [vmem:[%s1 + $0x148] sm:$0xf]
      %v766 = vld [vmem:[%s1 + $0x14c] sm:$0xf]
      %v767 = vld [vmem:[%s1 + $0x150] sm:$0xf]
      %v768 = vld [vmem:[%s1 + $0x154] sm:$0xf]
      %v769 = vld [vmem:[%s1 + $0x158] sm:$0xf]
      %v770 = vld [vmem:[%s1 + $0x15c] sm:$0xf]
      %v771 = vld [vmem:[%s1 + $0x160] sm:$0xf]
      %v772 = vld [vmem:[%s1 + $0x164] sm:$0xf]
      %v773 = vld [vmem:[%s1 + $0x168] sm:$0xf]
      %v774 = vld [vmem:[%s1 + $0x16c] sm:$0xf]
      %v775 = vld [vmem:[%s1 + $0x170] sm:$0xf]
      %v776 = vld [vmem:[%s1 + $0x174] sm:$0xf]
      %v777 = vld [vmem:[%s1 + $0x178] sm:$0xf]
      %v778 = vld [vmem:[%s1 + $0x17c] sm:$0xf]
      %v779 = vld [vmem:[%s1 + $0x180] sm:$0xf]
      %v780 = vld [vmem:[%s1 + $0x184] sm:$0xf]
      %v781 = vld [vmem:[%s2] sm:$0x1]
      %v783 = vlaneseq
      %v784 = vshrl.u32 %v783, 7
      %v785 = vsub.s32 0, %v784
      %v786 = vrot.slane %v781, %v785
      %v886 = vunpack.c.l.b16 %v683
      %v887 = vunpack.c.l.b16 %v684
      %v888 = vunpack.c.l.b16 %v685
      %v889 = vunpack.c.l.b16 %v686
      %v890 = vunpack.c.l.b16 %v687
      %v891 = vunpack.c.l.b16 %v688
      %v892 = vunpack.c.l.b16 %v689
      %v893 = vunpack.c.l.b16 %v690
      %v894 = vunpack.c.l.b16 %v691
      %v895 = vunpack.c.l.b16 %v692
      %v896 = vunpack.c.l.b16 %v693
      %v897 = vunpack.c.l.b16 %v694
      %v898 = vunpack.c.l.b16 %v695
      %v899 = vunpack.c.l.b16 %v696
      %v900 = vunpack.c.l.b16 %v697
      %v901 = vunpack.c.l.b16 %v698
      %v902 = vunpack.c.l.b16 %v699
      %v903 = vunpack.c.l.b16 %v700
      %v904 = vunpack.c.l.b16 %v701
      %v905 = vunpack.c.l.b16 %v702
      %v906 = vunpack.c.l.b16 %v703
      %v907 = vunpack.c.l.b16 %v704
      %v908 = vunpack.c.l.b16 %v705
      %v909 = vunpack.c.l.b16 %v706
      %v910 = vunpack.c.l.b16 %v707
      %v911 = vunpack.c.l.b16 %v708
      %v912 = vunpack.c.l.b16 %v709
      %v913 = vunpack.c.l.b16 %v710
      %v914 = vunpack.c.l.b16 %v711
      %v915 = vunpack.c.l.b16 %v712
      %v916 = vunpack.c.l.b16 %v713
      %v917 = vunpack.c.l.b16 %v714
      %v918 = vunpack.c.l.b16 %v715
      %v919 = vunpack.c.l.b16 %v716
      %v920 = vunpack.c.l.b16 %v717
      %v921 = vunpack.c.l.b16 %v718
      %v922 = vunpack.c.l.b16 %v719
      %v923 = vunpack.c.l.b16 %v720
      %v924 = vunpack.c.l.b16 %v721
      %v925 = vunpack.c.l.b16 %v722
      %v926 = vunpack.c.l.b16 %v723
      %v927 = vunpack.c.l.b16 %v724
      %v928 = vunpack.c.l.b16 %v725
      %v929 = vunpack.c.l.b16 %v726
      %v930 = vunpack.c.l.b16 %v727
      %v931 = vunpack.c.l.b16 %v728
      %v932 = vunpack.c.l.b16 %v729
      %v933 = vunpack.c.l.b16 %v730
      %v934 = vunpack.c.l.b16 %v731
      %v935 = vunpack.c.l.b16 %v732
      %v936 = vunpack.c.l.b16 %v733
      %v937 = vunpack.c.l.b16 %v734
      %v938 = vunpack.c.l.b16 %v735
      %v939 = vunpack.c.l.b16 %v736
      %v940 = vunpack.c.l.b16 %v737
      %v941 = vunpack.c.l.b16 %v738
      %v942 = vunpack.c.l.b16 %v739
      %v943 = vunpack.c.l.b16 %v740
      %v944 = vunpack.c.l.b16 %v741
      %v945 = vunpack.c.l.b16 %v742
      %v946 = vunpack.c.l.b16 %v743
      %v947 = vunpack.c.l.b16 %v744
      %v948 = vunpack.c.l.b16 %v745
      %v949 = vunpack.c.l.b16 %v746
      %v950 = vunpack.c.l.b16 %v747
      %v951 = vunpack.c.l.b16 %v748
      %v952 = vunpack.c.l.b16 %v749
      %v953 = vunpack.c.l.b16 %v750
      %v954 = vunpack.c.l.b16 %v751
      %v955 = vunpack.c.l.b16 %v752
      %v956 = vunpack.c.l.b16 %v753
      %v957 = vunpack.c.l.b16 %v754
      %v958 = vunpack.c.l.b16 %v755
      %v959 = vunpack.c.l.b16 %v756
      %v960 = vunpack.c.l.b16 %v757
      %v961 = vunpack.c.l.b16 %v758
      %v962 = vunpack.c.l.b16 %v759
      %v963 = vunpack.c.l.b16 %v760
      %v964 = vunpack.c.l.b16 %v761
      %v965 = vunpack.c.l.b16 %v762
      %v966 = vunpack.c.l.b16 %v763
      %v967 = vunpack.c.l.b16 %v764
      %v968 = vunpack.c.l.b16 %v765
      %v969 = vunpack.c.l.b16 %v766
      %v970 = vunpack.c.l.b16 %v767
      %v971 = vunpack.c.l.b16 %v768
      %v972 = vunpack.c.l.b16 %v769
      %v973 = vunpack.c.l.b16 %v770
      %v974 = vunpack.c.l.b16 %v771
      %v975 = vunpack.c.l.b16 %v772
      %v976 = vunpack.c.l.b16 %v773
      %v977 = vunpack.c.l.b16 %v774
      %v978 = vunpack.c.l.b16 %v775
      %v979 = vunpack.c.l.b16 %v776
      %v980 = vunpack.c.l.b16 %v777
      %v981 = vunpack.c.l.b16 %v778
      %v982 = vunpack.c.l.b16 %v779
      %v983 = vunpack.c.l.b16 %v780
      %v984 = vpack.c.b16 %v887, %v886
      %v985 = vpack.c.b16 %v889, %v888
      %v986 = vpack.c.b16 %v891, %v890
      %v987 = vpack.c.b16 %v893, %v892
      %v988 = vpack.c.b16 %v895, %v894
      %v989 = vpack.c.b16 %v897, %v896
      %v990 = vpack.c.b16 %v899, %v898
      %v991 = vpack.c.b16 %v901, %v900
      %v992 = vpack.c.b16 %v903, %v902
      %v993 = vpack.c.b16 %v905, %v904
      %v994 = vpack.c.b16 %v907, %v906
      %v995 = vpack.c.b16 %v909, %v908
      %v996 = vpack.c.b16 %v911, %v910
      %v997 = vpack.c.b16 %v913, %v912
      %v998 = vpack.c.b16 %v915, %v914
      %v999 = vpack.c.b16 %v917, %v916
      %v1000 = vpack.c.b16 %v919, %v918
      %v1001 = vpack.c.b16 %v921, %v920
      %v1002 = vpack.c.b16 %v923, %v922
      %v1003 = vpack.c.b16 %v925, %v924
      %v1004 = vpack.c.b16 %v927, %v926
      %v1005 = vpack.c.b16 %v929, %v928
      %v1006 = vpack.c.b16 %v931, %v930
      %v1007 = vpack.c.b16 %v933, %v932
      %v1008 = vpack.c.b16 %v935, %v934
      %v1009 = vpack.c.b16 %v937, %v936
      %v1010 = vpack.c.b16 %v939, %v938
      %v1011 = vpack.c.b16 %v941, %v940
      %v1012 = vpack.c.b16 %v943, %v942
      %v1013 = vpack.c.b16 %v945, %v944
      %v1014 = vpack.c.b16 %v947, %v946
      %v1015 = vpack.c.b16 %v949, %v948
      %v1016 = vpack.c.b16 %v951, %v950
      %v1017 = vpack.c.b16 %v953, %v952
      %v1018 = vpack.c.b16 %v955, %v954
      %v1019 = vpack.c.b16 %v957, %v956
      %v1020 = vpack.c.b16 %v959, %v958
      %v1021 = vpack.c.b16 %v961, %v960
      %v1022 = vpack.c.b16 %v963, %v962
      %v1023 = vpack.c.b16 %v965, %v964
      %v1024 = vpack.c.b16 %v967, %v966
      %v1025 = vpack.c.b16 %v969, %v968
      %v1026 = vpack.c.b16 %v971, %v970
      %v1027 = vpack.c.b16 %v973, %v972
      %v1028 = vpack.c.b16 %v975, %v974
      %v1029 = vpack.c.b16 %v977, %v976
      %v1030 = vpack.c.b16 %v979, %v978
      %v1031 = vpack.c.b16 %v981, %v980
      %v1032 = vpack.c.b16 %v983, %v982
      %vm1082 = vcmask 130048
      %v1084 = vsel %vm1082, %v661, 0
      %v1087 = vsel %vm1082, %v668, 0
      %v1090 = vsel %vm1082, %v675, 0
      %v1093 = vsel %vm1082, %v682, 0
      %1095 = vmatprep.subr.bf16.mxu0 0
      %1096 = vmatpush1.bf16.msra.mxu0 %v984
      %1097 = vmatprep.subr.bf16.mxu0 0
      %1098 = vmatpush1.bf16.msra.mxu0 %v985
      %1099 = vmatprep.subr.bf16.mxu0 0
      %1100 = vmatpush1.bf16.msra.mxu0 %v986
      %1101 = vmatprep.subr.bf16.mxu0 0
      %1102 = vmatpush1.bf16.msra.mxu0 %v987
      %1103 = vmatprep.subr.bf16.mxu0 0
      %1104 = vmatpush1.bf16.msra.mxu0 %v988
      %1105 = vmatprep.subr.bf16.mxu0 0
      %1106 = vmatpush1.bf16.msra.mxu0 %v989
      %1107 = vmatprep.subr.bf16.mxu0 0
      %1108 = vmatpush1.bf16.msra.mxu0 %v990
      %1109 = vmatprep.subr.bf16.mxu0 0
      %1110 = vmatpush1.bf16.msra.mxu0 %v991
      %1111 = vmatprep.subr.bf16.mxu0 0
      %1112 = vmatpush1.bf16.msra.mxu0 %v992
      %1113 = vmatprep.subr.bf16.mxu0 0
      %1114 = vmatpush1.bf16.msra.mxu0 %v993
      %1115 = vmatprep.subr.bf16.mxu0 0
      %1116 = vmatpush1.bf16.msra.mxu0 %v994
      %1117 = vmatprep.subr.bf16.mxu0 0
      %1118 = vmatpush1.bf16.msra.mxu0 %v995
      %1119 = vmatprep.subr.bf16.mxu0 0
      %1120 = vmatpush1.bf16.msra.mxu0 %v996
      %1121 = vmatprep.subr.bf16.mxu0 0
      %1122 = vmatpush1.bf16.msra.mxu0 %v997
      %1123 = vmatprep.subr.bf16.mxu0 0
      %1124 = vmatpush1.bf16.msra.mxu0 %v998
      %1125 = vmatprep.subr.bf16.mxu0 0
      %1126 = vmatpush1.bf16.msra.mxu0 %v999
      %1127 = vmatprep.mubr.bf16.mxu0 %v656
      %1128 = vmatmul.mubr.bf16.gmra.mrb[0].mxu0 %v655
      %v1129 = vpop.f32.mrb[0].mxu0
      %v1130 = vadd.f32 %v786, %v1129
      %v1131 = vpop.f32.mrb[0].mxu0
      %v1132 = vpop.f32.mrb[0].mxu0
      %v1133 = vadd.f32 %v786, %v1132
      %v1134 = vpop.f32.mrb[0].mxu0
      %1135 = vmatprep.mubr.bf16.mxu0 %v663
      %1136 = vmatmul.mubr.bf16.gmra.mrb[0].mxu0 %v662
      %v1137 = vpop.f32.mrb[0].mxu0
      %v1138 = vadd.f32 %v786, %v1137
      %v1139 = vpop.f32.mrb[0].mxu0
      %v1140 = vpop.f32.mrb[0].mxu0
      %v1141 = vadd.f32 %v786, %v1140
      %v1142 = vpop.f32.mrb[0].mxu0
      %1143 = vmatprep.mubr.bf16.mxu0 %v670
      %1144 = vmatmul.mubr.bf16.gmra.mrb[0].mxu0 %v669
      %v1145 = vpop.f32.mrb[0].mxu0
      %v1146 = vadd.f32 %v786, %v1145
      %v1147 = vpop.f32.mrb[0].mxu0
      %v1148 = vpop.f32.mrb[0].mxu0
      %v1149 = vadd.f32 %v786, %v1148
      %v1150 = vpop.f32.mrb[0].mxu0
      %1151 = vmatprep.mubr.bf16.mxu0 %v677
      %1152 = vmatmul.mubr.bf16.gmra.mrb[0].mxu0 %v676
      %v1153 = vpop.f32.mrb[0].mxu0
      %v1154 = vadd.f32 %v786, %v1153
      %v1155 = vpop.f32.mrb[0].mxu0
      %v1156 = vpop.f32.mrb[0].mxu0
      %v1157 = vadd.f32 %v786, %v1156
      %v1158 = vpop.f32.mrb[0].mxu0
      %1159 = vdwg.mxu0
      %1160 = vmatprep.subr.bf16.mxu0 0
      %1161 = vmatpush1.bf16.msra.mxu0 %v1000
      %1162 = vmatprep.subr.bf16.mxu0 0
      %1163 = vmatpush1.bf16.msra.mxu0 %v1001
      %1164 = vmatprep.subr.bf16.mxu0 0
      %1165 = vmatpush1.bf16.msra.mxu0 %v1002
      %1166 = vmatprep.subr.bf16.mxu0 0
      %1167 = vmatpush1.bf16.msra.mxu0 %v1003
      %1168 = vmatprep.subr.bf16.mxu0 0
      %1169 = vmatpush1.bf16.msra.mxu0 %v1004
      %1170 = vmatprep.subr.bf16.mxu0 0
      %1171 = vmatpush1.bf16.msra.mxu0 %v1005
      %1172 = vmatprep.subr.bf16.mxu0 0
      %1173 = vmatpush1.bf16.msra.mxu0 %v1006
      %1174 = vmatprep.subr.bf16.mxu0 0
      %1175 = vmatpush1.bf16.msra.mxu0 %v1007
      %1176 = vmatprep.subr.bf16.mxu0 0
      %1177 = vmatpush1.bf16.msra.mxu0 %v1008
      %1178 = vmatprep.subr.bf16.mxu0 0
      %1179 = vmatpush1.bf16.msra.mxu0 %v1009
      %1180 = vmatprep.subr.bf16.mxu0 0
      %1181 = vmatpush1.bf16.msra.mxu0 %v1010
      %1182 = vmatprep.subr.bf16.mxu0 0
      %1183 = vmatpush1.bf16.msra.mxu0 %v1011
      %1184 = vmatprep.subr.bf16.mxu0 0
      %1185 = vmatpush1.bf16.msra.mxu0 %v1012
      %1186 = vmatprep.subr.bf16.mxu0 0
      %1187 = vmatpush1.bf16.msra.mxu0 %v1013
      %1188 = vmatprep.subr.bf16.mxu0 0
      %1189 = vmatpush1.bf16.msra.mxu0 %v1014
      %1190 = vmatprep.subr.bf16.mxu0 0
      %1191 = vmatpush1.bf16.msra.mxu0 %v1015
      %1192 = vmatprep.mubr.bf16.mxu0 %v658
      %1193 = vmatmul.mubr.bf16.gmra.mrb[0].mxu0 %v657
      %v1194 = vpop.f32.mrb[0].mxu0
      %v1195 = vadd.f32 %v1130, %v1194
      %v1196 = vpop.f32.mrb[0].mxu0
      %v1197 = vpop.f32.mrb[0].mxu0
      %v1198 = vadd.f32 %v1133, %v1197
      %v1199 = vpop.f32.mrb[0].mxu0
      %1200 = vmatprep.mubr.bf16.mxu0 %v665
      %1201 = vmatmul.mubr.bf16.gmra.mrb[0].mxu0 %v664
      %v1202 = vpop.f32.mrb[0].mxu0
      %v1203 = vadd.f32 %v1138, %v1202
      %v1204 = vpop.f32.mrb[0].mxu0
      %v1205 = vpop.f32.mrb[0].mxu0
      %v1206 = vadd.f32 %v1141, %v1205
      %v1207 = vpop.f32.mrb[0].mxu0
      %1208 = vmatprep.mubr.bf16.mxu0 %v672
      %1209 = vmatmul.mubr.bf16.gmra.mrb[0].mxu0 %v671
      %v1210 = vpop.f32.mrb[0].mxu0
      %v1211 = vadd.f32 %v1146, %v1210
      %v1212 = vpop.f32.mrb[0].mxu0
      %v1213 = vpop.f32.mrb[0].mxu0
      %v1214 = vadd.f32 %v1149, %v1213
      %v1215 = vpop.f32.mrb[0].mxu0
      %1216 = vmatprep.mubr.bf16.mxu0 %v679
      %1217 = vmatmul.mubr.bf16.gmra.mrb[0].mxu0 %v678
      %v1218 = vpop.f32.mrb[0].mxu0
      %v1219 = vadd.f32 %v1154, %v1218
      %v1220 = vpop.f32.mrb[0].mxu0
      %v1221 = vpop.f32.mrb[0].mxu0
      %v1222 = vadd.f32 %v1157, %v1221
      %v1223 = vpop.f32.mrb[0].mxu0
      %1224 = vdwg.mxu0
      %1225 = vmatprep.subr.bf16.mxu0 0
      %1226 = vmatpush1.bf16.msra.mxu0 %v1016
      %1227 = vmatprep.subr.bf16.mxu0 0
      %1228 = vmatpush1.bf16.msra.mxu0 %v1017
      %1229 = vmatprep.subr.bf16.mxu0 0
      %1230 = vmatpush1.bf16.msra.mxu0 %v1018
      %1231 = vmatprep.subr.bf16.mxu0 0
      %1232 = vmatpush1.bf16.msra.mxu0 %v1019
      %1233 = vmatprep.subr.bf16.mxu0 0
      %1234 = vmatpush1.bf16.msra.mxu0 %v1020
      %1235 = vmatprep.subr.bf16.mxu0 0
      %1236 = vmatpush1.bf16.msra.mxu0 %v1021
      %1237 = vmatprep.subr.bf16.mxu0 0
      %1238 = vmatpush1.bf16.msra.mxu0 %v1022
      %1239 = vmatprep.subr.bf16.mxu0 0
      %1240 = vmatpush1.bf16.msra.mxu0 %v1023
      %1241 = vmatprep.subr.bf16.mxu0 0
      %1242 = vmatpush1.bf16.msra.mxu0 %v1024
      %1243 = vmatprep.subr.bf16.mxu0 0
      %1244 = vmatpush1.bf16.msra.mxu0 %v1025
      %1245 = vmatprep.subr.bf16.mxu0 0
      %1246 = vmatpush1.bf16.msra.mxu0 %v1026
      %1247 = vmatprep.subr.bf16.mxu0 0
      %1248 = vmatpush1.bf16.msra.mxu0 %v1027
      %1249 = vmatprep.subr.bf16.mxu0 0
      %1250 = vmatpush1.bf16.msra.mxu0 %v1028
      %1251 = vmatprep.subr.bf16.mxu0 0
      %1252 = vmatpush1.bf16.msra.mxu0 %v1029
      %1253 = vmatprep.subr.bf16.mxu0 0
      %1254 = vmatpush1.bf16.msra.mxu0 %v1030
      %1255 = vmatprep.subr.bf16.mxu0 0
      %1256 = vmatpush1.bf16.msra.mxu0 %v1031
      %1257 = vmatprep.mubr.bf16.mxu0 %v660
      %1258 = vmatmul.mubr.bf16.gmra.mrb[0].mxu0 %v659
      %v1259 = vpop.f32.mrb[0].mxu0
      %v1260 = vadd.f32 %v1195, %v1259
      %v1261 = vpop.f32.mrb[0].mxu0
      %v1262 = vpop.f32.mrb[0].mxu0
      %v1263 = vadd.f32 %v1198, %v1262
      %v1264 = vpop.f32.mrb[0].mxu0
      %1265 = vmatprep.mubr.bf16.mxu0 %v667
      %1266 = vmatmul.mubr.bf16.gmra.mrb[0].mxu0 %v666
      %v1267 = vpop.f32.mrb[0].mxu0
      %v1268 = vadd.f32 %v1203, %v1267
      %v1269 = vpop.f32.mrb[0].mxu0
      %v1270 = vpop.f32.mrb[0].mxu0
      %v1271 = vadd.f32 %v1206, %v1270
      %v1272 = vpop.f32.mrb[0].mxu0
      %1273 = vmatprep.mubr.bf16.mxu0 %v674
      %1274 = vmatmul.mubr.bf16.gmra.mrb[0].mxu0 %v673
      %v1275 = vpop.f32.mrb[0].mxu0
      %v1276 = vadd.f32 %v1211, %v1275
      %v1277 = vpop.f32.mrb[0].mxu0
      %v1278 = vpop.f32.mrb[0].mxu0
      %v1279 = vadd.f32 %v1214, %v1278
      %v1280 = vpop.f32.mrb[0].mxu0
      %1281 = vmatprep.mubr.bf16.mxu0 %v681
      %1282 = vmatmul.mubr.bf16.gmra.mrb[0].mxu0 %v680
      %v1283 = vpop.f32.mrb[0].mxu0
      %v1284 = vadd.f32 %v1219, %v1283
      %v1285 = vpop.f32.mrb[0].mxu0
      %v1286 = vpop.f32.mrb[0].mxu0
      %v1287 = vadd.f32 %v1222, %v1286
      %v1288 = vpop.f32.mrb[0].mxu0
      %1289 = vdwg.mxu0
      %1290 = vmatprep.subr.bf16.mxu0 0
      %1291 = vmatpush1.bf16.msra.mxu0 %v1032
      %1292 = vmatprep.subr.bf16.mxu0 0
      %1293 = vmatpush1.bf16.msra.mxu0 0
      %1294 = vmatprep.subr.bf16.mxu0 0
      %1295 = vmatpush1.bf16.msra.mxu0 0
      %1296 = vmatprep.subr.bf16.mxu0 0
      %1297 = vmatpush1.bf16.msra.mxu0 0
      %1298 = vmatprep.subr.bf16.mxu0 0
      %1299 = vmatpush1.bf16.msra.mxu0 0
      %1300 = vmatprep.subr.bf16.mxu0 0
      %1301 = vmatpush1.bf16.msra.mxu0 0
      %1302 = vmatprep.subr.bf16.mxu0 0
      %1303 = vmatpush1.bf16.msra.mxu0 0
      %1304 = vmatprep.subr.bf16.mxu0 0
      %1305 = vmatpush1.bf16.msra.mxu0 0
      %1306 = vmatprep.subr.bf16.mxu0 0
      %1307 = vmatpush1.bf16.msra.mxu0 0
      %1308 = vmatprep.subr.bf16.mxu0 0
      %1309 = vmatpush1.bf16.msra.mxu0 0
      %1310 = vmatprep.subr.bf16.mxu0 0
      %1311 = vmatpush1.bf16.msra.mxu0 0
      %1312 = vmatprep.subr.bf16.mxu0 0
      %1313 = vmatpush1.bf16.msra.mxu0 0
      %1314 = vmatprep.subr.bf16.mxu0 0
      %1315 = vmatpush1.bf16.msra.mxu0 0
      %1316 = vmatprep.subr.bf16.mxu0 0
      %1317 = vmatpush1.bf16.msra.mxu0 0
      %1318 = vmatprep.subr.bf16.mxu0 0
      %1319 = vmatpush1.bf16.msra.mxu0 0
      %1320 = vmatprep.subr.bf16.mxu0 0
      %1321 = vmatpush1.bf16.msra.mxu0 0
      %1322 = vmatprep.mubr.bf16.mxu0 0
      %1323 = vmatmul.mubr.bf16.gmra.mrb[0].mxu0 %v1084
      %v1324 = vpop.f32.mrb[0].mxu0
      %v1325 = vadd.f32 %v1260, %v1324
      %v1326 = vpop.f32.mrb[0].mxu0
      %v1327 = vpop.f32.mrb[0].mxu0
      %v1328 = vadd.f32 %v1263, %v1327
      %v1329 = vpop.f32.mrb[0].mxu0
      %1330 = vmatprep.mubr.bf16.mxu0 0
      %1331 = vmatmul.mubr.bf16.gmra.mrb[0].mxu0 %v1087
      %v1332 = vpop.f32.mrb[0].mxu0
      %v1333 = vadd.f32 %v1268, %v1332
      %v1334 = vpop.f32.mrb[0].mxu0
      %v1335 = vpop.f32.mrb[0].mxu0
      %v1336 = vadd.f32 %v1271, %v1335
      %v1337 = vpop.f32.mrb[0].mxu0
      %1338 = vmatprep.mubr.bf16.mxu0 0
      %1339 = vmatmul.mubr.bf16.gmra.mrb[0].mxu0 %v1090
      %v1340 = vpop.f32.mrb[0].mxu0
      %v1341 = vadd.f32 %v1276, %v1340
      %v1342 = vpop.f32.mrb[0].mxu0
      %v1343 = vpop.f32.mrb[0].mxu0
      %v1344 = vadd.f32 %v1279, %v1343
      %v1345 = vpop.f32.mrb[0].mxu0
      %1346 = vmatprep.mubr.bf16.mxu0 0
      %1347 = vmatmul.mubr.bf16.gmra.mrb[0].mxu0 %v1093
      %v1348 = vpop.f32.mrb[0].mxu0
      %v1349 = vadd.f32 %v1284, %v1348
      %v1350 = vpop.f32.mrb[0].mxu0
      %v1351 = vpop.f32.mrb[0].mxu0
      %v1352 = vadd.f32 %v1287, %v1351
      %v1353 = vpop.f32.mrb[0].mxu0
      %1354 = vdwg.mxu0
      %v1355 = vtanh.pop %v1325
      %v1356 = vtanh.pop %v1328
      %v1357 = vtanh.pop %v1333
      %v1358 = vtanh.pop %v1336
      %v1359 = vtanh.pop %v1341
      %v1360 = vtanh.pop %v1344
      %v1361 = vtanh.pop %v1349
      %v1362 = vtanh.pop %v1352
      %v1363 = vpack.c.bf16 %v1356, %v1355
      %v1364 = vpack.c.bf16 %v1358, %v1357
      %v1365 = vpack.c.bf16 %v1360, %v1359
      %v1366 = vpack.c.bf16 %v1362, %v1361
      %v1367 = vld [vmem:[%s3] sm:$0xf]
      %v1368 = vld [vmem:[%s3 + $0x4] sm:$0xf]
      %v1369 = vld [vmem:[%s3 + $0x8] sm:$0xf]
      %v1370 = vld [vmem:[%s3 + $0xc] sm:$0xf]
      %v1371 = vld [vmem:[%s3 + $0x10] sm:$0xf]
      %v1372 = vld [vmem:[%s3 + $0x14] sm:$0xf]
      %v1373 = vld [vmem:[%s3 + $0x18] sm:$0xf]
      %v1374 = vld [vmem:[%s3 + $0x1c] sm:$0xf]
      %v1375 = vld [vmem:[%s3 + $0x20] sm:$0xf]
      %v1376 = vld [vmem:[%s3 + $0x24] sm:$0xf]
      %v1377 = vld [vmem:[%s3 + $0x28] sm:$0xf]
      %v1378 = vld [vmem:[%s3 + $0x2c] sm:$0xf]
      %v1379 = vld [vmem:[%s3 + $0x30] sm:$0xf]
      %v1380 = vld [vmem:[%s3 + $0x34] sm:$0xf]
      %v1381 = vld [vmem:[%s3 + $0x38] sm:$0xf]
      %v1382 = vld [vmem:[%s3 + $0x3c] sm:$0xf]
      %v1383 = vld [vmem:[%s4] sm:$0x1]
      %v1385 = vlaneseq
      %v1386 = vshrl.u32 %v1385, 7
      %v1387 = vsub.s32 0, %v1386
      %v1388 = vrot.slane %v1383, %v1387
      %v1406 = vunpack.c.l.b16 %v1367
      %v1407 = vunpack.c.l.b16 %v1368
      %v1408 = vunpack.c.l.b16 %v1369
      %v1409 = vunpack.c.l.b16 %v1370
      %v1410 = vunpack.c.l.b16 %v1371
      %v1411 = vunpack.c.l.b16 %v1372
      %v1412 = vunpack.c.l.b16 %v1373
      %v1413 = vunpack.c.l.b16 %v1374
      %v1414 = vunpack.c.l.b16 %v1375
      %v1415 = vunpack.c.l.b16 %v1376
      %v1416 = vunpack.c.l.b16 %v1377
      %v1417 = vunpack.c.l.b16 %v1378
      %v1418 = vunpack.c.l.b16 %v1379
      %v1419 = vunpack.c.l.b16 %v1380
      %v1420 = vunpack.c.l.b16 %v1381
      %v1421 = vunpack.c.l.b16 %v1382
      %v1422 = vpack.c.b16 %v1407, %v1406
      %v1423 = vpack.c.b16 %v1409, %v1408
      %v1424 = vpack.c.b16 %v1411, %v1410
      %v1425 = vpack.c.b16 %v1413, %v1412
      %v1426 = vpack.c.b16 %v1415, %v1414
      %v1427 = vpack.c.b16 %v1417, %v1416
      %v1428 = vpack.c.b16 %v1419, %v1418
      %v1429 = vpack.c.b16 %v1421, %v1420
      %1438 = vmatprep.subr.bf16.mxu0 0
      %1439 = vmatpush1.bf16.msra.mxu0 %v1422
      %1440 = vmatprep.subr.bf16.mxu0 0
      %1441 = vmatpush1.bf16.msra.mxu0 %v1423
      %1442 = vmatprep.subr.bf16.mxu0 0
      %1443 = vmatpush1.bf16.msra.mxu0 %v1424
      %1444 = vmatprep.subr.bf16.mxu0 0
      %1445 = vmatpush1.bf16.msra.mxu0 %v1425
      %1446 = vmatprep.subr.bf16.mxu0 0
      %1447 = vmatpush1.bf16.msra.mxu0 %v1426
      %1448 = vmatprep.subr.bf16.mxu0 0
      %1449 = vmatpush1.bf16.msra.mxu0 %v1427
      %1450 = vmatprep.subr.bf16.mxu0 0
      %1451 = vmatpush1.bf16.msra.mxu0 %v1428
      %1452 = vmatprep.subr.bf16.mxu0 0
      %1453 = vmatpush1.bf16.msra.mxu0 %v1429
      %1454 = vmatprep.subr.bf16.mxu0 0
      %1455 = vmatpush1.bf16.msra.mxu0 0
      %1456 = vmatprep.subr.bf16.mxu0 0
      %1457 = vmatpush1.bf16.msra.mxu0 0
      %1458 = vmatprep.subr.bf16.mxu0 0
      %1459 = vmatpush1.bf16.msra.mxu0 0
      %1460 = vmatprep.subr.bf16.mxu0 0
      %1461 = vmatpush1.bf16.msra.mxu0 0
      %1462 = vmatprep.subr.bf16.mxu0 0
      %1463 = vmatpush1.bf16.msra.mxu0 0
      %1464 = vmatprep.subr.bf16.mxu0 0
      %1465 = vmatpush1.bf16.msra.mxu0 0
      %1466 = vmatprep.subr.bf16.mxu0 0
      %1467 = vmatpush1.bf16.msra.mxu0 0
      %1468 = vmatprep.subr.bf16.mxu0 0
      %1469 = vmatpush1.bf16.msra.mxu0 0
      %1470 = vmatprep.mubr.bf16.mxu0 0
      %1471 = vmatmul.mubr.bf16.gmra.mrb[0].mxu0 %v1363
      %v1472 = vpop.f32.mrb[0].mxu0
      %v1473 = vadd.f32 %v1388, %v1472
      %v1474 = vpop.f32.mrb[0].mxu0
      %v1475 = vpop.f32.mrb[0].mxu0
      %v1476 = vadd.f32 %v1388, %v1475
      %v1477 = vpop.f32.mrb[0].mxu0
      %1478 = vmatprep.mubr.bf16.mxu0 0
      %1479 = vmatmul.mubr.bf16.gmra.mrb[0].mxu0 %v1364
      %v1480 = vpop.f32.mrb[0].mxu0
      %v1481 = vadd.f32 %v1388, %v1480
      %v1482 = vpop.f32.mrb[0].mxu0
      %v1483 = vpop.f32.mrb[0].mxu0
      %v1484 = vadd.f32 %v1388, %v1483
      %v1485 = vpop.f32.mrb[0].mxu0
      %1486 = vmatprep.mubr.bf16.mxu0 0
      %1487 = vmatmul.mubr.bf16.gmra.mrb[0].mxu0 %v1365
      %v1488 = vpop.f32.mrb[0].mxu0
      %v1489 = vadd.f32 %v1388, %v1488
      %v1490 = vpop.f32.mrb[0].mxu0
      %v1491 = vpop.f32.mrb[0].mxu0
      %v1492 = vadd.f32 %v1388, %v1491
      %v1493 = vpop.f32.mrb[0].mxu0
      %1494 = vmatprep.mubr.bf16.mxu0 0
      %1495 = vmatmul.mubr.bf16.gmra.mrb[0].mxu0 %v1366
      %v1496 = vpop.f32.mrb[0].mxu0
      %v1497 = vadd.f32 %v1388, %v1496
      %v1498 = vpop.f32.mrb[0].mxu0
      %v1499 = vpop.f32.mrb[0].mxu0
      %v1500 = vadd.f32 %v1388, %v1499
      %v1501 = vpop.f32.mrb[0].mxu0
      %1502 = vdwg.mxu0
      %v1503 = vtanh.pop %v1473
      %v1504 = vtanh.pop %v1476
      %v1505 = vtanh.pop %v1481
      %v1506 = vtanh.pop %v1484
      %v1507 = vtanh.pop %v1489
      %v1508 = vtanh.pop %v1492
      %v1509 = vtanh.pop %v1497
      %v1510 = vtanh.pop %v1500
      %v1511 = vpack.c.bf16 %v1504, %v1503
      %v1512 = vpack.c.bf16 %v1506, %v1505
      %v1513 = vpack.c.bf16 %v1508, %v1507
      %v1514 = vpack.c.bf16 %v1510, %v1509
      %v1515 = vld [vmem:[%s5] sm:$0xf]
      %v1516 = vld [vmem:[%s5 + $0x4] sm:$0xf]
      %v1517 = vld [vmem:[%s5 + $0x8] sm:$0xf]
      %v1518 = vld [vmem:[%s5 + $0xc] sm:$0xf]
      %v1519 = vld [vmem:[%s5 + $0x10] sm:$0xf]
      %v1520 = vld [vmem:[%s5 + $0x14] sm:$0xf]
      %v1521 = vld [vmem:[%s5 + $0x18] sm:$0xf]
      %v1522 = vld [vmem:[%s5 + $0x1c] sm:$0xf]
      %v1523 = vld [vmem:[%s6] sm:$0x1]
      %v1525 = vlaneseq
      %v1526 = vshrl.u32 %v1525, 7
      %v1527 = vsub.s32 0, %v1526
      %v1528 = vrot.slane %v1523, %v1527
      %v1538 = vunpack.c.l.b16 %v1515
      %v1539 = vunpack.c.l.b16 %v1516
      %v1540 = vunpack.c.l.b16 %v1517
      %v1541 = vunpack.c.l.b16 %v1518
      %v1542 = vunpack.c.l.b16 %v1519
      %v1543 = vunpack.c.l.b16 %v1520
      %v1544 = vunpack.c.l.b16 %v1521
      %v1545 = vunpack.c.l.b16 %v1522
      %v1546 = vpack.c.b16 %v1539, %v1538
      %v1547 = vpack.c.b16 %v1541, %v1540
      %v1548 = vpack.c.b16 %v1543, %v1542
      %v1549 = vpack.c.b16 %v1545, %v1544
      %vm1554 = vcmask 523264
      %v1556 = vsel %vm1554, %v1511, 0
      %v1559 = vsel %vm1554, %v1512, 0
      %v1562 = vsel %vm1554, %v1513, 0
      %v1565 = vsel %vm1554, %v1514, 0
      %1567 = vmatprep.subr.bf16.mxu0 0
      %1568 = vmatpush1.bf16.msra.mxu0 %v1546
      %1569 = vmatprep.subr.bf16.mxu0 0
      %1570 = vmatpush1.bf16.msra.mxu0 %v1547
      %1571 = vmatprep.subr.bf16.mxu0 0
      %1572 = vmatpush1.bf16.msra.mxu0 %v1548
      %1573 = vmatprep.subr.bf16.mxu0 0
      %1574 = vmatpush1.bf16.msra.mxu0 %v1549
      %1575 = vmatprep.subr.bf16.mxu0 0
      %1576 = vmatpush1.bf16.msra.mxu0 0
      %1577 = vmatprep.subr.bf16.mxu0 0
      %1578 = vmatpush1.bf16.msra.mxu0 0
      %1579 = vmatprep.subr.bf16.mxu0 0
      %1580 = vmatpush1.bf16.msra.mxu0 0
      %1581 = vmatprep.subr.bf16.mxu0 0
      %1582 = vmatpush1.bf16.msra.mxu0 0
      %1583 = vmatprep.subr.bf16.mxu0 0
      %1584 = vmatpush1.bf16.msra.mxu0 0
      %1585 = vmatprep.subr.bf16.mxu0 0
      %1586 = vmatpush1.bf16.msra.mxu0 0
      %1587 = vmatprep.subr.bf16.mxu0 0
      %1588 = vmatpush1.bf16.msra.mxu0 0
      %1589 = vmatprep.subr.bf16.mxu0 0
      %1590 = vmatpush1.bf16.msra.mxu0 0
      %1591 = vmatprep.subr.bf16.mxu0 0
      %1592 = vmatpush1.bf16.msra.mxu0 0
      %1593 = vmatprep.subr.bf16.mxu0 0
      %1594 = vmatpush1.bf16.msra.mxu0 0
      %1595 = vmatprep.subr.bf16.mxu0 0
      %1596 = vmatpush1.bf16.msra.mxu0 0
      %1597 = vmatprep.subr.bf16.mxu0 0
      %1598 = vmatpush1.bf16.msra.mxu0 0
      %1599 = vmatprep.mubr.bf16.mxu0 0
      %1600 = vmatmul.mubr.bf16.gmra.mrb[0].mxu0 %v1556
      %v1601 = vpop.f32.mrb[0].mxu0
      %v1602 = vadd.f32 %v1528, %v1601
      %v1603 = vpop.f32.mrb[0].mxu0
      %v1604 = vpop.f32.mrb[0].mxu0
      %v1605 = vadd.f32 %v1528, %v1604
      %v1606 = vpop.f32.mrb[0].mxu0
      %1607 = vmatprep.mubr.bf16.mxu0 0
      %1608 = vmatmul.mubr.bf16.gmra.mrb[0].mxu0 %v1559
      %v1609 = vpop.f32.mrb[0].mxu0
      %v1610 = vadd.f32 %v1528, %v1609
      %v1611 = vpop.f32.mrb[0].mxu0
      %v1612 = vpop.f32.mrb[0].mxu0
      %v1613 = vadd.f32 %v1528, %v1612
      %v1614 = vpop.f32.mrb[0].mxu0
      %1615 = vmatprep.mubr.bf16.mxu0 0
      %1616 = vmatmul.mubr.bf16.gmra.mrb[0].mxu0 %v1562
      %v1617 = vpop.f32.mrb[0].mxu0
      %v1618 = vadd.f32 %v1528, %v1617
      %v1619 = vpop.f32.mrb[0].mxu0
      %v1620 = vpop.f32.mrb[0].mxu0
      %v1621 = vadd.f32 %v1528, %v1620
      %v1622 = vpop.f32.mrb[0].mxu0
      %1623 = vmatprep.mubr.bf16.mxu0 0
      %1624 = vmatmul.mubr.bf16.gmra.mrb[0].mxu0 %v1565
      %v1625 = vpop.f32.mrb[0].mxu0
      %v1626 = vadd.f32 %v1528, %v1625
      %v1627 = vpop.f32.mrb[0].mxu0
      %v1628 = vpop.f32.mrb[0].mxu0
      %v1629 = vadd.f32 %v1528, %v1628
      %v1630 = vpop.f32.mrb[0].mxu0
      %1631 = vdwg.mxu0
      %v1632 = vtanh.pop %v1602
      %v1633 = vtanh.pop %v1605
      %v1634 = vtanh.pop %v1610
      %v1635 = vtanh.pop %v1613
      %v1636 = vtanh.pop %v1618
      %v1637 = vtanh.pop %v1621
      %v1638 = vtanh.pop %v1626
      %v1639 = vtanh.pop %v1629
      %v1640 = vpack.c.bf16 %v1633, %v1632
      %v1641 = vpack.c.bf16 %v1635, %v1634
      %v1642 = vpack.c.bf16 %v1637, %v1636
      %v1643 = vpack.c.bf16 %v1639, %v1638
      %v1644 = vld [vmem:[%s7] sm:$0xf]
      %v1645 = vld [vmem:[%s7 + $0x4] sm:$0x3]
      %v1646 = vld [vmem:[%s8] sm:$0x1]
      %v1648 = vlaneseq
      %v1649 = vshrl.u32 %v1648, 7
      %v1650 = vsub.s32 0, %v1649
      %v1651 = vrot.slane %v1646, %v1650
      %v1655 = vunpack.c.l.b16 %v1644
      %v1656 = vunpack.c.l.b16 %v1645
      %v1657 = vpack.c.b16 %v1656, %v1655
      %vm1658 = vcmask 97280
      %v1660 = vsel %vm1658, %v1640, 0
      %v1663 = vsel %vm1658, %v1641, 0
      %v1666 = vsel %vm1658, %v1642, 0
      %v1669 = vsel %vm1658, %v1643, 0
      %vm1671 = vcmask 1045504
      %v1673 = vsel %vm1671, %v1657, 0
      %1675 = vmatprep.subr.bf16.mxu0 0
      %1676 = vmatpush1.bf16.msra.mxu0 %v1673
      %1677 = vmatprep.subr.bf16.mxu0 0
      %1678 = vmatpush1.bf16.msra.mxu0 0
      %1679 = vmatprep.subr.bf16.mxu0 0
      %1680 = vmatpush1.bf16.msra.mxu0 0
      %1681 = vmatprep.subr.bf16.mxu0 0
      %1682 = vmatpush1.bf16.msra.mxu0 0
      %1683 = vmatprep.subr.bf16.mxu0 0
      %1684 = vmatpush1.bf16.msra.mxu0 0
      %1685 = vmatprep.subr.bf16.mxu0 0
      %1686 = vmatpush1.bf16.msra.mxu0 0
      %1687 = vmatprep.subr.bf16.mxu0 0
      %1688 = vmatpush1.bf16.msra.mxu0 0
      %1689 = vmatprep.subr.bf16.mxu0 0
      %1690 = vmatpush1.bf16.msra.mxu0 0
      %1691 = vmatprep.subr.bf16.mxu0 0
      %1692 = vmatpush1.bf16.msra.mxu0 0
      %1693 = vmatprep.subr.bf16.mxu0 0
      %1694 = vmatpush1.bf16.msra.mxu0 0
      %1695 = vmatprep.subr.bf16.mxu0 0
      %1696 = vmatpush1.bf16.msra.mxu0 0
      %1697 = vmatprep.subr.bf16.mxu0 0
      %1698 = vmatpush1.bf16.msra.mxu0 0
      %1699 = vmatprep.subr.bf16.mxu0 0
      %1700 = vmatpush1.bf16.msra.mxu0 0
      %1701 = vmatprep.subr.bf16.mxu0 0
      %1702 = vmatpush1.bf16.msra.mxu0 0
      %1703 = vmatprep.subr.bf16.mxu0 0
      %1704 = vmatpush1.bf16.msra.mxu0 0
      %1705 = vmatprep.subr.bf16.mxu0 0
      %1706 = vmatpush1.bf16.msra.mxu0 0
      %1707 = vmatprep.mubr.bf16.mxu0 0
      %1708 = vmatmul.mubr.bf16.gmra.mrb[0].mxu0 %v1660
      %v1709 = vpop.f32.mrb[0].mxu0
      %v1710 = vadd.f32 %v1651, %v1709
      %v1711 = vpop.f32.mrb[0].mxu0
      %v1712 = vpop.f32.mrb[0].mxu0
      %v1713 = vadd.f32 %v1651, %v1712
      %v1714 = vpop.f32.mrb[0].mxu0
      %1715 = vmatprep.mubr.bf16.mxu0 0
      %1716 = vmatmul.mubr.bf16.gmra.mrb[0].mxu0 %v1663
      %v1717 = vpop.f32.mrb[0].mxu0
      %v1718 = vadd.f32 %v1651, %v1717
      %v1719 = vpop.f32.mrb[0].mxu0
      %v1720 = vpop.f32.mrb[0].mxu0
      %v1721 = vadd.f32 %v1651, %v1720
      %v1722 = vpop.f32.mrb[0].mxu0
      %1723 = vmatprep.mubr.bf16.mxu0 0
      %1724 = vmatmul.mubr.bf16.gmra.mrb[0].mxu0 %v1666
      %v1725 = vpop.f32.mrb[0].mxu0
      %v1726 = vadd.f32 %v1651, %v1725
      %v1727 = vpop.f32.mrb[0].mxu0
      %v1728 = vpop.f32.mrb[0].mxu0
      %v1729 = vadd.f32 %v1651, %v1728
      %v1730 = vpop.f32.mrb[0].mxu0
      %1731 = vmatprep.mubr.bf16.mxu0 0
      %1732 = vmatmul.mubr.bf16.gmra.mrb[0].mxu0 %v1669
      %v1733 = vpop.f32.mrb[0].mxu0
      %v1734 = vadd.f32 %v1651, %v1733
      %v1735 = vpop.f32.mrb[0].mxu0
      %v1736 = vpop.f32.mrb[0].mxu0
      %v1737 = vadd.f32 %v1651, %v1736
      %v1738 = vpop.f32.mrb[0].mxu0
      %1739 = vdwg.mxu0
      %vm1740 = vcmask 23552
      %1741 = vst.msk [vmem:[%s589] sm:$0xff] %vm1740, %v1710
      %1742 = vst.msk [vmem:[%s589 + $0x8] sm:$0xff] %vm1740, %v1713
      %1743 = vst.msk [vmem:[%s589 + $0x10] sm:$0xff] %vm1740, %v1718
      %1744 = vst.msk [vmem:[%s589 + $0x18] sm:$0xff] %vm1740, %v1721
      %1745 = vst.msk [vmem:[%s589 + $0x20] sm:$0xff] %vm1740, %v1726
      %1746 = vst.msk [vmem:[%s589 + $0x28] sm:$0xff] %vm1740, %v1729
      %1747 = vst.msk [vmem:[%s589 + $0x30] sm:$0xff] %vm1740, %v1734
      %1748 = vst.msk [vmem:[%s589 + $0x38] sm:$0xff] %vm1740, %v1737
      %v1749 = vld [vmem:[%s9] sm:$0xf]
      %v1750 = vld [vmem:[%s9 + $0x4] sm:$0x3]
      %v1751 = vld [vmem:[%s10] sm:$0x1]
      %v1753 = vlaneseq
      %v1754 = vshrl.u32 %v1753, 7
      %v1755 = vsub.s32 0, %v1754
      %v1756 = vrot.slane %v1751, %v1755
      %v1760 = vunpack.c.l.b16 %v1749
      %v1761 = vunpack.c.l.b16 %v1750
      %v1762 = vpack.c.b16 %v1761, %v1760
      %v1764 = vsel %vm1671, %v1762, 0
      %1766 = vmatprep.subr.bf16.mxu0 0
      %1767 = vmatpush1.bf16.msra.mxu0 %v1764
      %1768 = vmatprep.subr.bf16.mxu0 0
      %1769 = vmatpush1.bf16.msra.mxu0 0
      %1770 = vmatprep.subr.bf16.mxu0 0
      %1771 = vmatpush1.bf16.msra.mxu0 0
      %1772 = vmatprep.subr.bf16.mxu0 0
      %1773 = vmatpush1.bf16.msra.mxu0 0
      %1774 = vmatprep.subr.bf16.mxu0 0
      %1775 = vmatpush1.bf16.msra.mxu0 0
      %1776 = vmatprep.subr.bf16.mxu0 0
      %1777 = vmatpush1.bf16.msra.mxu0 0
      %1778 = vmatprep.subr.bf16.mxu0 0
      %1779 = vmatpush1.bf16.msra.mxu0 0
      %1780 = vmatprep.subr.bf16.mxu0 0
      %1781 = vmatpush1.bf16.msra.mxu0 0
      %1782 = vmatprep.subr.bf16.mxu0 0
      %1783 = vmatpush1.bf16.msra.mxu0 0
      %1784 = vmatprep.subr.bf16.mxu0 0
      %1785 = vmatpush1.bf16.msra.mxu0 0
      %1786 = vmatprep.subr.bf16.mxu0 0
      %1787 = vmatpush1.bf16.msra.mxu0 0
      %1788 = vmatprep.subr.bf16.mxu0 0
      %1789 = vmatpush1.bf16.msra.mxu0 0
      %1790 = vmatprep.subr.bf16.mxu0 0
      %1791 = vmatpush1.bf16.msra.mxu0 0
      %1792 = vmatprep.subr.bf16.mxu0 0
      %1793 = vmatpush1.bf16.msra.mxu0 0
      %1794 = vmatprep.subr.bf16.mxu0 0
      %1795 = vmatpush1.bf16.msra.mxu0 0
      %1796 = vmatprep.subr.bf16.mxu0 0
      %1797 = vmatpush1.bf16.msra.mxu0 0
      %1798 = vmatprep.mubr.bf16.mxu0 0
      %1799 = vmatmul.mubr.bf16.gmra.mrb[0].mxu0 %v1660
      %v1800 = vpop.f32.mrb[0].mxu0
      %v1801 = vadd.f32 %v1756, %v1800
      %v1802 = vpop.f32.mrb[0].mxu0
      %v1803 = vpop.f32.mrb[0].mxu0
      %v1804 = vadd.f32 %v1756, %v1803
      %v1805 = vpop.f32.mrb[0].mxu0
      %1806 = vmatprep.mubr.bf16.mxu0 0
      %1807 = vmatmul.mubr.bf16.gmra.mrb[0].mxu0 %v1663
      %v1808 = vpop.f32.mrb[0].mxu0
      %v1809 = vadd.f32 %v1756, %v1808
      %v1810 = vpop.f32.mrb[0].mxu0
      %v1811 = vpop.f32.mrb[0].mxu0
      %v1812 = vadd.f32 %v1756, %v1811
      %v1813 = vpop.f32.mrb[0].mxu0
      %1814 = vmatprep.mubr.bf16.mxu0 0
      %1815 = vmatmul.mubr.bf16.gmra.mrb[0].mxu0 %v1666
      %v1816 = vpop.f32.mrb[0].mxu0
      %v1817 = vadd.f32 %v1756, %v1816
      %v1818 = vpop.f32.mrb[0].mxu0
      %v1819 = vpop.f32.mrb[0].mxu0
      %v1820 = vadd.f32 %v1756, %v1819
      %v1821 = vpop.f32.mrb[0].mxu0
      %1822 = vmatprep.mubr.bf16.mxu0 0
      %1823 = vmatmul.mubr.bf16.gmra.mrb[0].mxu0 %v1669
      %v1824 = vpop.f32.mrb[0].mxu0
      %v1825 = vadd.f32 %v1756, %v1824
      %v1826 = vpop.f32.mrb[0].mxu0
      %v1827 = vpop.f32.mrb[0].mxu0
      %v1828 = vadd.f32 %v1756, %v1827
      %v1829 = vpop.f32.mrb[0].mxu0
      %1830 = vdwg.mxu0
      %v1831 = vtanh.pop %v1801
      %v1832 = vtanh.pop %v1804
      %v1833 = vtanh.pop %v1809
      %v1834 = vtanh.pop %v1812
      %v1835 = vtanh.pop %v1817
      %v1836 = vtanh.pop %v1820
      %v1837 = vtanh.pop %v1825
      %v1838 = vtanh.pop %v1828
      %v1839 = vpack.c.bf16 %v1832, %v1831
      %v1840 = vpack.c.bf16 %v1834, %v1833
      %v1841 = vpack.c.bf16 %v1836, %v1835
      %v1842 = vpack.c.bf16 %v1838, %v1837
      %v1843 = vld [vmem:[%s11] sm:$0xf]
      %v1844 = vld [vmem:[%s11 + $0x4] sm:$0x3]
      %v1845 = vld [vmem:[%s12] sm:$0x1]
      %v1847 = vlaneseq
      %v1848 = vshrl.u32 %v1847, 7
      %v1849 = vsub.s32 0, %v1848
      %v1850 = vrot.slane %v1845, %v1849
      %v1854 = vunpack.c.l.b16 %v1843
      %v1855 = vunpack.c.l.b16 %v1844
      %v1856 = vpack.c.b16 %v1855, %v1854
      %v1858 = vsel %vm1658, %v1839, 0
      %v1861 = vsel %vm1658, %v1840, 0
      %v1864 = vsel %vm1658, %v1841, 0
      %v1867 = vsel %vm1658, %v1842, 0
      %v1870 = vsel %vm1671, %v1856, 0
      %1872 = vmatprep.subr.bf16.mxu0 0
      %1873 = vmatpush1.bf16.msra.mxu0 %v1870
      %1874 = vmatprep.subr.bf16.mxu0 0
      %1875 = vmatpush1.bf16.msra.mxu0 0
      %1876 = vmatprep.subr.bf16.mxu0 0
      %1877 = vmatpush1.bf16.msra.mxu0 0
      %1878 = vmatprep.subr.bf16.mxu0 0
      %1879 = vmatpush1.bf16.msra.mxu0 0
      %1880 = vmatprep.subr.bf16.mxu0 0
      %1881 = vmatpush1.bf16.msra.mxu0 0
      %1882 = vmatprep.subr.bf16.mxu0 0
      %1883 = vmatpush1.bf16.msra.mxu0 0
      %1884 = vmatprep.subr.bf16.mxu0 0
      %1885 = vmatpush1.bf16.msra.mxu0 0
      %1886 = vmatprep.subr.bf16.mxu0 0
      %1887 = vmatpush1.bf16.msra.mxu0 0
      %1888 = vmatprep.subr.bf16.mxu0 0
      %1889 = vmatpush1.bf16.msra.mxu0 0
      %1890 = vmatprep.subr.bf16.mxu0 0
      %1891 = vmatpush1.bf16.msra.mxu0 0
      %1892 = vmatprep.subr.bf16.mxu0 0
      %1893 = vmatpush1.bf16.msra.mxu0 0
      %1894 = vmatprep.subr.bf16.mxu0 0
      %1895 = vmatpush1.bf16.msra.mxu0 0
      %1896 = vmatprep.subr.bf16.mxu0 0
      %1897 = vmatpush1.bf16.msra.mxu0 0
      %1898 = vmatprep.subr.bf16.mxu0 0
      %1899 = vmatpush1.bf16.msra.mxu0 0
      %1900 = vmatprep.subr.bf16.mxu0 0
      %1901 = vmatpush1.bf16.msra.mxu0 0
      %1902 = vmatprep.subr.bf16.mxu0 0
      %1903 = vmatpush1.bf16.msra.mxu0 0
      %1904 = vmatprep.mubr.bf16.mxu0 0
      %1905 = vmatmul.mubr.bf16.gmra.mrb[0].mxu0 %v1858
      %v1906 = vpop.f32.mrb[0].mxu0
      %v1907 = vadd.f32 %v1850, %v1906
      %v1908 = vpop.f32.mrb[0].mxu0
      %v1909 = vpop.f32.mrb[0].mxu0
      %v1910 = vadd.f32 %v1850, %v1909
      %v1911 = vpop.f32.mrb[0].mxu0
      %1912 = vmatprep.mubr.bf16.mxu0 0
      %1913 = vmatmul.mubr.bf16.gmra.mrb[0].mxu0 %v1861
      %v1914 = vpop.f32.mrb[0].mxu0
      %v1915 = vadd.f32 %v1850, %v1914
      %v1916 = vpop.f32.mrb[0].mxu0
      %v1917 = vpop.f32.mrb[0].mxu0
      %v1918 = vadd.f32 %v1850, %v1917
      %v1919 = vpop.f32.mrb[0].mxu0
      %1920 = vmatprep.mubr.bf16.mxu0 0
      %1921 = vmatmul.mubr.bf16.gmra.mrb[0].mxu0 %v1864
      %v1922 = vpop.f32.mrb[0].mxu0
      %v1923 = vadd.f32 %v1850, %v1922
      %v1924 = vpop.f32.mrb[0].mxu0
      %v1925 = vpop.f32.mrb[0].mxu0
      %v1926 = vadd.f32 %v1850, %v1925
      %v1927 = vpop.f32.mrb[0].mxu0
      %1928 = vmatprep.mubr.bf16.mxu0 0
      %1929 = vmatmul.mubr.bf16.gmra.mrb[0].mxu0 %v1867
      %v1930 = vpop.f32.mrb[0].mxu0
      %v1931 = vadd.f32 %v1850, %v1930
      %v1932 = vpop.f32.mrb[0].mxu0
      %v1933 = vpop.f32.mrb[0].mxu0
      %v1934 = vadd.f32 %v1850, %v1933
      %v1935 = vpop.f32.mrb[0].mxu0
      %1936 = vdwg.mxu0
      %v1937 = vtanh.pop %v1907
      %v1938 = vtanh.pop %v1910
      %v1939 = vtanh.pop %v1915
      %v1940 = vtanh.pop %v1918
      %v1941 = vtanh.pop %v1923
      %v1942 = vtanh.pop %v1926
      %v1943 = vtanh.pop %v1931
      %v1944 = vtanh.pop %v1934
      %v1945 = vpack.c.bf16 %v1938, %v1937
      %v1946 = vpack.c.bf16 %v1940, %v1939
      %v1947 = vpack.c.bf16 %v1942, %v1941
      %v1948 = vpack.c.bf16 %v1944, %v1943
      %v1949 = vld [vmem:[%s13] sm:$0xf]
      %v1950 = vld [vmem:[%s13 + $0x4] sm:$0xf]
      %v1951 = vld [vmem:[%s13 + $0x8] sm:$0xf]
      %v1952 = vld [vmem:[%s13 + $0xc] sm:$0xf]
      %v1953 = vld [vmem:[%s13 + $0x10] sm:$0xf]
      %v1954 = vld [vmem:[%s13 + $0x14] sm:$0xf]
      %v1955 = vld [vmem:[%s13 + $0x18] sm:$0xf]
      %v1956 = vld [vmem:[%s13 + $0x1c] sm:$0xf]
      %v1957 = vld [vmem:[%s14] sm:$0x1]
      %v1959 = vlaneseq
      %v1960 = vshrl.u32 %v1959, 7
      %v1961 = vsub.s32 0, %v1960
      %v1962 = vrot.slane %v1957, %v1961
      %v1972 = vunpack.c.l.b16 %v1949
      %v1973 = vunpack.c.l.b16 %v1950
      %v1974 = vunpack.c.l.b16 %v1951
      %v1975 = vunpack.c.l.b16 %v1952
      %v1976 = vunpack.c.l.b16 %v1953
      %v1977 = vunpack.c.l.b16 %v1954
      %v1978 = vunpack.c.l.b16 %v1955
      %v1979 = vunpack.c.l.b16 %v1956
      %v1980 = vpack.c.b16 %v1973, %v1972
      %v1981 = vpack.c.b16 %v1975, %v1974
      %v1982 = vpack.c.b16 %v1977, %v1976
      %v1983 = vpack.c.b16 %v1979, %v1978
      %v1989 = vsel %vm1554, %v1945, 0
      %v1992 = vsel %vm1554, %v1946, 0
      %v1995 = vsel %vm1554, %v1947, 0
      %v1998 = vsel %vm1554, %v1948, 0
      %2000 = vmatprep.subr.bf16.mxu0 0
      %2001 = vmatpush1.bf16.msra.mxu0 %v1980
      %2002 = vmatprep.subr.bf16.mxu0 0
      %2003 = vmatpush1.bf16.msra.mxu0 %v1981
      %2004 = vmatprep.subr.bf16.mxu0 0
      %2005 = vmatpush1.bf16.msra.mxu0 %v1982
      %2006 = vmatprep.subr.bf16.mxu0 0
      %2007 = vmatpush1.bf16.msra.mxu0 %v1983
      %2008 = vmatprep.subr.bf16.mxu0 0
      %2009 = vmatpush1.bf16.msra.mxu0 0
      %2010 = vmatprep.subr.bf16.mxu0 0
      %2011 = vmatpush1.bf16.msra.mxu0 0
      %2012 = vmatprep.subr.bf16.mxu0 0
      %2013 = vmatpush1.bf16.msra.mxu0 0
      %2014 = vmatprep.subr.bf16.mxu0 0
      %2015 = vmatpush1.bf16.msra.mxu0 0
      %2016 = vmatprep.subr.bf16.mxu0 0
      %2017 = vmatpush1.bf16.msra.mxu0 0
      %2018 = vmatprep.subr.bf16.mxu0 0
      %2019 = vmatpush1.bf16.msra.mxu0 0
      %2020 = vmatprep.subr.bf16.mxu0 0
      %2021 = vmatpush1.bf16.msra.mxu0 0
      %2022 = vmatprep.subr.bf16.mxu0 0
      %2023 = vmatpush1.bf16.msra.mxu0 0
      %2024 = vmatprep.subr.bf16.mxu0 0
      %2025 = vmatpush1.bf16.msra.mxu0 0
      %2026 = vmatprep.subr.bf16.mxu0 0
      %2027 = vmatpush1.bf16.msra.mxu0 0
      %2028 = vmatprep.subr.bf16.mxu0 0
      %2029 = vmatpush1.bf16.msra.mxu0 0
      %2030 = vmatprep.subr.bf16.mxu0 0
      %2031 = vmatpush1.bf16.msra.mxu0 0
      %2032 = vmatprep.mubr.bf16.mxu0 0
      %2033 = vmatmul.mubr.bf16.gmra.mrb[0].mxu0 %v1989
      %v2034 = vpop.f32.mrb[0].mxu0
      %v2035 = vadd.f32 %v1962, %v2034
      %v2036 = vpop.f32.mrb[0].mxu0
      %v2037 = vpop.f32.mrb[0].mxu0
      %v2038 = vadd.f32 %v1962, %v2037
      %v2039 = vpop.f32.mrb[0].mxu0
      %2040 = vmatprep.mubr.bf16.mxu0 0
      %2041 = vmatmul.mubr.bf16.gmra.mrb[0].mxu0 %v1992
      %v2042 = vpop.f32.mrb[0].mxu0
      %v2043 = vadd.f32 %v1962, %v2042
      %v2044 = vpop.f32.mrb[0].mxu0
      %v2045 = vpop.f32.mrb[0].mxu0
      %v2046 = vadd.f32 %v1962, %v2045
      %v2047 = vpop.f32.mrb[0].mxu0
      %2048 = vmatprep.mubr.bf16.mxu0 0
      %2049 = vmatmul.mubr.bf16.gmra.mrb[0].mxu0 %v1995
      %v2050 = vpop.f32.mrb[0].mxu0
      %v2051 = vadd.f32 %v1962, %v2050
      %v2052 = vpop.f32.mrb[0].mxu0
      %v2053 = vpop.f32.mrb[0].mxu0
      %v2054 = vadd.f32 %v1962, %v2053
      %v2055 = vpop.f32.mrb[0].mxu0
      %2056 = vmatprep.mubr.bf16.mxu0 0
      %2057 = vmatmul.mubr.bf16.gmra.mrb[0].mxu0 %v1998
      %v2058 = vpop.f32.mrb[0].mxu0
      %v2059 = vadd.f32 %v1962, %v2058
      %v2060 = vpop.f32.mrb[0].mxu0
      %v2061 = vpop.f32.mrb[0].mxu0
      %v2062 = vadd.f32 %v1962, %v2061
      %v2063 = vpop.f32.mrb[0].mxu0
      %2064 = vdwg.mxu0
      %v2065 = vtanh.pop %v2035
      %v2066 = vtanh.pop %v2038
      %v2067 = vtanh.pop %v2043
      %v2068 = vtanh.pop %v2046
      %v2069 = vtanh.pop %v2051
      %v2070 = vtanh.pop %v2054
      %v2071 = vtanh.pop %v2059
      %v2072 = vtanh.pop %v2062
      %v2073 = vpack.c.bf16 %v2066, %v2065
      %v2074 = vpack.c.bf16 %v2068, %v2067
      %v2075 = vpack.c.bf16 %v2070, %v2069
      %v2076 = vpack.c.bf16 %v2072, %v2071
      %v2077 = vld [vmem:[%s15] sm:$0xff]
      %v2078 = vld [vmem:[%s15 + $0x8] sm:$0xff]
      %v2079 = vld [vmem:[%s15 + $0x10] sm:$0xff]
      %v2080 = vld [vmem:[%s15 + $0x18] sm:$0xf]
      %v2081 = vld [vmem:[%s15 + $0x1c] sm:$0xff]
      %v2082 = vld [vmem:[%s15 + $0x24] sm:$0xff]
      %v2083 = vld [vmem:[%s15 + $0x2c] sm:$0xff]
      %v2084 = vld [vmem:[%s15 + $0x34] sm:$0xf]
      %v2085 = vld [vmem:[%s15 + $0x38] sm:$0xff]
      %v2086 = vld [vmem:[%s15 + $0x40] sm:$0xff]
      %v2087 = vld [vmem:[%s15 + $0x48] sm:$0xff]
      %v2088 = vld [vmem:[%s15 + $0x50] sm:$0xf]
      %v2089 = vld [vmem:[%s15 + $0x54] sm:$0xff]
      %v2090 = vld [vmem:[%s15 + $0x5c] sm:$0xff]
      %v2091 = vld [vmem:[%s15 + $0x64] sm:$0xff]
      %v2092 = vld [vmem:[%s15 + $0x6c] sm:$0xf]
      %v2093 = vld [vmem:[%s15 + $0x70] sm:$0xff]
      %v2094 = vld [vmem:[%s15 + $0x78] sm:$0xff]
      %v2095 = vld [vmem:[%s15 + $0x80] sm:$0xff]
      %v2096 = vld [vmem:[%s15 + $0x88] sm:$0xf]
      %v2097 = vld [vmem:[%s15 + $0x8c] sm:$0xff]
      %v2098 = vld [vmem:[%s15 + $0x94] sm:$0xff]
      %v2099 = vld [vmem:[%s15 + $0x9c] sm:$0xff]
      %v2100 = vld [vmem:[%s15 + $0xa4] sm:$0xf]
      %v2101 = vld [vmem:[%s15 + $0xa8] sm:$0xff]
      %v2102 = vld [vmem:[%s15 + $0xb0] sm:$0xff]
      %v2103 = vld [vmem:[%s15 + $0xb8] sm:$0xff]
      %v2104 = vld [vmem:[%s15 + $0xc0] sm:$0xf]
      %v2105 = vld [vmem:[%s15 + $0xc4] sm:$0xff]
      %v2106 = vld [vmem:[%s15 + $0xcc] sm:$0xff]
      %v2107 = vld [vmem:[%s15 + $0xd4] sm:$0xff]
      %v2108 = vld [vmem:[%s15 + $0xdc] sm:$0xf]
      %v2109 = vld [vmem:[%s15 + $0xe0] sm:$0xff]
      %v2110 = vld [vmem:[%s15 + $0xe8] sm:$0xff]
      %v2111 = vld [vmem:[%s15 + $0xf0] sm:$0xff]
      %v2112 = vld [vmem:[%s15 + $0xf8] sm:$0xf]
      %v2113 = vld [vmem:[%s15 + $0xfc] sm:$0xff]
      %v2114 = vld [vmem:[%s15 + $0x104] sm:$0xff]
      %v2115 = vld [vmem:[%s15 + $0x10c] sm:$0xff]
      %v2116 = vld [vmem:[%s15 + $0x114] sm:$0xf]
      %v2117 = vld [vmem:[%s15 + $0x118] sm:$0xff]
      %v2118 = vld [vmem:[%s15 + $0x120] sm:$0xff]
      %v2119 = vld [vmem:[%s15 + $0x128] sm:$0xff]
      %v2120 = vld [vmem:[%s15 + $0x130] sm:$0xf]
      %v2121 = vld [vmem:[%s15 + $0x134] sm:$0xff]
      %v2122 = vld [vmem:[%s15 + $0x13c] sm:$0xff]
      %v2123 = vld [vmem:[%s15 + $0x144] sm:$0xff]
      %v2124 = vld [vmem:[%s15 + $0x14c] sm:$0xf]
      %v2125 = vld [vmem:[%s15 + $0x150] sm:$0xff]
      %v2126 = vld [vmem:[%s15 + $0x158] sm:$0xff]
      %v2127 = vld [vmem:[%s15 + $0x160] sm:$0xff]
      %v2128 = vld [vmem:[%s15 + $0x168] sm:$0xf]
      %v2129 = vld [vmem:[%s15 + $0x16c] sm:$0xff]
      %v2130 = vld [vmem:[%s15 + $0x174] sm:$0xff]
      %v2131 = vld [vmem:[%s15 + $0x17c] sm:$0xff]
      %v2132 = vld [vmem:[%s15 + $0x184] sm:$0xf]
      %v2133 = vld [vmem:[%s15 + $0x188] sm:$0xff]
      %v2134 = vld [vmem:[%s15 + $0x190] sm:$0xff]
      %v2135 = vld [vmem:[%s15 + $0x198] sm:$0xff]
      %v2136 = vld [vmem:[%s15 + $0x1a0] sm:$0xf]
      %v2137 = vld [vmem:[%s15 + $0x1a4] sm:$0xff]
      %v2138 = vld [vmem:[%s15 + $0x1ac] sm:$0xff]
      %v2139 = vld [vmem:[%s15 + $0x1b4] sm:$0xff]
      %v2140 = vld [vmem:[%s15 + $0x1bc] sm:$0xf]
      %v2141 = vld [vmem:[%s16] sm:$0x7f]
      %v2143 = vlaneseq
      %v2144 = vshrl.u32 %v2143, 7
      %v2145 = vsub.s32 0, %v2144
      %v2146 = vrot.slane %v2141, %v2145
      %v2147 = vlaneseq
      %v2148 = vshrl.u32 %v2147, 7
      %v2149 = vsub.s32 1, %v2148
      %v2150 = vrot.slane %v2141, %v2149
      %v2151 = vlaneseq
      %v2152 = vshrl.u32 %v2151, 7
      %v2153 = vsub.s32 2, %v2152
      %v2154 = vrot.slane %v2141, %v2153
      %v2155 = vlaneseq
      %v2156 = vshrl.u32 %v2155, 7
      %v2157 = vsub.s32 3, %v2156
      %v2158 = vrot.slane %v2141, %v2157
      %v2159 = vlaneseq
      %v2160 = vshrl.u32 %v2159, 7
      %v2161 = vsub.s32 4, %v2160
      %v2162 = vrot.slane %v2141, %v2161
      %v2163 = vlaneseq
      %v2164 = vshrl.u32 %v2163, 7
      %v2165 = vsub.s32 5, %v2164
      %v2166 = vrot.slane %v2141, %v2165
      %v2167 = vlaneseq
      %v2168 = vshrl.u32 %v2167, 7
      %v2169 = vsub.s32 6, %v2168
      %v2170 = vrot.slane %v2141, %v2169
      %v2242 = vunpack.c.l.b16 %v2077
      %v2243 = vunpack.c.h.b16 %v2077
      %v2244 = vunpack.c.l.b16 %v2078
      %v2245 = vunpack.c.h.b16 %v2078
      %v2246 = vunpack.c.l.b16 %v2079
      %v2247 = vunpack.c.h.b16 %v2079
      %v2248 = vunpack.c.l.b16 %v2080
      %v2249 = vunpack.c.l.b16 %v2081
      %v2250 = vunpack.c.h.b16 %v2081
      %v2251 = vunpack.c.l.b16 %v2082
      %v2252 = vunpack.c.h.b16 %v2082
      %v2253 = vunpack.c.l.b16 %v2083
      %v2254 = vunpack.c.h.b16 %v2083
      %v2255 = vunpack.c.l.b16 %v2084
      %v2256 = vunpack.c.l.b16 %v2085
      %v2257 = vunpack.c.h.b16 %v2085
      %v2258 = vunpack.c.l.b16 %v2086
      %v2259 = vunpack.c.h.b16 %v2086
      %v2260 = vunpack.c.l.b16 %v2087
      %v2261 = vunpack.c.h.b16 %v2087
      %v2262 = vunpack.c.l.b16 %v2088
      %v2263 = vunpack.c.l.b16 %v2089
      %v2264 = vunpack.c.h.b16 %v2089
      %v2265 = vunpack.c.l.b16 %v2090
      %v2266 = vunpack.c.h.b16 %v2090
      %v2267 = vunpack.c.l.b16 %v2091
      %v2268 = vunpack.c.h.b16 %v2091
      %v2269 = vunpack.c.l.b16 %v2092
      %v2270 = vunpack.c.l.b16 %v2093
      %v2271 = vunpack.c.h.b16 %v2093
      %v2272 = vunpack.c.l.b16 %v2094
      %v2273 = vunpack.c.h.b16 %v2094
      %v2274 = vunpack.c.l.b16 %v2095
      %v2275 = vunpack.c.h.b16 %v2095
      %v2276 = vunpack.c.l.b16 %v2096
      %v2277 = vunpack.c.l.b16 %v2097
      %v2278 = vunpack.c.h.b16 %v2097
      %v2279 = vunpack.c.l.b16 %v2098
      %v2280 = vunpack.c.h.b16 %v2098
      %v2281 = vunpack.c.l.b16 %v2099
      %v2282 = vunpack.c.h.b16 %v2099
      %v2283 = vunpack.c.l.b16 %v2100
      %v2284 = vunpack.c.l.b16 %v2101
      %v2285 = vunpack.c.h.b16 %v2101
      %v2286 = vunpack.c.l.b16 %v2102
      %v2287 = vunpack.c.h.b16 %v2102
      %v2288 = vunpack.c.l.b16 %v2103
      %v2289 = vunpack.c.h.b16 %v2103
      %v2290 = vunpack.c.l.b16 %v2104
      %v2291 = vunpack.c.l.b16 %v2105
      %v2292 = vunpack.c.h.b16 %v2105
      %v2293 = vunpack.c.l.b16 %v2106
      %v2294 = vunpack.c.h.b16 %v2106
      %v2295 = vunpack.c.l.b16 %v2107
      %v2296 = vunpack.c.h.b16 %v2107
      %v2297 = vunpack.c.l.b16 %v2108
      %v2298 = vunpack.c.l.b16 %v2109
      %v2299 = vunpack.c.h.b16 %v2109
      %v2300 = vunpack.c.l.b16 %v2110
      %v2301 = vunpack.c.h.b16 %v2110
      %v2302 = vunpack.c.l.b16 %v2111
      %v2303 = vunpack.c.h.b16 %v2111
      %v2304 = vunpack.c.l.b16 %v2112
      %v2305 = vunpack.c.l.b16 %v2113
      %v2306 = vunpack.c.h.b16 %v2113
      %v2307 = vunpack.c.l.b16 %v2114
      %v2308 = vunpack.c.h.b16 %v2114
      %v2309 = vunpack.c.l.b16 %v2115
      %v2310 = vunpack.c.h.b16 %v2115
      %v2311 = vunpack.c.l.b16 %v2116
      %v2312 = vunpack.c.l.b16 %v2117
      %v2313 = vunpack.c.h.b16 %v2117
      %v2314 = vunpack.c.l.b16 %v2118
      %v2315 = vunpack.c.h.b16 %v2118
      %v2316 = vunpack.c.l.b16 %v2119
      %v2317 = vunpack.c.h.b16 %v2119
      %v2318 = vunpack.c.l.b16 %v2120
      %v2319 = vunpack.c.l.b16 %v2121
      %v2320 = vunpack.c.h.b16 %v2121
      %v2321 = vunpack.c.l.b16 %v2122
      %v2322 = vunpack.c.h.b16 %v2122
      %v2323 = vunpack.c.l.b16 %v2123
      %v2324 = vunpack.c.h.b16 %v2123
      %v2325 = vunpack.c.l.b16 %v2124
      %v2326 = vunpack.c.l.b16 %v2125
      %v2327 = vunpack.c.h.b16 %v2125
      %v2328 = vunpack.c.l.b16 %v2126
      %v2329 = vunpack.c.h.b16 %v2126
      %v2330 = vunpack.c.l.b16 %v2127
      %v2331 = vunpack.c.h.b16 %v2127
      %v2332 = vunpack.c.l.b16 %v2128
      %v2333 = vunpack.c.l.b16 %v2129
      %v2334 = vunpack.c.h.b16 %v2129
      %v2335 = vunpack.c.l.b16 %v2130
      %v2336 = vunpack.c.h.b16 %v2130
      %v2337 = vunpack.c.l.b16 %v2131
      %v2338 = vunpack.c.h.b16 %v2131
      %v2339 = vunpack.c.l.b16 %v2132
      %v2340 = vunpack.c.l.b16 %v2133
      %v2341 = vunpack.c.h.b16 %v2133
      %v2342 = vunpack.c.l.b16 %v2134
      %v2343 = vunpack.c.h.b16 %v2134
      %v2344 = vunpack.c.l.b16 %v2135
      %v2345 = vunpack.c.h.b16 %v2135
      %v2346 = vunpack.c.l.b16 %v2136
      %v2347 = vunpack.c.l.b16 %v2137
      %v2348 = vunpack.c.h.b16 %v2137
      %v2349 = vunpack.c.l.b16 %v2138
      %v2350 = vunpack.c.h.b16 %v2138
      %v2351 = vunpack.c.l.b16 %v2139
      %v2352 = vunpack.c.h.b16 %v2139
      %v2353 = vunpack.c.l.b16 %v2140
      %v2354 = vpack.c.b16 %v2249, %v2242
      %v2355 = vpack.c.b16 %v2250, %v2243
      %v2356 = vpack.c.b16 %v2251, %v2244
      %v2357 = vpack.c.b16 %v2252, %v2245
      %v2358 = vpack.c.b16 %v2253, %v2246
      %v2359 = vpack.c.b16 %v2254, %v2247
      %v2360 = vpack.c.b16 %v2255, %v2248
      %v2361 = vpack.c.b16 %v2263, %v2256
      %v2362 = vpack.c.b16 %v2264, %v2257
      %v2363 = vpack.c.b16 %v2265, %v2258
      %v2364 = vpack.c.b16 %v2266, %v2259
      %v2365 = vpack.c.b16 %v2267, %v2260
      %v2366 = vpack.c.b16 %v2268, %v2261
      %v2367 = vpack.c.b16 %v2269, %v2262
      %v2368 = vpack.c.b16 %v2277, %v2270
      %v2369 = vpack.c.b16 %v2278, %v2271
      %v2370 = vpack.c.b16 %v2279, %v2272
      %v2371 = vpack.c.b16 %v2280, %v2273
      %v2372 = vpack.c.b16 %v2281, %v2274
      %v2373 = vpack.c.b16 %v2282, %v2275
      %v2374 = vpack.c.b16 %v2283, %v2276
      %v2375 = vpack.c.b16 %v2291, %v2284
      %v2376 = vpack.c.b16 %v2292, %v2285
      %v2377 = vpack.c.b16 %v2293, %v2286
      %v2378 = vpack.c.b16 %v2294, %v2287
      %v2379 = vpack.c.b16 %v2295, %v2288
      %v2380 = vpack.c.b16 %v2296, %v2289
      %v2381 = vpack.c.b16 %v2297, %v2290
      %v2382 = vpack.c.b16 %v2305, %v2298
      %v2383 = vpack.c.b16 %v2306, %v2299
      %v2384 = vpack.c.b16 %v2307, %v2300
      %v2385 = vpack.c.b16 %v2308, %v2301
      %v2386 = vpack.c.b16 %v2309, %v2302
      %v2387 = vpack.c.b16 %v2310, %v2303
      %v2388 = vpack.c.b16 %v2311, %v2304
      %v2389 = vpack.c.b16 %v2319, %v2312
      %v2390 = vpack.c.b16 %v2320, %v2313
      %v2391 = vpack.c.b16 %v2321, %v2314
      %v2392 = vpack.c.b16 %v2322, %v2315
      %v2393 = vpack.c.b16 %v2323, %v2316
      %v2394 = vpack.c.b16 %v2324, %v2317
      %v2395 = vpack.c.b16 %v2325, %v2318
      %v2396 = vpack.c.b16 %v2333, %v2326
      %v2397 = vpack.c.b16 %v2334, %v2327
      %v2398 = vpack.c.b16 %v2335, %v2328
      %v2399 = vpack.c.b16 %v2336, %v2329
      %v2400 = vpack.c.b16 %v2337, %v2330
      %v2401 = vpack.c.b16 %v2338, %v2331
      %v2402 = vpack.c.b16 %v2339, %v2332
      %v2403 = vpack.c.b16 %v2347, %v2340
      %v2404 = vpack.c.b16 %v2348, %v2341
      %v2405 = vpack.c.b16 %v2349, %v2342
      %v2406 = vpack.c.b16 %v2350, %v2343
      %v2407 = vpack.c.b16 %v2351, %v2344
      %v2408 = vpack.c.b16 %v2352, %v2345
      %v2409 = vpack.c.b16 %v2353, %v2346
      %2466 = vmatprep.subr.bf16.mxu0 %v2355
      %2467 = vmatpush1.bf16.msra.mxu0 %v2354
      %2468 = vmatprep.subr.bf16.mxu0 %v2362
      %2469 = vmatpush1.bf16.msra.mxu0 %v2361
      %2470 = vmatprep.subr.bf16.mxu0 %v2369
      %2471 = vmatpush1.bf16.msra.mxu0 %v2368
      %2472 = vmatprep.subr.bf16.mxu0 %v2376
      %2473 = vmatpush1.bf16.msra.mxu0 %v2375
      %2474 = vmatprep.subr.bf16.mxu0 %v2383
      %2475 = vmatpush1.bf16.msra.mxu0 %v2382
      %2476 = vmatprep.subr.bf16.mxu0 %v2390
      %2477 = vmatpush1.bf16.msra.mxu0 %v2389
      %2478 = vmatprep.subr.bf16.mxu0 %v2397
      %2479 = vmatpush1.bf16.msra.mxu0 %v2396
      %2480 = vmatprep.subr.bf16.mxu0 %v2404
      %2481 = vmatpush1.bf16.msra.mxu0 %v2403
      %2482 = vmatprep.subr.bf16.mxu0 0
      %2483 = vmatpush1.bf16.msra.mxu0 0
      %2484 = vmatprep.subr.bf16.mxu0 0
      %2485 = vmatpush1.bf16.msra.mxu0 0
      %2486 = vmatprep.subr.bf16.mxu0 0
      %2487 = vmatpush1.bf16.msra.mxu0 0
      %2488 = vmatprep.subr.bf16.mxu0 0
      %2489 = vmatpush1.bf16.msra.mxu0 0
      %2490 = vmatprep.subr.bf16.mxu0 0
      %2491 = vmatpush1.bf16.msra.mxu0 0
      %2492 = vmatprep.subr.bf16.mxu0 0
      %2493 = vmatpush1.bf16.msra.mxu0 0
      %2494 = vmatprep.subr.bf16.mxu0 0
      %2495 = vmatpush1.bf16.msra.mxu0 0
      %2496 = vmatprep.subr.bf16.mxu0 0
      %2497 = vmatpush1.bf16.msra.mxu0 0
      %2498 = vmatprep.mubr.bf16.mxu0 0
      %2499 = vmatmul.mubr.bf16.gmra.mrb[0].mxu0 %v2073
      %v2500 = vpop.f32.mrb[0].mxu0
      %v2501 = vadd.f32 %v2146, %v2500
      %v2502 = vpop.f32.mrb[0].mxu0
      %v2503 = vadd.f32 %v2150, %v2502
      %v2504 = vpop.f32.mrb[0].mxu0
      %v2505 = vadd.f32 %v2146, %v2504
      %v2506 = vpop.f32.mrb[0].mxu0
      %v2507 = vadd.f32 %v2150, %v2506
      %2508 = vmatprep.mubr.bf16.mxu0 0
      %2509 = vmatmul.mubr.bf16.gmra.mrb[0].mxu0 %v2074
      %v2510 = vpop.f32.mrb[0].mxu0
      %v2511 = vadd.f32 %v2146, %v2510
      %v2512 = vpop.f32.mrb[0].mxu0
      %v2513 = vadd.f32 %v2150, %v2512
      %v2514 = vpop.f32.mrb[0].mxu0
      %v2515 = vadd.f32 %v2146, %v2514
      %v2516 = vpop.f32.mrb[0].mxu0
      %v2517 = vadd.f32 %v2150, %v2516
      %2518 = vmatprep.mubr.bf16.mxu0 0
      %2519 = vmatmul.mubr.bf16.gmra.mrb[0].mxu0 %v2075
      %v2520 = vpop.f32.mrb[0].mxu0
      %v2521 = vadd.f32 %v2146, %v2520
      %v2522 = vpop.f32.mrb[0].mxu0
      %v2523 = vadd.f32 %v2150, %v2522
      %v2524 = vpop.f32.mrb[0].mxu0
      %v2525 = vadd.f32 %v2146, %v2524
      %v2526 = vpop.f32.mrb[0].mxu0
      %v2527 = vadd.f32 %v2150, %v2526
      %2528 = vmatprep.mubr.bf16.mxu0 0
      %2529 = vmatmul.mubr.bf16.gmra.mrb[0].mxu0 %v2076
      %v2530 = vpop.f32.mrb[0].mxu0
      %v2531 = vadd.f32 %v2146, %v2530
      %v2532 = vpop.f32.mrb[0].mxu0
      %v2533 = vadd.f32 %v2150, %v2532
      %v2534 = vpop.f32.mrb[0].mxu0
      %v2535 = vadd.f32 %v2146, %v2534
      %v2536 = vpop.f32.mrb[0].mxu0
      %v2537 = vadd.f32 %v2150, %v2536
      %2538 = vdwg.mxu0
      %2539 = vmatprep.subr.bf16.mxu0 %v2357
      %2540 = vmatpush1.bf16.msra.mxu0 %v2356
      %2541 = vmatprep.subr.bf16.mxu0 %v2364
      %2542 = vmatpush1.bf16.msra.mxu0 %v2363
      %2543 = vmatprep.subr.bf16.mxu0 %v2371
      %2544 = vmatpush1.bf16.msra.mxu0 %v2370
      %2545 = vmatprep.subr.bf16.mxu0 %v2378
      %2546 = vmatpush1.bf16.msra.mxu0 %v2377
      %2547 = vmatprep.subr.bf16.mxu0 %v2385
      %2548 = vmatpush1.bf16.msra.mxu0 %v2384
      %2549 = vmatprep.subr.bf16.mxu0 %v2392
      %2550 = vmatpush1.bf16.msra.mxu0 %v2391
      %2551 = vmatprep.subr.bf16.mxu0 %v2399
      %2552 = vmatpush1.bf16.msra.mxu0 %v2398
      %2553 = vmatprep.subr.bf16.mxu0 %v2406
      %2554 = vmatpush1.bf16.msra.mxu0 %v2405
      %2555 = vmatprep.subr.bf16.mxu0 0
      %2556 = vmatpush1.bf16.msra.mxu0 0
      %2557 = vmatprep.subr.bf16.mxu0 0
      %2558 = vmatpush1.bf16.msra.mxu0 0
      %2559 = vmatprep.subr.bf16.mxu0 0
      %2560 = vmatpush1.bf16.msra.mxu0 0
      %2561 = vmatprep.subr.bf16.mxu0 0
      %2562 = vmatpush1.bf16.msra.mxu0 0
      %2563 = vmatprep.subr.bf16.mxu0 0
      %2564 = vmatpush1.bf16.msra.mxu0 0
      %2565 = vmatprep.subr.bf16.mxu0 0
      %2566 = vmatpush1.bf16.msra.mxu0 0
      %2567 = vmatprep.subr.bf16.mxu0 0
      %2568 = vmatpush1.bf16.msra.mxu0 0
      %2569 = vmatprep.subr.bf16.mxu0 0
      %2570 = vmatpush1.bf16.msra.mxu0 0
      %2571 = vmatprep.mubr.bf16.mxu0 0
      %2572 = vmatmul.mubr.bf16.gmra.mrb[0].mxu0 %v2073
      %v2573 = vpop.f32.mrb[0].mxu0
      %v2574 = vadd.f32 %v2154, %v2573
      %v2575 = vpop.f32.mrb[0].mxu0
      %v2576 = vadd.f32 %v2158, %v2575
      %v2577 = vpop.f32.mrb[0].mxu0
      %v2578 = vadd.f32 %v2154, %v2577
      %v2579 = vpop.f32.mrb[0].mxu0
      %v2580 = vadd.f32 %v2158, %v2579
      %2581 = vmatprep.mubr.bf16.mxu0 0
      %2582 = vmatmul.mubr.bf16.gmra.mrb[0].mxu0 %v2074
      %v2583 = vpop.f32.mrb[0].mxu0
      %v2584 = vadd.f32 %v2154, %v2583
      %v2585 = vpop.f32.mrb[0].mxu0
      %v2586 = vadd.f32 %v2158, %v2585
      %v2587 = vpop.f32.mrb[0].mxu0
      %v2588 = vadd.f32 %v2154, %v2587
      %v2589 = vpop.f32.mrb[0].mxu0
      %v2590 = vadd.f32 %v2158, %v2589
      %2591 = vmatprep.mubr.bf16.mxu0 0
      %2592 = vmatmul.mubr.bf16.gmra.mrb[0].mxu0 %v2075
      %v2593 = vpop.f32.mrb[0].mxu0
      %v2594 = vadd.f32 %v2154, %v2593
      %v2595 = vpop.f32.mrb[0].mxu0
      %v2596 = vadd.f32 %v2158, %v2595
      %v2597 = vpop.f32.mrb[0].mxu0
      %v2598 = vadd.f32 %v2154, %v2597
      %v2599 = vpop.f32.mrb[0].mxu0
      %v2600 = vadd.f32 %v2158, %v2599
      %2601 = vmatprep.mubr.bf16.mxu0 0
      %2602 = vmatmul.mubr.bf16.gmra.mrb[0].mxu0 %v2076
      %v2603 = vpop.f32.mrb[0].mxu0
      %v2604 = vadd.f32 %v2154, %v2603
      %v2605 = vpop.f32.mrb[0].mxu0
      %v2606 = vadd.f32 %v2158, %v2605
      %v2607 = vpop.f32.mrb[0].mxu0
      %v2608 = vadd.f32 %v2154, %v2607
      %v2609 = vpop.f32.mrb[0].mxu0
      %v2610 = vadd.f32 %v2158, %v2609
      %2611 = vdwg.mxu0
      %2612 = vmatprep.subr.bf16.mxu0 %v2359
      %2613 = vmatpush1.bf16.msra.mxu0 %v2358
      %2614 = vmatprep.subr.bf16.mxu0 %v2366
      %2615 = vmatpush1.bf16.msra.mxu0 %v2365
      %2616 = vmatprep.subr.bf16.mxu0 %v2373
      %2617 = vmatpush1.bf16.msra.mxu0 %v2372
      %2618 = vmatprep.subr.bf16.mxu0 %v2380
      %2619 = vmatpush1.bf16.msra.mxu0 %v2379
      %2620 = vmatprep.subr.bf16.mxu0 %v2387
      %2621 = vmatpush1.bf16.msra.mxu0 %v2386
      %2622 = vmatprep.subr.bf16.mxu0 %v2394
      %2623 = vmatpush1.bf16.msra.mxu0 %v2393
      %2624 = vmatprep.subr.bf16.mxu0 %v2401
      %2625 = vmatpush1.bf16.msra.mxu0 %v2400
      %2626 = vmatprep.subr.bf16.mxu0 %v2408
      %2627 = vmatpush1.bf16.msra.mxu0 %v2407
      %2628 = vmatprep.subr.bf16.mxu0 0
      %2629 = vmatpush1.bf16.msra.mxu0 0
      %2630 = vmatprep.subr.bf16.mxu0 0
      %2631 = vmatpush1.bf16.msra.mxu0 0
      %2632 = vmatprep.subr.bf16.mxu0 0
      %2633 = vmatpush1.bf16.msra.mxu0 0
      %2634 = vmatprep.subr.bf16.mxu0 0
      %2635 = vmatpush1.bf16.msra.mxu0 0
      %2636 = vmatprep.subr.bf16.mxu0 0
      %2637 = vmatpush1.bf16.msra.mxu0 0
      %2638 = vmatprep.subr.bf16.mxu0 0
      %2639 = vmatpush1.bf16.msra.mxu0 0
      %2640 = vmatprep.subr.bf16.mxu0 0
      %2641 = vmatpush1.bf16.msra.mxu0 0
      %2642 = vmatprep.subr.bf16.mxu0 0
      %2643 = vmatpush1.bf16.msra.mxu0 0
      %2644 = vmatprep.mubr.bf16.mxu0 0
      %2645 = vmatmul.mubr.bf16.gmra.mrb[0].mxu0 %v2073
      %v2646 = vpop.f32.mrb[0].mxu0
      %v2647 = vadd.f32 %v2162, %v2646
      %v2648 = vpop.f32.mrb[0].mxu0
      %v2649 = vadd.f32 %v2166, %v2648
      %v2650 = vpop.f32.mrb[0].mxu0
      %v2651 = vadd.f32 %v2162, %v2650
      %v2652 = vpop.f32.mrb[0].mxu0
      %v2653 = vadd.f32 %v2166, %v2652
      %2654 = vmatprep.mubr.bf16.mxu0 0
      %2655 = vmatmul.mubr.bf16.gmra.mrb[0].mxu0 %v2074
      %v2656 = vpop.f32.mrb[0].mxu0
      %v2657 = vadd.f32 %v2162, %v2656
      %v2658 = vpop.f32.mrb[0].mxu0
      %v2659 = vadd.f32 %v2166, %v2658
      %v2660 = vpop.f32.mrb[0].mxu0
      %v2661 = vadd.f32 %v2162, %v2660
      %v2662 = vpop.f32.mrb[0].mxu0
      %v2663 = vadd.f32 %v2166, %v2662
      %2664 = vmatprep.mubr.bf16.mxu0 0
      %2665 = vmatmul.mubr.bf16.gmra.mrb[0].mxu0 %v2075
      %v2666 = vpop.f32.mrb[0].mxu0
      %v2667 = vadd.f32 %v2162, %v2666
      %v2668 = vpop.f32.mrb[0].mxu0
      %v2669 = vadd.f32 %v2166, %v2668
      %v2670 = vpop.f32.mrb[0].mxu0
      %v2671 = vadd.f32 %v2162, %v2670
      %v2672 = vpop.f32.mrb[0].mxu0
      %v2673 = vadd.f32 %v2166, %v2672
      %2674 = vmatprep.mubr.bf16.mxu0 0
      %2675 = vmatmul.mubr.bf16.gmra.mrb[0].mxu0 %v2076
      %v2676 = vpop.f32.mrb[0].mxu0
      %v2677 = vadd.f32 %v2162, %v2676
      %v2678 = vpop.f32.mrb[0].mxu0
      %v2679 = vadd.f32 %v2166, %v2678
      %v2680 = vpop.f32.mrb[0].mxu0
      %v2681 = vadd.f32 %v2162, %v2680
      %v2682 = vpop.f32.mrb[0].mxu0
      %v2683 = vadd.f32 %v2166, %v2682
      %2684 = vdwg.mxu0
      %2685 = vmatprep.subr.bf16.mxu0 0
      %2686 = vmatpush1.bf16.msra.mxu0 %v2360
      %2687 = vmatprep.subr.bf16.mxu0 0
      %2688 = vmatpush1.bf16.msra.mxu0 %v2367
      %2689 = vmatprep.subr.bf16.mxu0 0
      %2690 = vmatpush1.bf16.msra.mxu0 %v2374
      %2691 = vmatprep.subr.bf16.mxu0 0
      %2692 = vmatpush1.bf16.msra.mxu0 %v2381
      %2693 = vmatprep.subr.bf16.mxu0 0
      %2694 = vmatpush1.bf16.msra.mxu0 %v2388
      %2695 = vmatprep.subr.bf16.mxu0 0
      %2696 = vmatpush1.bf16.msra.mxu0 %v2395
      %2697 = vmatprep.subr.bf16.mxu0 0
      %2698 = vmatpush1.bf16.msra.mxu0 %v2402
      %2699 = vmatprep.subr.bf16.mxu0 0
      %2700 = vmatpush1.bf16.msra.mxu0 %v2409
      %2701 = vmatprep.subr.bf16.mxu0 0
      %2702 = vmatpush1.bf16.msra.mxu0 0
      %2703 = vmatprep.subr.bf16.mxu0 0
      %2704 = vmatpush1.bf16.msra.mxu0 0
      %2705 = vmatprep.subr.bf16.mxu0 0
      %2706 = vmatpush1.bf16.msra.mxu0 0
      %2707 = vmatprep.subr.bf16.mxu0 0
      %2708 = vmatpush1.bf16.msra.mxu0 0
      %2709 = vmatprep.subr.bf16.mxu0 0
      %2710 = vmatpush1.bf16.msra.mxu0 0
      %2711 = vmatprep.subr.bf16.mxu0 0
      %2712 = vmatpush1.bf16.msra.mxu0 0
      %2713 = vmatprep.subr.bf16.mxu0 0
      %2714 = vmatpush1.bf16.msra.mxu0 0
      %2715 = vmatprep.subr.bf16.mxu0 0
      %2716 = vmatpush1.bf16.msra.mxu0 0
      %2717 = vmatprep.mubr.bf16.mxu0 0
      %2718 = vmatmul.mubr.bf16.gmra.mrb[0].mxu0 %v2073
      %v2719 = vpop.f32.mrb[0].mxu0
      %v2720 = vadd.f32 %v2170, %v2719
      %v2721 = vpop.f32.mrb[0].mxu0
      %v2722 = vpop.f32.mrb[0].mxu0
      %v2723 = vadd.f32 %v2170, %v2722
      %v2724 = vpop.f32.mrb[0].mxu0
      %2725 = vmatprep.mubr.bf16.mxu0 0
      %2726 = vmatmul.mubr.bf16.gmra.mrb[0].mxu0 %v2074
      %v2727 = vpop.f32.mrb[0].mxu0
      %v2728 = vadd.f32 %v2170, %v2727
      %v2729 = vpop.f32.mrb[0].mxu0
      %v2730 = vpop.f32.mrb[0].mxu0
      %v2731 = vadd.f32 %v2170, %v2730
      %v2732 = vpop.f32.mrb[0].mxu0
      %2733 = vmatprep.mubr.bf16.mxu0 0
      %2734 = vmatmul.mubr.bf16.gmra.mrb[0].mxu0 %v2075
      %v2735 = vpop.f32.mrb[0].mxu0
      %v2736 = vadd.f32 %v2170, %v2735
      %v2737 = vpop.f32.mrb[0].mxu0
      %v2738 = vpop.f32.mrb[0].mxu0
      %v2739 = vadd.f32 %v2170, %v2738
      %v2740 = vpop.f32.mrb[0].mxu0
      %2741 = vmatprep.mubr.bf16.mxu0 0
      %2742 = vmatmul.mubr.bf16.gmra.mrb[0].mxu0 %v2076
      %v2743 = vpop.f32.mrb[0].mxu0
      %v2744 = vadd.f32 %v2170, %v2743
      %v2745 = vpop.f32.mrb[0].mxu0
      %v2746 = vpop.f32.mrb[0].mxu0
      %v2747 = vadd.f32 %v2170, %v2746
      %v2748 = vpop.f32.mrb[0].mxu0
      %2749 = vdwg.mxu0
      %v2750 = vxor.u32 %v2501, 2147483648
      %v2751 = vxor.u32 %v2503, 2147483648
      %v2752 = vxor.u32 %v2574, 2147483648
      %v2753 = vxor.u32 %v2576, 2147483648
      %v2754 = vxor.u32 %v2647, 2147483648
      %v2755 = vxor.u32 %v2649, 2147483648
      %v2756 = vxor.u32 %v2720, 2147483648
      %v2757 = vxor.u32 %v2505, 2147483648
      %v2758 = vxor.u32 %v2507, 2147483648
      %v2759 = vxor.u32 %v2578, 2147483648
      %v2760 = vxor.u32 %v2580, 2147483648
      %v2761 = vxor.u32 %v2651, 2147483648
      %v2762 = vxor.u32 %v2653, 2147483648
      %v2763 = vxor.u32 %v2723, 2147483648
      %v2764 = vxor.u32 %v2511, 2147483648
      %v2765 = vxor.u32 %v2513, 2147483648
      %v2766 = vxor.u32 %v2584, 2147483648
      %v2767 = vxor.u32 %v2586, 2147483648
      %v2768 = vxor.u32 %v2657, 2147483648
      %v2769 = vxor.u32 %v2659, 2147483648
      %v2770 = vxor.u32 %v2728, 2147483648
      %v2771 = vxor.u32 %v2515, 2147483648
      %v2772 = vxor.u32 %v2517, 2147483648
      %v2773 = vxor.u32 %v2588, 2147483648
      %v2774 = vxor.u32 %v2590, 2147483648
      %v2775 = vxor.u32 %v2661, 2147483648
      %v2776 = vxor.u32 %v2663, 2147483648
      %v2777 = vxor.u32 %v2731, 2147483648
      %v2778 = vxor.u32 %v2521, 2147483648
      %v2779 = vxor.u32 %v2523, 2147483648
      %v2780 = vxor.u32 %v2594, 2147483648
      %v2781 = vxor.u32 %v2596, 2147483648
      %v2782 = vxor.u32 %v2667, 2147483648
      %v2783 = vxor.u32 %v2669, 2147483648
      %v2784 = vxor.u32 %v2736, 2147483648
      %v2785 = vxor.u32 %v2525, 2147483648
      %v2786 = vxor.u32 %v2527, 2147483648
      %v2787 = vxor.u32 %v2598, 2147483648
      %v2788 = vxor.u32 %v2600, 2147483648
      %v2789 = vxor.u32 %v2671, 2147483648
      %v2790 = vxor.u32 %v2673, 2147483648
      %v2791 = vxor.u32 %v2739, 2147483648
      %v2792 = vxor.u32 %v2531, 2147483648
      %v2793 = vxor.u32 %v2533, 2147483648
      %v2794 = vxor.u32 %v2604, 2147483648
      %v2795 = vxor.u32 %v2606, 2147483648
      %v2796 = vxor.u32 %v2677, 2147483648
      %v2797 = vxor.u32 %v2679, 2147483648
      %v2798 = vxor.u32 %v2744, 2147483648
      %v2799 = vxor.u32 %v2535, 2147483648
      %v2800 = vxor.u32 %v2537, 2147483648
      %v2801 = vxor.u32 %v2608, 2147483648
      %v2802 = vxor.u32 %v2610, 2147483648
      %v2803 = vxor.u32 %v2681, 2147483648
      %v2804 = vxor.u32 %v2683, 2147483648
      %v2805 = vxor.u32 %v2747, 2147483648
      %v2806 = vmul.f32 %v2750, 1.442695
      %v2807 = vpow.pop %v2806
      %v2808 = vmul.f32 %v2751, 1.442695
      %v2809 = vpow.pop %v2808
      %v2810 = vmul.f32 %v2752, 1.442695
      %v2811 = vpow.pop %v2810
      %v2812 = vmul.f32 %v2753, 1.442695
      %v2813 = vpow.pop %v2812
      %v2814 = vmul.f32 %v2754, 1.442695
      %v2815 = vpow.pop %v2814
      %v2816 = vmul.f32 %v2755, 1.442695
      %v2817 = vpow.pop %v2816
      %v2818 = vmul.f32 %v2756, 1.442695
      %v2819 = vpow.pop %v2818
      %v2820 = vmul.f32 %v2757, 1.442695
      %v2821 = vpow.pop %v2820
      %v2822 = vmul.f32 %v2758, 1.442695
      %v2823 = vpow.pop %v2822
      %v2824 = vmul.f32 %v2759, 1.442695
      %v2825 = vpow.pop %v2824
      %v2826 = vmul.f32 %v2760, 1.442695
      %v2827 = vpow.pop %v2826
      %v2828 = vmul.f32 %v2761, 1.442695
      %v2829 = vpow.pop %v2828
      %v2830 = vmul.f32 %v2762, 1.442695
      %v2831 = vpow.pop %v2830
      %v2832 = vmul.f32 %v2763, 1.442695
      %v2833 = vpow.pop %v2832
      %v2834 = vmul.f32 %v2764, 1.442695
      %v2835 = vpow.pop %v2834
      %v2836 = vmul.f32 %v2765, 1.442695
      %v2837 = vpow.pop %v2836
      %v2838 = vmul.f32 %v2766, 1.442695
      %v2839 = vpow.pop %v2838
      %v2840 = vmul.f32 %v2767, 1.442695
      %v2841 = vpow.pop %v2840
      %v2842 = vmul.f32 %v2768, 1.442695
      %v2843 = vpow.pop %v2842
      %v2844 = vmul.f32 %v2769, 1.442695
      %v2845 = vpow.pop %v2844
      %v2846 = vmul.f32 %v2770, 1.442695
      %v2847 = vpow.pop %v2846
      %v2848 = vmul.f32 %v2771, 1.442695
      %v2849 = vpow.pop %v2848
      %v2850 = vmul.f32 %v2772, 1.442695
      %v2851 = vpow.pop %v2850
      %v2852 = vmul.f32 %v2773, 1.442695
      %v2853 = vpow.pop %v2852
      %v2854 = vmul.f32 %v2774, 1.442695
      %v2855 = vpow.pop %v2854
      %v2856 = vmul.f32 %v2775, 1.442695
      %v2857 = vpow.pop %v2856
      %v2858 = vmul.f32 %v2776, 1.442695
      %v2859 = vpow.pop %v2858
      %v2860 = vmul.f32 %v2777, 1.442695
      %v2861 = vpow.pop %v2860
      %v2862 = vmul.f32 %v2778, 1.442695
      %v2863 = vpow.pop %v2862
      %v2864 = vmul.f32 %v2779, 1.442695
      %v2865 = vpow.pop %v2864
      %v2866 = vmul.f32 %v2780, 1.442695
      %v2867 = vpow.pop %v2866
      %v2868 = vmul.f32 %v2781, 1.442695
      %v2869 = vpow.pop %v2868
      %v2870 = vmul.f32 %v2782, 1.442695
      %v2871 = vpow.pop %v2870
      %v2872 = vmul.f32 %v2783, 1.442695
      %v2873 = vpow.pop %v2872
      %v2874 = vmul.f32 %v2784, 1.442695
      %v2875 = vpow.pop %v2874
      %v2876 = vmul.f32 %v2785, 1.442695
      %v2877 = vpow.pop %v2876
      %v2878 = vmul.f32 %v2786, 1.442695
      %v2879 = vpow.pop %v2878
      %v2880 = vmul.f32 %v2787, 1.442695
      %v2881 = vpow.pop %v2880
      %v2882 = vmul.f32 %v2788, 1.442695
      %v2883 = vpow.pop %v2882
      %v2884 = vmul.f32 %v2789, 1.442695
      %v2885 = vpow.pop %v2884
      %v2886 = vmul.f32 %v2790, 1.442695
      %v2887 = vpow.pop %v2886
      %v2888 = vmul.f32 %v2791, 1.442695
      %v2889 = vpow.pop %v2888
      %v2890 = vmul.f32 %v2792, 1.442695
      %v2891 = vpow.pop %v2890
      %v2892 = vmul.f32 %v2793, 1.442695
      %v2893 = vpow.pop %v2892
      %v2894 = vmul.f32 %v2794, 1.442695
      %v2895 = vpow.pop %v2894
      %v2896 = vmul.f32 %v2795, 1.442695
      %v2897 = vpow.pop %v2896
      %v2898 = vmul.f32 %v2796, 1.442695
      %v2899 = vpow.pop %v2898
      %v2900 = vmul.f32 %v2797, 1.442695
      %v2901 = vpow.pop %v2900
      %v2902 = vmul.f32 %v2798, 1.442695
      %v2903 = vpow.pop %v2902
      %v2904 = vmul.f32 %v2799, 1.442695
      %v2905 = vpow.pop %v2904
      %v2906 = vmul.f32 %v2800, 1.442695
      %v2907 = vpow.pop %v2906
      %v2908 = vmul.f32 %v2801, 1.442695
      %v2909 = vpow.pop %v2908
      %v2910 = vmul.f32 %v2802, 1.442695
      %v2911 = vpow.pop %v2910
      %v2912 = vmul.f32 %v2803, 1.442695
      %v2913 = vpow.pop %v2912
      %v2914 = vmul.f32 %v2804, 1.442695
      %v2915 = vpow.pop %v2914
      %v2916 = vmul.f32 %v2805, 1.442695
      %v2917 = vpow.pop %v2916
      %v2918 = vadd.f32 %v2807, 1.0
      %v2919 = vadd.f32 %v2809, 1.0
      %v2920 = vadd.f32 %v2811, 1.0
      %v2921 = vadd.f32 %v2813, 1.0
      %v2922 = vadd.f32 %v2815, 1.0
      %v2923 = vadd.f32 %v2817, 1.0
      %v2924 = vadd.f32 %v2819, 1.0
      %v2925 = vadd.f32 %v2821, 1.0
      %v2926 = vadd.f32 %v2823, 1.0
      %v2927 = vadd.f32 %v2825, 1.0
      %v2928 = vadd.f32 %v2827, 1.0
      %v2929 = vadd.f32 %v2829, 1.0
      %v2930 = vadd.f32 %v2831, 1.0
      %v2931 = vadd.f32 %v2833, 1.0
      %v2932 = vadd.f32 %v2835, 1.0
      %v2933 = vadd.f32 %v2837, 1.0
      %v2934 = vadd.f32 %v2839, 1.0
      %v2935 = vadd.f32 %v2841, 1.0
      %v2936 = vadd.f32 %v2843, 1.0
      %v2937 = vadd.f32 %v2845, 1.0
      %v2938 = vadd.f32 %v2847, 1.0
      %v2939 = vadd.f32 %v2849, 1.0
      %v2940 = vadd.f32 %v2851, 1.0
      %v2941 = vadd.f32 %v2853, 1.0
      %v2942 = vadd.f32 %v2855, 1.0
      %v2943 = vadd.f32 %v2857, 1.0
      %v2944 = vadd.f32 %v2859, 1.0
      %v2945 = vadd.f32 %v2861, 1.0
      %v2946 = vadd.f32 %v2863, 1.0
      %v2947 = vadd.f32 %v2865, 1.0
      %v2948 = vadd.f32 %v2867, 1.0
      %v2949 = vadd.f32 %v2869, 1.0
      %v2950 = vadd.f32 %v2871, 1.0
      %v2951 = vadd.f32 %v2873, 1.0
      %v2952 = vadd.f32 %v2875, 1.0
      %v2953 = vadd.f32 %v2877, 1.0
      %v2954 = vadd.f32 %v2879, 1.0
      %v2955 = vadd.f32 %v2881, 1.0
      %v2956 = vadd.f32 %v2883, 1.0
      %v2957 = vadd.f32 %v2885, 1.0
      %v2958 = vadd.f32 %v2887, 1.0
      %v2959 = vadd.f32 %v2889, 1.0
      %v2960 = vadd.f32 %v2891, 1.0
      %v2961 = vadd.f32 %v2893, 1.0
      %v2962 = vadd.f32 %v2895, 1.0
      %v2963 = vadd.f32 %v2897, 1.0
      %v2964 = vadd.f32 %v2899, 1.0
      %v2965 = vadd.f32 %v2901, 1.0
      %v2966 = vadd.f32 %v2903, 1.0
      %v2967 = vadd.f32 %v2905, 1.0
      %v2968 = vadd.f32 %v2907, 1.0
      %v2969 = vadd.f32 %v2909, 1.0
      %v2970 = vadd.f32 %v2911, 1.0
      %v2971 = vadd.f32 %v2913, 1.0
      %v2972 = vadd.f32 %v2915, 1.0
      %v2973 = vadd.f32 %v2917, 1.0
      %v2974 = vrcp.pop %v2918
      %v2975 = vmul.f32 1.0, %v2974
      %v2976 = vrcp.pop %v2919
      %v2977 = vmul.f32 1.0, %v2976
      %v2978 = vrcp.pop %v2920
      %v2979 = vmul.f32 1.0, %v2978
      %v2980 = vrcp.pop %v2921
      %v2981 = vmul.f32 1.0, %v2980
      %v2982 = vrcp.pop %v2922
      %v2983 = vmul.f32 1.0, %v2982
      %v2984 = vrcp.pop %v2923
      %v2985 = vmul.f32 1.0, %v2984
      %v2986 = vrcp.pop %v2924
      %v2987 = vmul.f32 1.0, %v2986
      %v2988 = vrcp.pop %v2925
      %v2989 = vmul.f32 1.0, %v2988
      %v2990 = vrcp.pop %v2926
      %v2991 = vmul.f32 1.0, %v2990
      %v2992 = vrcp.pop %v2927
      %v2993 = vmul.f32 1.0, %v2992
      %v2994 = vrcp.pop %v2928
      %v2995 = vmul.f32 1.0, %v2994
      %v2996 = vrcp.pop %v2929
      %v2997 = vmul.f32 1.0, %v2996
      %v2998 = vrcp.pop %v2930
      %v2999 = vmul.f32 1.0, %v2998
      %v3000 = vrcp.pop %v2931
      %v3001 = vmul.f32 1.0, %v3000
      %v3002 = vrcp.pop %v2932
      %v3003 = vmul.f32 1.0, %v3002
      %v3004 = vrcp.pop %v2933
      %v3005 = vmul.f32 1.0, %v3004
      %v3006 = vrcp.pop %v2934
      %v3007 = vmul.f32 1.0, %v3006
      %v3008 = vrcp.pop %v2935
      %v3009 = vmul.f32 1.0, %v3008
      %v3010 = vrcp.pop %v2936
      %v3011 = vmul.f32 1.0, %v3010
      %v3012 = vrcp.pop %v2937
      %v3013 = vmul.f32 1.0, %v3012
      %v3014 = vrcp.pop %v2938
      %v3015 = vmul.f32 1.0, %v3014
      %v3016 = vrcp.pop %v2939
      %v3017 = vmul.f32 1.0, %v3016
      %v3018 = vrcp.pop %v2940
      %v3019 = vmul.f32 1.0, %v3018
      %v3020 = vrcp.pop %v2941
      %v3021 = vmul.f32 1.0, %v3020
      %v3022 = vrcp.pop %v2942
      %v3023 = vmul.f32 1.0, %v3022
      %v3024 = vrcp.pop %v2943
      %v3025 = vmul.f32 1.0, %v3024
      %v3026 = vrcp.pop %v2944
      %v3027 = vmul.f32 1.0, %v3026
      %v3028 = vrcp.pop %v2945
      %v3029 = vmul.f32 1.0, %v3028
      %v3030 = vrcp.pop %v2946
      %v3031 = vmul.f32 1.0, %v3030
      %v3032 = vrcp.pop %v2947
      %v3033 = vmul.f32 1.0, %v3032
      %v3034 = vrcp.pop %v2948
      %v3035 = vmul.f32 1.0, %v3034
      %v3036 = vrcp.pop %v2949
      %v3037 = vmul.f32 1.0, %v3036
      %v3038 = vrcp.pop %v2950
      %v3039 = vmul.f32 1.0, %v3038
      %v3040 = vrcp.pop %v2951
      %v3041 = vmul.f32 1.0, %v3040
      %v3042 = vrcp.pop %v2952
      %v3043 = vmul.f32 1.0, %v3042
      %v3044 = vrcp.pop %v2953
      %v3045 = vmul.f32 1.0, %v3044
      %v3046 = vrcp.pop %v2954
      %v3047 = vmul.f32 1.0, %v3046
      %v3048 = vrcp.pop %v2955
      %v3049 = vmul.f32 1.0, %v3048
      %v3050 = vrcp.pop %v2956
      %v3051 = vmul.f32 1.0, %v3050
      %v3052 = vrcp.pop %v2957
      %v3053 = vmul.f32 1.0, %v3052
      %v3054 = vrcp.pop %v2958
      %v3055 = vmul.f32 1.0, %v3054
      %v3056 = vrcp.pop %v2959
      %v3057 = vmul.f32 1.0, %v3056
      %v3058 = vrcp.pop %v2960
      %v3059 = vmul.f32 1.0, %v3058
      %v3060 = vrcp.pop %v2961
      %v3061 = vmul.f32 1.0, %v3060
      %v3062 = vrcp.pop %v2962
      %v3063 = vmul.f32 1.0, %v3062
      %v3064 = vrcp.pop %v2963
      %v3065 = vmul.f32 1.0, %v3064
      %v3066 = vrcp.pop %v2964
      %v3067 = vmul.f32 1.0, %v3066
      %v3068 = vrcp.pop %v2965
      %v3069 = vmul.f32 1.0, %v3068
      %v3070 = vrcp.pop %v2966
      %v3071 = vmul.f32 1.0, %v3070
      %v3072 = vrcp.pop %v2967
      %v3073 = vmul.f32 1.0, %v3072
      %v3074 = vrcp.pop %v2968
      %v3075 = vmul.f32 1.0, %v3074
      %v3076 = vrcp.pop %v2969
      %v3077 = vmul.f32 1.0, %v3076
      %v3078 = vrcp.pop %v2970
      %v3079 = vmul.f32 1.0, %v3078
      %v3080 = vrcp.pop %v2971
      %v3081 = vmul.f32 1.0, %v3080
      %v3082 = vrcp.pop %v2972
      %v3083 = vmul.f32 1.0, %v3082
      %v3084 = vrcp.pop %v2973
      %v3085 = vmul.f32 1.0, %v3084
      %v3086 = vpack.c.bf16 %v2989, %v2975
      %v3087 = vpack.c.bf16 %v2991, %v2977
      %v3088 = vpack.c.bf16 %v2993, %v2979
      %v3089 = vpack.c.bf16 %v2995, %v2981
      %v3090 = vpack.c.bf16 %v2997, %v2983
      %v3091 = vpack.c.bf16 %v2999, %v2985
      %v3092 = vpack.c.bf16 %v3001, %v2987
      %v3093 = vpack.c.bf16 %v3017, %v3003
      %v3094 = vpack.c.bf16 %v3019, %v3005
      %v3095 = vpack.c.bf16 %v3021, %v3007
      %v3096 = vpack.c.bf16 %v3023, %v3009
      %v3097 = vpack.c.bf16 %v3025, %v3011
      %v3098 = vpack.c.bf16 %v3027, %v3013
      %v3099 = vpack.c.bf16 %v3029, %v3015
      %v3100 = vpack.c.bf16 %v3045, %v3031
      %v3101 = vpack.c.bf16 %v3047, %v3033
      %v3102 = vpack.c.bf16 %v3049, %v3035
      %v3103 = vpack.c.bf16 %v3051, %v3037
      %v3104 = vpack.c.bf16 %v3053, %v3039
      %v3105 = vpack.c.bf16 %v3055, %v3041
      %v3106 = vpack.c.bf16 %v3057, %v3043
      %v3107 = vpack.c.bf16 %v3073, %v3059
      %v3108 = vpack.c.bf16 %v3075, %v3061
      %v3109 = vpack.c.bf16 %v3077, %v3063
      %v3110 = vpack.c.bf16 %v3079, %v3065
      %v3111 = vpack.c.bf16 %v3081, %v3067
      %v3112 = vpack.c.bf16 %v3083, %v3069
      %v3113 = vpack.c.bf16 %v3085, %v3071
      %v3142 = vunpack.c.l.b16 %v3086
      %v3143 = vunpack.c.l.b16 %v3087
      %v3144 = vunpack.c.l.b16 %v3088
      %v3145 = vunpack.c.l.b16 %v3089
      %v3146 = vunpack.c.l.b16 %v3090
      %v3147 = vunpack.c.l.b16 %v3091
      %v3148 = vunpack.c.l.b16 %v3092
      %v3149 = vunpack.c.h.b16 %v3086
      %v3150 = vunpack.c.h.b16 %v3087
      %v3151 = vunpack.c.h.b16 %v3088
      %v3152 = vunpack.c.h.b16 %v3089
      %v3153 = vunpack.c.h.b16 %v3090
      %v3154 = vunpack.c.h.b16 %v3091
      %v3155 = vunpack.c.h.b16 %v3092
      %v3156 = vunpack.c.l.b16 %v3093
      %v3157 = vunpack.c.l.b16 %v3094
      %v3158 = vunpack.c.l.b16 %v3095
      %v3159 = vunpack.c.l.b16 %v3096
      %v3160 = vunpack.c.l.b16 %v3097
      %v3161 = vunpack.c.l.b16 %v3098
      %v3162 = vunpack.c.l.b16 %v3099
      %v3163 = vunpack.c.h.b16 %v3093
      %v3164 = vunpack.c.h.b16 %v3094
      %v3165 = vunpack.c.h.b16 %v3095
      %v3166 = vunpack.c.h.b16 %v3096
      %v3167 = vunpack.c.h.b16 %v3097
      %v3168 = vunpack.c.h.b16 %v3098
      %v3169 = vunpack.c.h.b16 %v3099
      %v3170 = vunpack.c.l.b16 %v3100
      %v3171 = vunpack.c.l.b16 %v3101
      %v3172 = vunpack.c.l.b16 %v3102
      %v3173 = vunpack.c.l.b16 %v3103
      %v3174 = vunpack.c.l.b16 %v3104
      %v3175 = vunpack.c.l.b16 %v3105
      %v3176 = vunpack.c.l.b16 %v3106
      %v3177 = vunpack.c.h.b16 %v3100
      %v3178 = vunpack.c.h.b16 %v3101
      %v3179 = vunpack.c.h.b16 %v3102
      %v3180 = vunpack.c.h.b16 %v3103
      %v3181 = vunpack.c.h.b16 %v3104
      %v3182 = vunpack.c.h.b16 %v3105
      %v3183 = vunpack.c.h.b16 %v3106
      %v3184 = vunpack.c.l.b16 %v3107
      %v3185 = vunpack.c.l.b16 %v3108
      %v3186 = vunpack.c.l.b16 %v3109
      %v3187 = vunpack.c.l.b16 %v3110
      %v3188 = vunpack.c.l.b16 %v3111
      %v3189 = vunpack.c.l.b16 %v3112
      %v3190 = vunpack.c.l.b16 %v3113
      %v3191 = vunpack.c.h.b16 %v3107
      %v3192 = vunpack.c.h.b16 %v3108
      %v3193 = vunpack.c.h.b16 %v3109
      %v3194 = vunpack.c.h.b16 %v3110
      %v3195 = vunpack.c.h.b16 %v3111
      %v3196 = vunpack.c.h.b16 %v3112
      %v3197 = vunpack.c.h.b16 %v3113
      %v3198 = vpack.c.b16 %v3143, %v3142
      %v3199 = vpack.c.b16 %v3145, %v3144
      %v3200 = vpack.c.b16 %v3147, %v3146
      %v3201 = vpack.c.b16 %v3148, %v3148
      %v3202 = vpack.c.b16 %v3150, %v3149
      %v3203 = vpack.c.b16 %v3152, %v3151
      %v3204 = vpack.c.b16 %v3154, %v3153
      %v3205 = vpack.c.b16 %v3155, %v3155
      %v3206 = vpack.c.b16 %v3157, %v3156
      %v3207 = vpack.c.b16 %v3159, %v3158
      %v3208 = vpack.c.b16 %v3161, %v3160
      %v3209 = vpack.c.b16 %v3162, %v3162
      %v3210 = vpack.c.b16 %v3164, %v3163
      %v3211 = vpack.c.b16 %v3166, %v3165
      %v3212 = vpack.c.b16 %v3168, %v3167
      %v3213 = vpack.c.b16 %v3169, %v3169
      %v3214 = vpack.c.b16 %v3171, %v3170
      %v3215 = vpack.c.b16 %v3173, %v3172
      %v3216 = vpack.c.b16 %v3175, %v3174
      %v3217 = vpack.c.b16 %v3176, %v3176
      %v3218 = vpack.c.b16 %v3178, %v3177
      %v3219 = vpack.c.b16 %v3180, %v3179
      %v3220 = vpack.c.b16 %v3182, %v3181
      %v3221 = vpack.c.b16 %v3183, %v3183
      %v3222 = vpack.c.b16 %v3185, %v3184
      %v3223 = vpack.c.b16 %v3187, %v3186
      %v3224 = vpack.c.b16 %v3189, %v3188
      %v3225 = vpack.c.b16 %v3190, %v3190
      %v3226 = vpack.c.b16 %v3192, %v3191
      %v3227 = vpack.c.b16 %v3194, %v3193
      %v3228 = vpack.c.b16 %v3196, %v3195
      %v3229 = vpack.c.b16 %v3197, %v3197
      %3262 = vst [vmem:[%s596] sm:$0xff] %v3198
      %3263 = vst [vmem:[%s596 + $0x8] sm:$0xff] %v3199
      %3264 = vst [vmem:[%s596 + $0x10] sm:$0xff] %v3200
      %vm3265 = vcmask 125952
      %3266 = vst.msk [vmem:[%s596 + $0x18] sm:$0xf] %vm3265, %v3201
      %3267 = vst [vmem:[%s596 + $0x1c] sm:$0xff] %v3202
      %3268 = vst [vmem:[%s596 + $0x24] sm:$0xff] %v3203
      %3269 = vst [vmem:[%s596 + $0x2c] sm:$0xff] %v3204
      %3270 = vst.msk [vmem:[%s596 + $0x34] sm:$0xf] %vm3265, %v3205
      %3271 = vst [vmem:[%s596 + $0x38] sm:$0xff] %v3206
      %3272 = vst [vmem:[%s596 + $0x40] sm:$0xff] %v3207
      %3273 = vst [vmem:[%s596 + $0x48] sm:$0xff] %v3208
      %3274 = vst.msk [vmem:[%s596 + $0x50] sm:$0xf] %vm3265, %v3209
      %3275 = vst [vmem:[%s596 + $0x54] sm:$0xff] %v3210
      %3276 = vst [vmem:[%s596 + $0x5c] sm:$0xff] %v3211
      %3277 = vst [vmem:[%s596 + $0x64] sm:$0xff] %v3212
      %3278 = vst.msk [vmem:[%s596 + $0x6c] sm:$0xf] %vm3265, %v3213
      %3279 = vst [vmem:[%s596 + $0x70] sm:$0xff] %v3214
      %3280 = vst [vmem:[%s596 + $0x78] sm:$0xff] %v3215
      %3281 = vst [vmem:[%s596 + $0x80] sm:$0xff] %v3216
      %3282 = vst.msk [vmem:[%s596 + $0x88] sm:$0xf] %vm3265, %v3217
      %3283 = vst [vmem:[%s596 + $0x8c] sm:$0xff] %v3218
      %3284 = vst [vmem:[%s596 + $0x94] sm:$0xff] %v3219
      %3285 = vst [vmem:[%s596 + $0x9c] sm:$0xff] %v3220
      %3286 = vst.msk [vmem:[%s596 + $0xa4] sm:$0xf] %vm3265, %v3221
      %3287 = vst [vmem:[%s596 + $0xa8] sm:$0xff] %v3222
      %3288 = vst [vmem:[%s596 + $0xb0] sm:$0xff] %v3223
      %3289 = vst [vmem:[%s596 + $0xb8] sm:$0xff] %v3224
      %3290 = vst.msk [vmem:[%s596 + $0xc0] sm:$0xf] %vm3265, %v3225
      %3291 = vst [vmem:[%s596 + $0xc4] sm:$0xff] %v3226
      %3292 = vst [vmem:[%s596 + $0xcc] sm:$0xff] %v3227
      %3293 = vst [vmem:[%s596 + $0xd4] sm:$0xff] %v3228
      %3294 = vst.msk [vmem:[%s596 + $0xdc] sm:$0xf] %vm3265, %v3229
      %s3295 = smul.u32 8, %s30
      %p3296 = scmp.lt.s32.totalorder %s3295, 31
      %s3297 = scalar_select %p3296, %s3295, 31
      %s3298 = smul.addr %s3297, 8
      %s3299 = scalar_lea.vmem %s17, %s3298
      %s3300 = smul.u32 8, %s30
      %p3301 = scmp.lt.s32.totalorder %s3300, 31
      %s3302 = scalar_select %p3301, %s3300, 31
      %s3303 = smul.addr %s3302, 7
      %s3304 = smul.addr %s3303, 4
      %s3305 = scalar_lea.vmem %s18, %s3304
      // Predicated region
      $region89: #{autoencoder_forward.1} parent=87 // pred_check
        %p3306 = pneg %p410
      $region90: #{autoencoder_forward.1} parent=87 // pred_check_branch
        %3308 = sbr.rel (%p3306) target = $region92
      $region91: #{autoencoder_forward.1} parent=87 // pred_region
        %s3309 = smul.u32 8, %s30
      $region92: #{autoencoder_forward.1} parent=87 // pred_fallthru
        _
      // Predicated region
      $region93: #{autoencoder_forward.1} parent=87 // pred_check
        %p3310 = pneg %p436
      $region94: #{autoencoder_forward.1} parent=87 // pred_check_branch
        %3312 = sbr.rel (%p3310) target = $region96
      $region95: #{autoencoder_forward.1} parent=87 // pred_region
        %s3313 = smul.u32 8, %s30
      $region96: #{autoencoder_forward.1} parent=87 // pred_fallthru
        _
    $region88: #{autoencoder_forward.1} parent=5 // pred_fallthru
      _
    %p3314 = scmp.le.s32.totalorder 2, %s25
    // Predicated region
    $region97: #{autoencoder_forward.1} parent=5 // pred_check
      %p3315 = pneg %p3314
    $region98: #{autoencoder_forward.1} parent=5 // pred_check_branch
      %3317 = sbr.rel (%p3315) target = $region100
    $region99: #{autoencoder_forward.1} parent=5 // pred_region
      %s3318 = ssub.s32 %s25, 2
      // Predicated region
      $region101: #{autoencoder_forward.1} parent=99 // pred_check
        %p3319 = pneg %p416
      $region102: #{autoencoder_forward.1} parent=99 // pred_check_branch
        %3321 = sbr.rel (%p3319) target = $region104
      $region103: #{autoencoder_forward.1} parent=99 // pred_region
        %s3322 = smul.u32 8, %s31
        %p3323 = scmp.lt.s32.totalorder %s3322, 31
        %s3324 = scalar_select %p3323, %s3322, 31
        %s3325 = smul.addr %s3324, 8
        %s3326 = scalar_lea.vmem %s17, %s3325
      $region104: #{autoencoder_forward.1} parent=99 // pred_fallthru
        _
      // Predicated region
      $region105: #{autoencoder_forward.1} parent=99 // pred_check
        %p3327 = pneg %p442
      $region106: #{autoencoder_forward.1} parent=99 // pred_check_branch
        %3329 = sbr.rel (%p3327) target = $region108
      $region107: #{autoencoder_forward.1} parent=99 // pred_region
        %s3330 = smul.u32 8, %s31
        %p3331 = scmp.lt.s32.totalorder %s3330, 31
        %s3332 = scalar_select %p3331, %s3330, 31
        %s3333 = smul.addr %s3332, 7
        %s3334 = smul.addr %s3333, 4
        %s3335 = scalar_lea.vmem %s18, %s3334
      $region108: #{autoencoder_forward.1} parent=99 // pred_fallthru
        _
    $region100: #{autoencoder_forward.1} parent=5 // pred_fallthru
      _
  $region6: #{autoencoder_forward.1} parent=0 // loop_footer
    %s29 = sadd.s32 1, %s25
  $region7: #{autoencoder_forward.1} parent=0 // loop_footer_branch
    %24 = sbr.rel target = $region3
  $region8: #{autoencoder_forward.1} parent=0 // loop_exit
    _

</llo_original>
